<compile_context>
chip_gen: v7x
topology: tpu7x:2x2x1
jax: 0.10.0
libtpu: 0.0.40
codegen_flags: <defaults>
</compile_context>

<pallas_src>
import functools

import numpy as np
import jax
import jax.numpy as jnp
from jax.experimental import pallas as pl
from jax.experimental.pallas import tpu as pltpu


# ----------------------------- fused Pallas kernel ------------------------------


def encoder_fused_kernel(ids_ref, emb_ref, pe_ref, *rest, n_heads, n_blocks, seq):
    """Whole Encoder forward (full batch) in one kernel invocation.

    rest = [12 weight refs per block] * n_blocks + [w_out_pad, b_out_pad] + [o_ref]
    """
    o_ref = rest[-1]
    w_out_ref = rest[-3]
    b_out_ref = rest[-2]
    block_refs = rest[:-3]
    assert len(block_refs) == 12 * n_blocks

    BS = ids_ref.shape[0]               # B*S rows (batch folded into sublanes)
    V_in, E = emb_ref.shape
    H = n_heads
    D = E // H
    B = BS // seq                       # static python int

    f32 = jnp.float32
    bf = lambda a: a.astype(jnp.bfloat16)   # MXU inputs in bf16, f32 accumulation

    # ---- embedding gather as an exact one-hot matmul (kept f32 so it is exact) ----
    ids = ids_ref[...]                                              # (BS, 1) int32
    vocab_iota = jax.lax.broadcasted_iota(jnp.int32, (BS, V_in), 1)
    onehot = (vocab_iota == ids).astype(f32)                        # (BS, V_in)
    # embedding is pre-scaled by sqrt(E); pe is pre-broadcast to (BS, E)
    x = jnp.dot(onehot, emb_ref[...], preferred_element_type=f32) + pe_ref[...]

    # ---- block-diagonal (same-batch-element) additive attention bias, built once ----
    row_b = jax.lax.broadcasted_iota(jnp.int32, (B, seq, BS), 0).reshape(BS, BS)
    col_b = jax.lax.broadcasted_iota(jnp.int32, (BS, B, seq), 1).reshape(BS, BS)
    attn_bias = jnp.where(row_b == col_b, f32(0.0), f32(-1e30))     # (BS, BS)

    def layer_norm(h, w_ref, b_ref):
        # one-pass statistics: var = E[h^2] - mu^2 (slightly less robust than two-pass,
        # fine for O(1) activations; eps kept at 1e-5)
        mu = jnp.mean(h, axis=-1, keepdims=True)
        ms = jnp.mean(h * h, axis=-1, keepdims=True)
        inv = jax.lax.rsqrt(ms - mu * mu + 1e-5)
        return (h - mu) * inv * w_ref[0] + b_ref[0]

    def head_major(t2d):
        # (BS, E) -> (H, BS, D): lane split then sublane/major swap via einshape
        return pltpu.einshape("nhd->hnd", t2d.reshape(BS, H, D))

    for blk in range(n_blocks):
        (w_in, b_in, w_o, b_o, ln1w, ln1b,
         w1, b1, w2, b2, ln2w, ln2b) = block_refs[12 * blk:12 * (blk + 1)]

        # --- multi-head self-attention (1/sqrt(D) pre-folded into q columns) ---
        qkv = jnp.dot(bf(x), bf(w_in[...]), preferred_element_type=f32) + b_in[0]  # (BS, 3E)
        qh = head_major(qkv[:, :E])                                 # (H, BS, D)
        kh = head_major(qkv[:, E:2 * E])
        vh = head_major(qkv[:, 2 * E:])

        s = jnp.einsum("hnd,hmd->hnm", bf(qh), bf(kh),
                       preferred_element_type=f32)                  # (H, BS, BS)
        s = s + attn_bias                                           # mask cross-batch pairs
        s = s - jnp.max(s, axis=-1, keepdims=True)
        p = jnp.exp(s)
        p = p * pl.reciprocal(jnp.sum(p, axis=-1, keepdims=True), approx=True)
        ctx = jnp.einsum("hnm,hmd->hnd", bf(p), bf(vh),
                         preferred_element_type=f32)                # (H, BS, D)
        ctx = pltpu.einshape("hnd->nhd", ctx).reshape(BS, E)        # heads back on lanes

        attn = jnp.dot(bf(ctx), bf(w_o[...]), preferred_element_type=f32) + b_o[0]

        # --- residual + LayerNorm 1 (dropout is identity, p=0) ---
        x1 = layer_norm(attn + x, ln1w, ln1b)

        # --- MLP: Linear -> ReLU -> Linear ---
        m = jnp.dot(bf(x1), bf(w1[...]), preferred_element_type=f32) + b1[0]
        m = jnp.maximum(m, 0.0)
        m = jnp.dot(bf(m), bf(w2[...]), preferred_element_type=f32) + b2[0]

        # --- residual + LayerNorm 2 ---
        x = layer_norm(m + x1, ln2w, ln2b)

    # --- lane-dense output projection: (BS, 128)-padded slab, sliced in wrapper ---
    y = jnp.dot(bf(x), bf(w_out_ref[...]), preferred_element_type=f32) + b_out_ref[0]
    o_ref[...] = y.astype(o_ref.dtype)


# ------------------------------ JAX wrapper --------------------------------


def encoder_forward(token_ids, kparams, n_heads):
    """Fused-Pallas forward. `kparams` must come from prepare_params()."""
    B, S = token_ids.shape
    V_in, E = kparams["embedding"].shape
    VP = kparams["w_out"].shape[1]           # lane-padded output width (128)
    V = kparams["out_vocab"]
    BS = B * S
    MLP = kparams["blocks"][0]["w1"].shape[1]
    n_blocks = len(kparams["blocks"])
    H = n_heads
    D = E // H

    ids2d = token_ids.reshape(BS, 1).astype(jnp.int32)
    pe_bs = jnp.broadcast_to(kparams["pe"][:S][None], (B, S, E)).reshape(BS, E)

    flat_block_args = []
    for blk in kparams["blocks"]:
        flat_block_args += [blk["w_in"], blk["b_in"], blk["w_o"], blk["b_o"],
                            blk["ln1_w"], blk["ln1_b"], blk["w1"], blk["b1"],
                            blk["w2"], blk["b2"], blk["ln2_w"], blk["ln2_b"]]

    kernel = functools.partial(encoder_fused_kernel, n_heads=n_heads,
                               n_blocks=n_blocks, seq=S)

    # advisory cost estimate so XLA schedules the surrounding glue ops sensibly
    per_block_flops = (2 * BS * E * 3 * E          # qkv projection
                       + 2 * 2 * H * BS * BS * D   # scores + context
                       + 2 * BS * E * E            # output projection
                       + 2 * 2 * BS * E * MLP)     # mlp
    flops = 2 * BS * V_in * E + n_blocks * per_block_flops + 2 * BS * E * VP
    inputs = [ids2d, kparams["embedding"], pe_bs, *flat_block_args,
              kparams["w_out"], kparams["b_out"]]
    bytes_accessed = int(sum(a.size * a.dtype.itemsize for a in inputs) + BS * VP * 4)
    cost = pl.CostEstimate(flops=int(flops),
                           transcendentals=int(n_blocks * H * BS * BS),
                           bytes_accessed=bytes_accessed)

    # Single gridless pallas_call: every operand is one whole block resident in VMEM
    # (~100 KB total here, far below any generation's VMEM limit).
    y = pl.pallas_call(
        kernel,
        out_shape=jax.ShapeDtypeStruct((BS, VP), jnp.float32),
        cost_estimate=cost,
    )(ids2d, kparams["embedding"], pe_bs, *flat_block_args,
      kparams["w_out"], kparams["b_out"])

    # slice the lane padding back off and match .permute(0, 2, 1)
    return y[:, :V].reshape(B, S, V).transpose(0, 2, 1)             # (B, V, S)


def prepare_params(params, n_heads, lane_pad=128):
    """Fold constant scales into weights and lane-pad the output projection.

    * sqrt(E) embedding scale -> embedding table
    * 1/sqrt(head_dim) attention scale -> q columns of in-projection weight & bias
    * w_out / b_out zero-padded to a 128-lane-dense output width
    """
    E = params["embedding"].shape[1]
    D = E // n_heads
    V = params["w_out"].shape[1]
    VP = ((V + lane_pad - 1) // lane_pad) * lane_pad
    inv = jnp.float32(1.0 / np.sqrt(float(D)))

    blocks = []
    for blk in params["blocks"]:
        b = dict(blk)
        b["w_in"] = blk["w_in"].at[:, :E].multiply(inv)
        b["b_in"] = blk["b_in"].at[:, :E].multiply(inv)
        blocks.append(b)

    w_out = jnp.zeros((E, VP), jnp.float32).at[:, :V].set(params["w_out"])
    b_out = jnp.zeros((1, VP), jnp.float32).at[:, :V].set(params["b_out"])

    return dict(
        embedding=params["embedding"] * jnp.float32(np.sqrt(float(E))),
        pe=params["pe"],
        blocks=blocks,
        w_out=w_out,
        b_out=b_out,
        out_vocab=V,
    )


# --------------------------- pure-JAX f32 reference ------------------------------


def encoder_forward_ref(token_ids, params, n_heads):
    x = jnp.take(params["embedding"], token_ids, axis=0)
    E = x.shape[-1]
    S = x.shape[1]
    x = x * np.sqrt(E) + params["pe"][:S][None]
    D = E // n_heads

    def ln(h, w, b):
        mu = jnp.mean(h, axis=-1, keepdims=True)
        var = jnp.mean((h - mu) ** 2, axis=-1, keepdims=True)
        return (h - mu) * jax.lax.rsqrt(var + 1e-5) * w + b

    for p in params["blocks"]:
        qkv = x @ p["w_in"] + p["b_in"][0]
        q, k, v = qkv[..., :E], qkv[..., E:2 * E], qkv[..., 2 * E:]
        B, S_, _ = q.shape
        qh = q.reshape(B, S_, n_heads, D).transpose(0, 2, 1, 3)
        kh = k.reshape(B, S_, n_heads, D).transpose(0, 2, 1, 3)
        vh = v.reshape(B, S_, n_heads, D).transpose(0, 2, 1, 3)
        s = jnp.einsum("bhsd,bhtd->bhst", qh, kh) / np.sqrt(D)
        pmat = jax.nn.softmax(s, axis=-1)
        o = jnp.einsum("bhst,bhtd->bhsd", pmat, vh).transpose(0, 2, 1, 3).reshape(B, S_, E)
        attn = o @ p["w_o"] + p["b_o"][0]
        x1 = ln(attn + x, p["ln1_w"][0], p["ln1_b"][0])
        m = jnp.maximum(x1 @ p["w1"] + p["b1"][0], 0.0) @ p["w2"] + p["b2"][0]
        x = ln(m + x1, p["ln2_w"][0], p["ln2_b"][0])
    y = x @ params["w_out"] + params["b_out"][0]
    return jnp.transpose(y, (0, 2, 1))


# ------------------------------- param init ----------------------------------


def make_params(key, in_vocab, out_vocab, E, n_heads, MLP, n_blocks, max_len):
    keys = jax.random.split(key, 3 + 6 * n_blocks)
    ki = iter(keys)

    def rnd(k, shape, scale=0.05):
        return (jax.random.normal(k, shape, jnp.float32) * scale).astype(jnp.float32)

    # sinusoidal PE exactly as the PyTorch loop builds it
    pe = np.zeros((max_len, E), np.float32)
    for pos in range(max_len):
        for i in range(0, E, 2):
            pe[pos, i] = np.sin(pos / 10000 ** (2 * i / E))
            pe[pos, i + 1] = np.cos(pos / 10000 ** (2 * (i + 1) / E))

    blocks = []
    for _ in range(n_blocks):
        blocks.append(dict(
            w_in=rnd(next(ki), (E, 3 * E)),        # x @ w_in  (pre-transposed vs torch (3E,E))
            b_in=jnp.zeros((1, 3 * E), jnp.float32),
            w_o=rnd(next(ki), (E, E)),
            b_o=jnp.zeros((1, E), jnp.float32),
            ln1_w=jnp.ones((1, E), jnp.float32),
            ln1_b=jnp.zeros((1, E), jnp.float32),
            w1=rnd(next(ki), (E, MLP)),
            b1=rnd(next(ki), (1, MLP)),
            w2=rnd(next(ki), (MLP, E)),
            b2=rnd(next(ki), (1, E)),
            ln2_w=jnp.ones((1, E), jnp.float32),
            ln2_b=jnp.zeros((1, E), jnp.float32),
        ))

    return dict(
        embedding=rnd(next(ki), (in_vocab, E), scale=0.5),
        pe=jnp.asarray(pe),
        blocks=blocks,
        w_out=rnd(next(ki), (E, out_vocab)),
        b_out=rnd(next(ki), (1, out_vocab)),
    )


# ---------------------------------- main --------------------------------------


if __name__ == "__main__":
    B, S = 2, 8
    IN_VOCAB, OUT_VOCAB = 50, 16
    E, N_HEADS, MLP, N_BLOCKS, MAX_LEN = 32, 4, 64, 2, 16

    key = jax.random.PRNGKey(0)
    k_tok, k_param = jax.random.split(key)
    token_ids = jax.random.randint(k_tok, (B, S), 0, IN_VOCAB, dtype=jnp.int32)
    params = make_params(k_param, IN_VOCAB, OUT_VOCAB, E, N_HEADS, MLP, N_BLOCKS, MAX_LEN)

    # kernel params: sqrt(E) / 1/sqrt(head_dim) scales folded in, output lane-padded
    kparams = prepare_params(params, N_HEADS)

    out = encoder_forward(token_ids, kparams, N_HEADS)
    out = jax.block_until_ready(out)
    assert out.shape == (B, OUT_VOCAB, S), out.shape

    ref = jax.block_until_ready(encoder_forward_ref(token_ids, params, N_HEADS))
    # tolerance covers bf16 MXU inputs (f32 reference) + approx EUP reciprocal in softmax
    np.testing.assert_allclose(np.asarray(out), np.asarray(ref), atol=2e-2, rtol=2e-2)

    print("KERNEL_OK")
</pallas_src>

<mosaic_0001>
module attributes {stable_mosaic.version = 11 : i64} {
  func.func @encoder_fused_kernel(%arg0: memref<16x1xi32, #tpu.memory_space<vmem>>, %arg1: memref<50x32xf32, #tpu.memory_space<vmem>>, %arg2: memref<16x32xf32, #tpu.memory_space<vmem>>, %arg3: memref<32x96xf32, #tpu.memory_space<vmem>>, %arg4: memref<1x96xf32, #tpu.memory_space<vmem>>, %arg5: memref<32x32xf32, #tpu.memory_space<vmem>>, %arg6: memref<1x32xf32, #tpu.memory_space<vmem>>, %arg7: memref<1x32xf32, #tpu.memory_space<vmem>>, %arg8: memref<1x32xf32, #tpu.memory_space<vmem>>, %arg9: memref<32x64xf32, #tpu.memory_space<vmem>>, %arg10: memref<1x64xf32, #tpu.memory_space<vmem>>, %arg11: memref<64x32xf32, #tpu.memory_space<vmem>>, %arg12: memref<1x32xf32, #tpu.memory_space<vmem>>, %arg13: memref<1x32xf32, #tpu.memory_space<vmem>>, %arg14: memref<1x32xf32, #tpu.memory_space<vmem>>, %arg15: memref<32x96xf32, #tpu.memory_space<vmem>>, %arg16: memref<1x96xf32, #tpu.memory_space<vmem>>, %arg17: memref<32x32xf32, #tpu.memory_space<vmem>>, %arg18: memref<1x32xf32, #tpu.memory_space<vmem>>, %arg19: memref<1x32xf32, #tpu.memory_space<vmem>>, %arg20: memref<1x32xf32, #tpu.memory_space<vmem>>, %arg21: memref<32x64xf32, #tpu.memory_space<vmem>>, %arg22: memref<1x64xf32, #tpu.memory_space<vmem>>, %arg23: memref<64x32xf32, #tpu.memory_space<vmem>>, %arg24: memref<1x32xf32, #tpu.memory_space<vmem>>, %arg25: memref<1x32xf32, #tpu.memory_space<vmem>>, %arg26: memref<1x32xf32, #tpu.memory_space<vmem>>, %arg27: memref<32x128xf32, #tpu.memory_space<vmem>>, %arg28: memref<1x128xf32, #tpu.memory_space<vmem>>, %arg29: memref<16x128xf32, #tpu.memory_space<vmem>>) attributes {dimension_semantics = [], scalar_prefetch = 0 : i64, scratch_operands = 0 : i64, tpu.core_type = #tpu.core_type<tc>} {
    %c0 = arith.constant 0 : index
    %c0_0 = arith.constant 0 : index
    %0 = vector.load %arg0[%c0, %c0_0] : memref<16x1xi32, #tpu.memory_space<vmem>>, vector<16x1xi32>
    %1 = tpu.iota {dimensions = array<i32: 1>} : vector<16x50xi32>
    %2 = vector.broadcast %0 : vector<16x1xi32> to vector<16x50xi32>
    %3 = arith.cmpi eq, %1, %2 : vector<16x50xi32>
    %4 = arith.extui %3 : vector<16x50xi1> to vector<16x50xi32>
    %5 = arith.sitofp %4 : vector<16x50xi32> to vector<16x50xf32>
    %c0_1 = arith.constant 0 : index
    %c0_2 = arith.constant 0 : index
    %6 = vector.load %arg1[%c0_1, %c0_2] : memref<50x32xf32, #tpu.memory_space<vmem>>, vector<50x32xf32>
    %cst = arith.constant dense<0.000000e+00> : vector<16x32xf32>
    %7 = tpu.matmul %5, %6, %cst {dimension_numbers = #tpu.dot_dimension_numbers<[1], [0], [0], [1], [0, 0, 1, 1], [], []>} : vector<16x50xf32>, vector<50x32xf32>, vector<16x32xf32> -> vector<16x32xf32>
    %c0_3 = arith.constant 0 : index
    %c0_4 = arith.constant 0 : index
    %8 = vector.load %arg2[%c0_3, %c0_4] : memref<16x32xf32, #tpu.memory_space<vmem>>, vector<16x32xf32>
    %9 = arith.addf %7, %8 : vector<16x32xf32>
    %10 = tpu.iota {dimensions = array<i32: 0>} : vector<2x8x16xi32>
    %11 = vector.shape_cast %10 : vector<2x8x16xi32> to vector<16x16xi32>
    %12 = tpu.iota {dimensions = array<i32: 1>} : vector<16x2x8xi32>
    %13 = vector.shape_cast %12 : vector<16x2x8xi32> to vector<16x16xi32>
    %14 = arith.cmpi eq, %11, %13 : vector<16x16xi32>
    %cst_5 = arith.constant 0.000000e+00 : f32
    %cst_6 = arith.constant -1.000000e+30 : f32
    %15 = vector.broadcast %cst_5 : f32 to vector<16x16xf32>
    %16 = vector.broadcast %cst_6 : f32 to vector<16x16xf32>
    %17 = arith.select %14, %15, %16 : vector<16x16xi1>, vector<16x16xf32>
    %18 = arith.truncf %9 : vector<16x32xf32> to vector<16x32xbf16>
    %c0_7 = arith.constant 0 : index
    %c0_8 = arith.constant 0 : index
    %19 = vector.load %arg3[%c0_7, %c0_8] : memref<32x96xf32, #tpu.memory_space<vmem>>, vector<32x96xf32>
    %20 = arith.truncf %19 : vector<32x96xf32> to vector<32x96xbf16>
    %cst_9 = arith.constant dense<0.000000e+00> : vector<16x96xf32>
    %21 = tpu.matmul %18, %20, %cst_9 {dimension_numbers = #tpu.dot_dimension_numbers<[1], [0], [0], [1], [0, 0, 1, 1], [], []>} : vector<16x32xbf16>, vector<32x96xbf16>, vector<16x96xf32> -> vector<16x96xf32>
    %c0_10 = arith.constant 0 : index
    %c0_11 = arith.constant 0 : index
    %22 = vector.load %arg4[%c0_10, %c0_11] : memref<1x96xf32, #tpu.memory_space<vmem>>, vector<1x96xf32>
    %23 = vector.shape_cast %22 : vector<1x96xf32> to vector<96xf32>
    %24 = vector.shape_cast %23 : vector<96xf32> to vector<1x96xf32>
    %25 = vector.broadcast %24 : vector<1x96xf32> to vector<16x96xf32>
    %26 = arith.addf %21, %25 : vector<16x96xf32>
    %27 = vector.extract_strided_slice %26 {offsets = [0, 0], sizes = [16, 32], strides = [1, 1]} : vector<16x96xf32> to vector<16x32xf32>
    %28 = vector.shape_cast %27 : vector<16x32xf32> to vector<16x4x8xf32>
    %29 = tpu.transpose %28, [1, 0, 2] : vector<16x4x8xf32> -> vector<4x16x8xf32>
    %30 = vector.extract_strided_slice %26 {offsets = [0, 32], sizes = [16, 32], strides = [1, 1]} : vector<16x96xf32> to vector<16x32xf32>
    %31 = vector.shape_cast %30 : vector<16x32xf32> to vector<16x4x8xf32>
    %32 = tpu.transpose %31, [1, 0, 2] : vector<16x4x8xf32> -> vector<4x16x8xf32>
    %33 = vector.extract_strided_slice %26 {offsets = [0, 64], sizes = [16, 32], strides = [1, 1]} : vector<16x96xf32> to vector<16x32xf32>
    %34 = vector.shape_cast %33 : vector<16x32xf32> to vector<16x4x8xf32>
    %35 = tpu.transpose %34, [1, 0, 2] : vector<16x4x8xf32> -> vector<4x16x8xf32>
    %36 = arith.truncf %29 : vector<4x16x8xf32> to vector<4x16x8xbf16>
    %37 = arith.truncf %32 : vector<4x16x8xf32> to vector<4x16x8xbf16>
    "tpu.trace_start"() <{level = 10 : i32, message = "hnd,hmd->hnm"}> : () -> ()
    %cst_12 = arith.constant dense<0.000000e+00> : vector<4x16x16xf32>
    %38 = tpu.matmul %36, %37, %cst_12 {dimension_numbers = #tpu.dot_dimension_numbers<[2], [2], [1], [1], [0, 0, 0, 1, 1, 1], [0], [0]>} : vector<4x16x8xbf16>, vector<4x16x8xbf16>, vector<4x16x16xf32> -> vector<4x16x16xf32>
    "tpu.trace_stop"() : () -> ()
    %39 = vector.shape_cast %17 : vector<16x16xf32> to vector<1x16x16xf32>
    %40 = vector.broadcast %39 : vector<1x16x16xf32> to vector<4x16x16xf32>
    %41 = arith.addf %38, %40 : vector<4x16x16xf32>
    %cst_13 = arith.constant dense<0xFF800000> : vector<4x16xf32>
    %42 = vector.multi_reduction <maximumf>, %41, %cst_13 [2] : vector<4x16x16xf32> to vector<4x16xf32>
    %43 = vector.shape_cast %42 : vector<4x16xf32> to vector<4x16x1xf32>
    %44 = vector.broadcast %43 : vector<4x16x1xf32> to vector<4x16x16xf32>
    %45 = arith.subf %41, %44 : vector<4x16x16xf32>
    %46 = math.exp %45 : vector<4x16x16xf32>
    %cst_14 = arith.constant dense<0.000000e+00> : vector<4x16xf32>
    %47 = vector.multi_reduction <add>, %46, %cst_14 [2] : vector<4x16x16xf32> to vector<4x16xf32>
    %48 = vector.shape_cast %47 : vector<4x16xf32> to vector<4x16x1xf32>
    %49 = tpu.reciprocal %48 {approx = true} : vector<4x16x1xf32> -> vector<4x16x1xf32>
    %50 = vector.broadcast %49 : vector<4x16x1xf32> to vector<4x16x16xf32>
    %51 = arith.mulf %46, %50 : vector<4x16x16xf32>
    %52 = arith.truncf %51 : vector<4x16x16xf32> to vector<4x16x16xbf16>
    %53 = arith.truncf %35 : vector<4x16x8xf32> to vector<4x16x8xbf16>
    "tpu.trace_start"() <{level = 10 : i32, message = "hnm,hmd->hnd"}> : () -> ()
    %cst_15 = arith.constant dense<0.000000e+00> : vector<4x16x8xf32>
    %54 = tpu.matmul %52, %53, %cst_15 {dimension_numbers = #tpu.dot_dimension_numbers<[2], [1], [1], [2], [0, 0, 0, 1, 1, 2], [0], [0]>} : vector<4x16x16xbf16>, vector<4x16x8xbf16>, vector<4x16x8xf32> -> vector<4x16x8xf32>
    "tpu.trace_stop"() : () -> ()
    %55 = tpu.transpose %54, [1, 0, 2] : vector<4x16x8xf32> -> vector<16x4x8xf32>
    %56 = vector.shape_cast %55 : vector<16x4x8xf32> to vector<16x32xf32>
    %57 = arith.truncf %56 : vector<16x32xf32> to vector<16x32xbf16>
    %c0_16 = arith.constant 0 : index
    %c0_17 = arith.constant 0 : index
    %58 = vector.load %arg5[%c0_16, %c0_17] : memref<32x32xf32, #tpu.memory_space<vmem>>, vector<32x32xf32>
    %59 = arith.truncf %58 : vector<32x32xf32> to vector<32x32xbf16>
    %cst_18 = arith.constant dense<0.000000e+00> : vector<16x32xf32>
    %60 = tpu.matmul %57, %59, %cst_18 {dimension_numbers = #tpu.dot_dimension_numbers<[1], [0], [0], [1], [0, 0, 1, 1], [], []>} : vector<16x32xbf16>, vector<32x32xbf16>, vector<16x32xf32> -> vector<16x32xf32>
    %c0_19 = arith.constant 0 : index
    %c0_20 = arith.constant 0 : index
    %61 = vector.load %arg6[%c0_19, %c0_20] : memref<1x32xf32, #tpu.memory_space<vmem>>, vector<1x32xf32>
    %62 = vector.shape_cast %61 : vector<1x32xf32> to vector<32xf32>
    %63 = vector.shape_cast %62 : vector<32xf32> to vector<1x32xf32>
    %64 = vector.broadcast %63 : vector<1x32xf32> to vector<16x32xf32>
    %65 = arith.addf %60, %64 : vector<16x32xf32>
    %66 = arith.addf %65, %9 : vector<16x32xf32>
    %cst_21 = arith.constant dense<0.000000e+00> : vector<16xf32>
    %67 = vector.multi_reduction <add>, %66, %cst_21 [1] : vector<16x32xf32> to vector<16xf32>
    %68 = vector.shape_cast %67 : vector<16xf32> to vector<16x1xf32>
    %cst_22 = arith.constant 3.200000e+01 : f32
    %69 = vector.broadcast %cst_22 : f32 to vector<16x1xf32>
    %70 = arith.divf %68, %69 : vector<16x1xf32>
    %71 = arith.mulf %66, %66 : vector<16x32xf32>
    %cst_23 = arith.constant dense<0.000000e+00> : vector<16xf32>
    %72 = vector.multi_reduction <add>, %71, %cst_23 [1] : vector<16x32xf32> to vector<16xf32>
    %73 = vector.shape_cast %72 : vector<16xf32> to vector<16x1xf32>
    %cst_24 = arith.constant 3.200000e+01 : f32
    %74 = vector.broadcast %cst_24 : f32 to vector<16x1xf32>
    %75 = arith.divf %73, %74 : vector<16x1xf32>
    %76 = arith.mulf %70, %70 : vector<16x1xf32>
    %77 = arith.subf %75, %76 : vector<16x1xf32>
    %cst_25 = arith.constant 9.99999974E-6 : f32
    %78 = vector.broadcast %cst_25 : f32 to vector<16x1xf32>
    %79 = arith.addf %77, %78 : vector<16x1xf32>
    %80 = math.rsqrt %79 : vector<16x1xf32>
    %81 = vector.broadcast %70 : vector<16x1xf32> to vector<16x32xf32>
    %82 = arith.subf %66, %81 : vector<16x32xf32>
    %83 = vector.broadcast %80 : vector<16x1xf32> to vector<16x32xf32>
    %84 = arith.mulf %82, %83 : vector<16x32xf32>
    %c0_26 = arith.constant 0 : index
    %c0_27 = arith.constant 0 : index
    %85 = vector.load %arg7[%c0_26, %c0_27] : memref<1x32xf32, #tpu.memory_space<vmem>>, vector<1x32xf32>
    %86 = vector.shape_cast %85 : vector<1x32xf32> to vector<32xf32>
    %87 = vector.shape_cast %86 : vector<32xf32> to vector<1x32xf32>
    %88 = vector.broadcast %87 : vector<1x32xf32> to vector<16x32xf32>
    %89 = arith.mulf %84, %88 : vector<16x32xf32>
    %c0_28 = arith.constant 0 : index
    %c0_29 = arith.constant 0 : index
    %90 = vector.load %arg8[%c0_28, %c0_29] : memref<1x32xf32, #tpu.memory_space<vmem>>, vector<1x32xf32>
    %91 = vector.shape_cast %90 : vector<1x32xf32> to vector<32xf32>
    %92 = vector.shape_cast %91 : vector<32xf32> to vector<1x32xf32>
    %93 = vector.broadcast %92 : vector<1x32xf32> to vector<16x32xf32>
    %94 = arith.addf %89, %93 : vector<16x32xf32>
    %95 = arith.truncf %94 : vector<16x32xf32> to vector<16x32xbf16>
    %c0_30 = arith.constant 0 : index
    %c0_31 = arith.constant 0 : index
    %96 = vector.load %arg9[%c0_30, %c0_31] : memref<32x64xf32, #tpu.memory_space<vmem>>, vector<32x64xf32>
    %97 = arith.truncf %96 : vector<32x64xf32> to vector<32x64xbf16>
    %cst_32 = arith.constant dense<0.000000e+00> : vector<16x64xf32>
    %98 = tpu.matmul %95, %97, %cst_32 {dimension_numbers = #tpu.dot_dimension_numbers<[1], [0], [0], [1], [0, 0, 1, 1], [], []>} : vector<16x32xbf16>, vector<32x64xbf16>, vector<16x64xf32> -> vector<16x64xf32>
    %c0_33 = arith.constant 0 : index
    %c0_34 = arith.constant 0 : index
    %99 = vector.load %arg10[%c0_33, %c0_34] : memref<1x64xf32, #tpu.memory_space<vmem>>, vector<1x64xf32>
    %100 = vector.shape_cast %99 : vector<1x64xf32> to vector<64xf32>
    %101 = vector.shape_cast %100 : vector<64xf32> to vector<1x64xf32>
    %102 = vector.broadcast %101 : vector<1x64xf32> to vector<16x64xf32>
    %103 = arith.addf %98, %102 : vector<16x64xf32>
    %cst_35 = arith.constant 0.000000e+00 : f32
    %104 = vector.broadcast %cst_35 : f32 to vector<16x64xf32>
    %105 = arith.maximumf %103, %104 : vector<16x64xf32>
    %106 = arith.truncf %105 : vector<16x64xf32> to vector<16x64xbf16>
    %c0_36 = arith.constant 0 : index
    %c0_37 = arith.constant 0 : index
    %107 = vector.load %arg11[%c0_36, %c0_37] : memref<64x32xf32, #tpu.memory_space<vmem>>, vector<64x32xf32>
    %108 = arith.truncf %107 : vector<64x32xf32> to vector<64x32xbf16>
    %cst_38 = arith.constant dense<0.000000e+00> : vector<16x32xf32>
    %109 = tpu.matmul %106, %108, %cst_38 {dimension_numbers = #tpu.dot_dimension_numbers<[1], [0], [0], [1], [0, 0, 1, 1], [], []>} : vector<16x64xbf16>, vector<64x32xbf16>, vector<16x32xf32> -> vector<16x32xf32>
    %c0_39 = arith.constant 0 : index
    %c0_40 = arith.constant 0 : index
    %110 = vector.load %arg12[%c0_39, %c0_40] : memref<1x32xf32, #tpu.memory_space<vmem>>, vector<1x32xf32>
    %111 = vector.shape_cast %110 : vector<1x32xf32> to vector<32xf32>
    %112 = vector.shape_cast %111 : vector<32xf32> to vector<1x32xf32>
    %113 = vector.broadcast %112 : vector<1x32xf32> to vector<16x32xf32>
    %114 = arith.addf %109, %113 : vector<16x32xf32>
    %115 = arith.addf %114, %94 : vector<16x32xf32>
    %cst_41 = arith.constant dense<0.000000e+00> : vector<16xf32>
    %116 = vector.multi_reduction <add>, %115, %cst_41 [1] : vector<16x32xf32> to vector<16xf32>
    %117 = vector.shape_cast %116 : vector<16xf32> to vector<16x1xf32>
    %cst_42 = arith.constant 3.200000e+01 : f32
    %118 = vector.broadcast %cst_42 : f32 to vector<16x1xf32>
    %119 = arith.divf %117, %118 : vector<16x1xf32>
    %120 = arith.mulf %115, %115 : vector<16x32xf32>
    %cst_43 = arith.constant dense<0.000000e+00> : vector<16xf32>
    %121 = vector.multi_reduction <add>, %120, %cst_43 [1] : vector<16x32xf32> to vector<16xf32>
    %122 = vector.shape_cast %121 : vector<16xf32> to vector<16x1xf32>
    %cst_44 = arith.constant 3.200000e+01 : f32
    %123 = vector.broadcast %cst_44 : f32 to vector<16x1xf32>
    %124 = arith.divf %122, %123 : vector<16x1xf32>
    %125 = arith.mulf %119, %119 : vector<16x1xf32>
    %126 = arith.subf %124, %125 : vector<16x1xf32>
    %cst_45 = arith.constant 9.99999974E-6 : f32
    %127 = vector.broadcast %cst_45 : f32 to vector<16x1xf32>
    %128 = arith.addf %126, %127 : vector<16x1xf32>
    %129 = math.rsqrt %128 : vector<16x1xf32>
    %130 = vector.broadcast %119 : vector<16x1xf32> to vector<16x32xf32>
    %131 = arith.subf %115, %130 : vector<16x32xf32>
    %132 = vector.broadcast %129 : vector<16x1xf32> to vector<16x32xf32>
    %133 = arith.mulf %131, %132 : vector<16x32xf32>
    %c0_46 = arith.constant 0 : index
    %c0_47 = arith.constant 0 : index
    %134 = vector.load %arg13[%c0_46, %c0_47] : memref<1x32xf32, #tpu.memory_space<vmem>>, vector<1x32xf32>
    %135 = vector.shape_cast %134 : vector<1x32xf32> to vector<32xf32>
    %136 = vector.shape_cast %135 : vector<32xf32> to vector<1x32xf32>
    %137 = vector.broadcast %136 : vector<1x32xf32> to vector<16x32xf32>
    %138 = arith.mulf %133, %137 : vector<16x32xf32>
    %c0_48 = arith.constant 0 : index
    %c0_49 = arith.constant 0 : index
    %139 = vector.load %arg14[%c0_48, %c0_49] : memref<1x32xf32, #tpu.memory_space<vmem>>, vector<1x32xf32>
    %140 = vector.shape_cast %139 : vector<1x32xf32> to vector<32xf32>
    %141 = vector.shape_cast %140 : vector<32xf32> to vector<1x32xf32>
    %142 = vector.broadcast %141 : vector<1x32xf32> to vector<16x32xf32>
    %143 = arith.addf %138, %142 : vector<16x32xf32>
    %144 = arith.truncf %143 : vector<16x32xf32> to vector<16x32xbf16>
    %c0_50 = arith.constant 0 : index
    %c0_51 = arith.constant 0 : index
    %145 = vector.load %arg15[%c0_50, %c0_51] : memref<32x96xf32, #tpu.memory_space<vmem>>, vector<32x96xf32>
    %146 = arith.truncf %145 : vector<32x96xf32> to vector<32x96xbf16>
    %cst_52 = arith.constant dense<0.000000e+00> : vector<16x96xf32>
    %147 = tpu.matmul %144, %146, %cst_52 {dimension_numbers = #tpu.dot_dimension_numbers<[1], [0], [0], [1], [0, 0, 1, 1], [], []>} : vector<16x32xbf16>, vector<32x96xbf16>, vector<16x96xf32> -> vector<16x96xf32>
    %c0_53 = arith.constant 0 : index
    %c0_54 = arith.constant 0 : index
    %148 = vector.load %arg16[%c0_53, %c0_54] : memref<1x96xf32, #tpu.memory_space<vmem>>, vector<1x96xf32>
    %149 = vector.shape_cast %148 : vector<1x96xf32> to vector<96xf32>
    %150 = vector.shape_cast %149 : vector<96xf32> to vector<1x96xf32>
    %151 = vector.broadcast %150 : vector<1x96xf32> to vector<16x96xf32>
    %152 = arith.addf %147, %151 : vector<16x96xf32>
    %153 = vector.extract_strided_slice %152 {offsets = [0, 0], sizes = [16, 32], strides = [1, 1]} : vector<16x96xf32> to vector<16x32xf32>
    %154 = vector.shape_cast %153 : vector<16x32xf32> to vector<16x4x8xf32>
    %155 = tpu.transpose %154, [1, 0, 2] : vector<16x4x8xf32> -> vector<4x16x8xf32>
    %156 = vector.extract_strided_slice %152 {offsets = [0, 32], sizes = [16, 32], strides = [1, 1]} : vector<16x96xf32> to vector<16x32xf32>
    %157 = vector.shape_cast %156 : vector<16x32xf32> to vector<16x4x8xf32>
    %158 = tpu.transpose %157, [1, 0, 2] : vector<16x4x8xf32> -> vector<4x16x8xf32>
    %159 = vector.extract_strided_slice %152 {offsets = [0, 64], sizes = [16, 32], strides = [1, 1]} : vector<16x96xf32> to vector<16x32xf32>
    %160 = vector.shape_cast %159 : vector<16x32xf32> to vector<16x4x8xf32>
    %161 = tpu.transpose %160, [1, 0, 2] : vector<16x4x8xf32> -> vector<4x16x8xf32>
    %162 = arith.truncf %155 : vector<4x16x8xf32> to vector<4x16x8xbf16>
    %163 = arith.truncf %158 : vector<4x16x8xf32> to vector<4x16x8xbf16>
    "tpu.trace_start"() <{level = 10 : i32, message = "hnd,hmd->hnm"}> : () -> ()
    %cst_55 = arith.constant dense<0.000000e+00> : vector<4x16x16xf32>
    %164 = tpu.matmul %162, %163, %cst_55 {dimension_numbers = #tpu.dot_dimension_numbers<[2], [2], [1], [1], [0, 0, 0, 1, 1, 1], [0], [0]>} : vector<4x16x8xbf16>, vector<4x16x8xbf16>, vector<4x16x16xf32> -> vector<4x16x16xf32>
    "tpu.trace_stop"() : () -> ()
    %165 = vector.shape_cast %17 : vector<16x16xf32> to vector<1x16x16xf32>
    %166 = vector.broadcast %165 : vector<1x16x16xf32> to vector<4x16x16xf32>
    %167 = arith.addf %164, %166 : vector<4x16x16xf32>
    %cst_56 = arith.constant dense<0xFF800000> : vector<4x16xf32>
    %168 = vector.multi_reduction <maximumf>, %167, %cst_56 [2] : vector<4x16x16xf32> to vector<4x16xf32>
    %169 = vector.shape_cast %168 : vector<4x16xf32> to vector<4x16x1xf32>
    %170 = vector.broadcast %169 : vector<4x16x1xf32> to vector<4x16x16xf32>
    %171 = arith.subf %167, %170 : vector<4x16x16xf32>
    %172 = math.exp %171 : vector<4x16x16xf32>
    %cst_57 = arith.constant dense<0.000000e+00> : vector<4x16xf32>
    %173 = vector.multi_reduction <add>, %172, %cst_57 [2] : vector<4x16x16xf32> to vector<4x16xf32>
    %174 = vector.shape_cast %173 : vector<4x16xf32> to vector<4x16x1xf32>
    %175 = tpu.reciprocal %174 {approx = true} : vector<4x16x1xf32> -> vector<4x16x1xf32>
    %176 = vector.broadcast %175 : vector<4x16x1xf32> to vector<4x16x16xf32>
    %177 = arith.mulf %172, %176 : vector<4x16x16xf32>
    %178 = arith.truncf %177 : vector<4x16x16xf32> to vector<4x16x16xbf16>
    %179 = arith.truncf %161 : vector<4x16x8xf32> to vector<4x16x8xbf16>
    "tpu.trace_start"() <{level = 10 : i32, message = "hnm,hmd->hnd"}> : () -> ()
    %cst_58 = arith.constant dense<0.000000e+00> : vector<4x16x8xf32>
    %180 = tpu.matmul %178, %179, %cst_58 {dimension_numbers = #tpu.dot_dimension_numbers<[2], [1], [1], [2], [0, 0, 0, 1, 1, 2], [0], [0]>} : vector<4x16x16xbf16>, vector<4x16x8xbf16>, vector<4x16x8xf32> -> vector<4x16x8xf32>
    "tpu.trace_stop"() : () -> ()
    %181 = tpu.transpose %180, [1, 0, 2] : vector<4x16x8xf32> -> vector<16x4x8xf32>
    %182 = vector.shape_cast %181 : vector<16x4x8xf32> to vector<16x32xf32>
    %183 = arith.truncf %182 : vector<16x32xf32> to vector<16x32xbf16>
    %c0_59 = arith.constant 0 : index
    %c0_60 = arith.constant 0 : index
    %184 = vector.load %arg17[%c0_59, %c0_60] : memref<32x32xf32, #tpu.memory_space<vmem>>, vector<32x32xf32>
    %185 = arith.truncf %184 : vector<32x32xf32> to vector<32x32xbf16>
    %cst_61 = arith.constant dense<0.000000e+00> : vector<16x32xf32>
    %186 = tpu.matmul %183, %185, %cst_61 {dimension_numbers = #tpu.dot_dimension_numbers<[1], [0], [0], [1], [0, 0, 1, 1], [], []>} : vector<16x32xbf16>, vector<32x32xbf16>, vector<16x32xf32> -> vector<16x32xf32>
    %c0_62 = arith.constant 0 : index
    %c0_63 = arith.constant 0 : index
    %187 = vector.load %arg18[%c0_62, %c0_63] : memref<1x32xf32, #tpu.memory_space<vmem>>, vector<1x32xf32>
    %188 = vector.shape_cast %187 : vector<1x32xf32> to vector<32xf32>
    %189 = vector.shape_cast %188 : vector<32xf32> to vector<1x32xf32>
    %190 = vector.broadcast %189 : vector<1x32xf32> to vector<16x32xf32>
    %191 = arith.addf %186, %190 : vector<16x32xf32>
    %192 = arith.addf %191, %143 : vector<16x32xf32>
    %cst_64 = arith.constant dense<0.000000e+00> : vector<16xf32>
    %193 = vector.multi_reduction <add>, %192, %cst_64 [1] : vector<16x32xf32> to vector<16xf32>
    %194 = vector.shape_cast %193 : vector<16xf32> to vector<16x1xf32>
    %cst_65 = arith.constant 3.200000e+01 : f32
    %195 = vector.broadcast %cst_65 : f32 to vector<16x1xf32>
    %196 = arith.divf %194, %195 : vector<16x1xf32>
    %197 = arith.mulf %192, %192 : vector<16x32xf32>
    %cst_66 = arith.constant dense<0.000000e+00> : vector<16xf32>
    %198 = vector.multi_reduction <add>, %197, %cst_66 [1] : vector<16x32xf32> to vector<16xf32>
    %199 = vector.shape_cast %198 : vector<16xf32> to vector<16x1xf32>
    %cst_67 = arith.constant 3.200000e+01 : f32
    %200 = vector.broadcast %cst_67 : f32 to vector<16x1xf32>
    %201 = arith.divf %199, %200 : vector<16x1xf32>
    %202 = arith.mulf %196, %196 : vector<16x1xf32>
    %203 = arith.subf %201, %202 : vector<16x1xf32>
    %cst_68 = arith.constant 9.99999974E-6 : f32
    %204 = vector.broadcast %cst_68 : f32 to vector<16x1xf32>
    %205 = arith.addf %203, %204 : vector<16x1xf32>
    %206 = math.rsqrt %205 : vector<16x1xf32>
    %207 = vector.broadcast %196 : vector<16x1xf32> to vector<16x32xf32>
    %208 = arith.subf %192, %207 : vector<16x32xf32>
    %209 = vector.broadcast %206 : vector<16x1xf32> to vector<16x32xf32>
    %210 = arith.mulf %208, %209 : vector<16x32xf32>
    %c0_69 = arith.constant 0 : index
    %c0_70 = arith.constant 0 : index
    %211 = vector.load %arg19[%c0_69, %c0_70] : memref<1x32xf32, #tpu.memory_space<vmem>>, vector<1x32xf32>
    %212 = vector.shape_cast %211 : vector<1x32xf32> to vector<32xf32>
    %213 = vector.shape_cast %212 : vector<32xf32> to vector<1x32xf32>
    %214 = vector.broadcast %213 : vector<1x32xf32> to vector<16x32xf32>
    %215 = arith.mulf %210, %214 : vector<16x32xf32>
    %c0_71 = arith.constant 0 : index
    %c0_72 = arith.constant 0 : index
    %216 = vector.load %arg20[%c0_71, %c0_72] : memref<1x32xf32, #tpu.memory_space<vmem>>, vector<1x32xf32>
    %217 = vector.shape_cast %216 : vector<1x32xf32> to vector<32xf32>
    %218 = vector.shape_cast %217 : vector<32xf32> to vector<1x32xf32>
    %219 = vector.broadcast %218 : vector<1x32xf32> to vector<16x32xf32>
    %220 = arith.addf %215, %219 : vector<16x32xf32>
    %221 = arith.truncf %220 : vector<16x32xf32> to vector<16x32xbf16>
    %c0_73 = arith.constant 0 : index
    %c0_74 = arith.constant 0 : index
    %222 = vector.load %arg21[%c0_73, %c0_74] : memref<32x64xf32, #tpu.memory_space<vmem>>, vector<32x64xf32>
    %223 = arith.truncf %222 : vector<32x64xf32> to vector<32x64xbf16>
    %cst_75 = arith.constant dense<0.000000e+00> : vector<16x64xf32>
    %224 = tpu.matmul %221, %223, %cst_75 {dimension_numbers = #tpu.dot_dimension_numbers<[1], [0], [0], [1], [0, 0, 1, 1], [], []>} : vector<16x32xbf16>, vector<32x64xbf16>, vector<16x64xf32> -> vector<16x64xf32>
    %c0_76 = arith.constant 0 : index
    %c0_77 = arith.constant 0 : index
    %225 = vector.load %arg22[%c0_76, %c0_77] : memref<1x64xf32, #tpu.memory_space<vmem>>, vector<1x64xf32>
    %226 = vector.shape_cast %225 : vector<1x64xf32> to vector<64xf32>
    %227 = vector.shape_cast %226 : vector<64xf32> to vector<1x64xf32>
    %228 = vector.broadcast %227 : vector<1x64xf32> to vector<16x64xf32>
    %229 = arith.addf %224, %228 : vector<16x64xf32>
    %cst_78 = arith.constant 0.000000e+00 : f32
    %230 = vector.broadcast %cst_78 : f32 to vector<16x64xf32>
    %231 = arith.maximumf %229, %230 : vector<16x64xf32>
    %232 = arith.truncf %231 : vector<16x64xf32> to vector<16x64xbf16>
    %c0_79 = arith.constant 0 : index
    %c0_80 = arith.constant 0 : index
    %233 = vector.load %arg23[%c0_79, %c0_80] : memref<64x32xf32, #tpu.memory_space<vmem>>, vector<64x32xf32>
    %234 = arith.truncf %233 : vector<64x32xf32> to vector<64x32xbf16>
    %cst_81 = arith.constant dense<0.000000e+00> : vector<16x32xf32>
    %235 = tpu.matmul %232, %234, %cst_81 {dimension_numbers = #tpu.dot_dimension_numbers<[1], [0], [0], [1], [0, 0, 1, 1], [], []>} : vector<16x64xbf16>, vector<64x32xbf16>, vector<16x32xf32> -> vector<16x32xf32>
    %c0_82 = arith.constant 0 : index
    %c0_83 = arith.constant 0 : index
    %236 = vector.load %arg24[%c0_82, %c0_83] : memref<1x32xf32, #tpu.memory_space<vmem>>, vector<1x32xf32>
    %237 = vector.shape_cast %236 : vector<1x32xf32> to vector<32xf32>
    %238 = vector.shape_cast %237 : vector<32xf32> to vector<1x32xf32>
    %239 = vector.broadcast %238 : vector<1x32xf32> to vector<16x32xf32>
    %240 = arith.addf %235, %239 : vector<16x32xf32>
    %241 = arith.addf %240, %220 : vector<16x32xf32>
    %cst_84 = arith.constant dense<0.000000e+00> : vector<16xf32>
    %242 = vector.multi_reduction <add>, %241, %cst_84 [1] : vector<16x32xf32> to vector<16xf32>
    %243 = vector.shape_cast %242 : vector<16xf32> to vector<16x1xf32>
    %cst_85 = arith.constant 3.200000e+01 : f32
    %244 = vector.broadcast %cst_85 : f32 to vector<16x1xf32>
    %245 = arith.divf %243, %244 : vector<16x1xf32>
    %246 = arith.mulf %241, %241 : vector<16x32xf32>
    %cst_86 = arith.constant dense<0.000000e+00> : vector<16xf32>
    %247 = vector.multi_reduction <add>, %246, %cst_86 [1] : vector<16x32xf32> to vector<16xf32>
    %248 = vector.shape_cast %247 : vector<16xf32> to vector<16x1xf32>
    %cst_87 = arith.constant 3.200000e+01 : f32
    %249 = vector.broadcast %cst_87 : f32 to vector<16x1xf32>
    %250 = arith.divf %248, %249 : vector<16x1xf32>
    %251 = arith.mulf %245, %245 : vector<16x1xf32>
    %252 = arith.subf %250, %251 : vector<16x1xf32>
    %cst_88 = arith.constant 9.99999974E-6 : f32
    %253 = vector.broadcast %cst_88 : f32 to vector<16x1xf32>
    %254 = arith.addf %252, %253 : vector<16x1xf32>
    %255 = math.rsqrt %254 : vector<16x1xf32>
    %256 = vector.broadcast %245 : vector<16x1xf32> to vector<16x32xf32>
    %257 = arith.subf %241, %256 : vector<16x32xf32>
    %258 = vector.broadcast %255 : vector<16x1xf32> to vector<16x32xf32>
    %259 = arith.mulf %257, %258 : vector<16x32xf32>
    %c0_89 = arith.constant 0 : index
    %c0_90 = arith.constant 0 : index
    %260 = vector.load %arg25[%c0_89, %c0_90] : memref<1x32xf32, #tpu.memory_space<vmem>>, vector<1x32xf32>
    %261 = vector.shape_cast %260 : vector<1x32xf32> to vector<32xf32>
    %262 = vector.shape_cast %261 : vector<32xf32> to vector<1x32xf32>
    %263 = vector.broadcast %262 : vector<1x32xf32> to vector<16x32xf32>
    %264 = arith.mulf %259, %263 : vector<16x32xf32>
    %c0_91 = arith.constant 0 : index
    %c0_92 = arith.constant 0 : index
    %265 = vector.load %arg26[%c0_91, %c0_92] : memref<1x32xf32, #tpu.memory_space<vmem>>, vector<1x32xf32>
    %266 = vector.shape_cast %265 : vector<1x32xf32> to vector<32xf32>
    %267 = vector.shape_cast %266 : vector<32xf32> to vector<1x32xf32>
    %268 = vector.broadcast %267 : vector<1x32xf32> to vector<16x32xf32>
    %269 = arith.addf %264, %268 : vector<16x32xf32>
    %270 = arith.truncf %269 : vector<16x32xf32> to vector<16x32xbf16>
    %c0_93 = arith.constant 0 : index
    %c0_94 = arith.constant 0 : index
    %271 = vector.load %arg27[%c0_93, %c0_94] : memref<32x128xf32, #tpu.memory_space<vmem>>, vector<32x128xf32>
    %272 = arith.truncf %271 : vector<32x128xf32> to vector<32x128xbf16>
    %cst_95 = arith.constant dense<0.000000e+00> : vector<16x128xf32>
    %273 = tpu.matmul %270, %272, %cst_95 {dimension_numbers = #tpu.dot_dimension_numbers<[1], [0], [0], [1], [0, 0, 1, 1], [], []>} : vector<16x32xbf16>, vector<32x128xbf16>, vector<16x128xf32> -> vector<16x128xf32>
    %c0_96 = arith.constant 0 : index
    %c0_97 = arith.constant 0 : index
    %274 = vector.load %arg28[%c0_96, %c0_97] : memref<1x128xf32, #tpu.memory_space<vmem>>, vector<1x128xf32>
    %275 = vector.shape_cast %274 : vector<1x128xf32> to vector<128xf32>
    %276 = vector.shape_cast %275 : vector<128xf32> to vector<1x128xf32>
    %277 = vector.broadcast %276 : vector<1x128xf32> to vector<16x128xf32>
    %278 = arith.addf %273, %277 : vector<16x128xf32>
    %c0_98 = arith.constant 0 : index
    %c0_99 = arith.constant 0 : index
    %279 = vector.load %arg29[%c0_98, %c0_99] : memref<16x128xf32, #tpu.memory_space<vmem>>, vector<16x128xf32>
    tpu.vector_store %arg29[%c0_98, %c0_99], %278 {strides = array<i32>} : memref<16x128xf32, #tpu.memory_space<vmem>>, vector<16x128xf32>,
    return
  }
}

</mosaic_0001>

<llo_original>
// kernel: tpu_custom_call.1
$region0: #{tpu_custom_call.1}
  #allocation0 [shape = 'u32[]', space=smem, size = 0x4, offset = 0x4, fixed_abs, tag = 'smem constant byte address 0x4 - core index']
  #allocation1 [shape = 'u32[144,128]{1,0:T(1,128)}', space=vmem, size = 0x12000, scoped, tag = 'internal scratch']
  %s0 = inlined_call_operand.smem [shape: u32[30], index: -1, kind: input, shape index: {}]
  %s1 = sld [smem:[%s0]]
  %s2 = scalar_lea.smem %s0, 1
  %s3 = sld [smem:[%s2]]
  %s4 = scalar_lea.smem %s0, 2
  %s5 = sld [smem:[%s4]]
  %s6 = scalar_lea.smem %s0, 3
  %s7 = sld [smem:[%s6]]
  %s8 = scalar_lea.smem %s0, 4
  %s9 = sld [smem:[%s8]]
  %s10 = scalar_lea.smem %s0, 5
  %s11 = sld [smem:[%s10]]
  %s12 = scalar_lea.smem %s0, 6
  %s13 = sld [smem:[%s12]]
  %s14 = scalar_lea.smem %s0, 7
  %s15 = sld [smem:[%s14]]
  %s16 = scalar_lea.smem %s0, 8
  %s17 = sld [smem:[%s16]]
  %s18 = scalar_lea.smem %s0, 9
  %s19 = sld [smem:[%s18]]
  %s20 = scalar_lea.smem %s0, 10
  %s21 = sld [smem:[%s20]]
  %s22 = scalar_lea.smem %s0, 11
  %s23 = sld [smem:[%s22]]
  %s24 = scalar_lea.smem %s0, 12
  %s25 = sld [smem:[%s24]]
  %s26 = scalar_lea.smem %s0, 13
  %s27 = sld [smem:[%s26]]
  %s28 = scalar_lea.smem %s0, 14
  %s29 = sld [smem:[%s28]]
  %s30 = scalar_lea.smem %s0, 15
  %s31 = sld [smem:[%s30]]
  %s32 = scalar_lea.smem %s0, 16
  %s33 = sld [smem:[%s32]]
  %s34 = scalar_lea.smem %s0, 17
  %s35 = sld [smem:[%s34]]
  %s36 = scalar_lea.smem %s0, 18
  %s37 = sld [smem:[%s36]]
  %s38 = scalar_lea.smem %s0, 19
  %s39 = sld [smem:[%s38]]
  %s40 = scalar_lea.smem %s0, 20
  %s41 = sld [smem:[%s40]]
  %s42 = scalar_lea.smem %s0, 21
  %s43 = sld [smem:[%s42]]
  %s44 = scalar_lea.smem %s0, 22
  %s45 = sld [smem:[%s44]]
  %s46 = scalar_lea.smem %s0, 23
  %s47 = sld [smem:[%s46]]
  %s48 = scalar_lea.smem %s0, 24
  %s49 = sld [smem:[%s48]]
  %s50 = scalar_lea.smem %s0, 25
  %s51 = sld [smem:[%s50]]
  %s52 = scalar_lea.smem %s0, 26
  %s53 = sld [smem:[%s52]]
  %s54 = scalar_lea.smem %s0, 27
  %s55 = sld [smem:[%s54]]
  %s56 = scalar_lea.smem %s0, 28
  %s57 = sld [smem:[%s56]]
  %s58 = scalar_lea.smem %s0, 29
  %s59 = sld [smem:[%s58]]
  %s60 = sld [smem:[#allocation0]]
  $region126: #{tpu_custom_call.1} parent=0
    _
  %s62 = ssub.s32 1, %s60
  %s63 = scalar_select 0, %s62, %s60
  $region1: #{tpu_custom_call.1} parent=0
    #allocation2 [shape = 'u8[8192]{0}', space=vmem, size = 0x2000, scoped, tag = 'output window, operand 0, single buffered']
    #allocation3 [shape = 's32[1]{0}', space=sflag, size = 0x4, scoped, tag = 'scoped memory for tpu_custom_call.1']
    %64 = vsyncpa [#allocation3], 0
    // Predicated region
    $region2: #{tpu_custom_call.1} parent=1 // pred_check
      _
    $region3: #{tpu_custom_call.1} parent=1 // pred_check_branch
      %66 = sbr.rel (0) target = $region5
    $region4: #{tpu_custom_call.1} parent=1 // pred_region
      _
    $region5: #{tpu_custom_call.1} parent=1 // pred_fallthru
      _
    // Predicated region
    $region6: #{tpu_custom_call.1} parent=1 // pred_check
      _
    $region7: #{tpu_custom_call.1} parent=1 // pred_check_branch
      %68 = sbr.rel (0) target = $region9
    $region8: #{tpu_custom_call.1} parent=1 // pred_region
      _
    $region9: #{tpu_custom_call.1} parent=1 // pred_fallthru
      _
    // Predicated region
    $region10: #{tpu_custom_call.1} parent=1 // pred_check
      _
    $region11: #{tpu_custom_call.1} parent=1 // pred_check_branch
      %70 = sbr.rel (0) target = $region13
    $region12: #{tpu_custom_call.1} parent=1 // pred_region
      _
    $region13: #{tpu_custom_call.1} parent=1 // pred_fallthru
      _
    // Predicated region
    $region14: #{tpu_custom_call.1} parent=1 // pred_check
      _
    $region15: #{tpu_custom_call.1} parent=1 // pred_check_branch
      %72 = sbr.rel (0) target = $region17
    $region16: #{tpu_custom_call.1} parent=1 // pred_region
      _
    $region17: #{tpu_custom_call.1} parent=1 // pred_fallthru
      _
    // Predicated region
    $region18: #{tpu_custom_call.1} parent=1 // pred_check
      _
    $region19: #{tpu_custom_call.1} parent=1 // pred_check_branch
      %74 = sbr.rel (0) target = $region21
    $region20: #{tpu_custom_call.1} parent=1 // pred_region
      _
    $region21: #{tpu_custom_call.1} parent=1 // pred_fallthru
      _
    // Predicated region
    $region22: #{tpu_custom_call.1} parent=1 // pred_check
      _
    $region23: #{tpu_custom_call.1} parent=1 // pred_check_branch
      %76 = sbr.rel (0) target = $region25
    $region24: #{tpu_custom_call.1} parent=1 // pred_region
      _
    $region25: #{tpu_custom_call.1} parent=1 // pred_fallthru
      _
    // Predicated region
    $region26: #{tpu_custom_call.1} parent=1 // pred_check
      _
    $region27: #{tpu_custom_call.1} parent=1 // pred_check_branch
      %78 = sbr.rel (0) target = $region29
    $region28: #{tpu_custom_call.1} parent=1 // pred_region
      _
    $region29: #{tpu_custom_call.1} parent=1 // pred_fallthru
      _
    // Predicated region
    $region30: #{tpu_custom_call.1} parent=1 // pred_check
      _
    $region31: #{tpu_custom_call.1} parent=1 // pred_check_branch
      %80 = sbr.rel (0) target = $region33
    $region32: #{tpu_custom_call.1} parent=1 // pred_region
      _
    $region33: #{tpu_custom_call.1} parent=1 // pred_fallthru
      _
    // Predicated region
    $region34: #{tpu_custom_call.1} parent=1 // pred_check
      _
    $region35: #{tpu_custom_call.1} parent=1 // pred_check_branch
      %82 = sbr.rel (0) target = $region37
    $region36: #{tpu_custom_call.1} parent=1 // pred_region
      _
    $region37: #{tpu_custom_call.1} parent=1 // pred_fallthru
      _
    // Predicated region
    $region38: #{tpu_custom_call.1} parent=1 // pred_check
      _
    $region39: #{tpu_custom_call.1} parent=1 // pred_check_branch
      %84 = sbr.rel (0) target = $region41
    $region40: #{tpu_custom_call.1} parent=1 // pred_region
      _
    $region41: #{tpu_custom_call.1} parent=1 // pred_fallthru
      _
    // Predicated region
    $region42: #{tpu_custom_call.1} parent=1 // pred_check
      _
    $region43: #{tpu_custom_call.1} parent=1 // pred_check_branch
      %86 = sbr.rel (0) target = $region45
    $region44: #{tpu_custom_call.1} parent=1 // pred_region
      _
    $region45: #{tpu_custom_call.1} parent=1 // pred_fallthru
      _
    // Predicated region
    $region46: #{tpu_custom_call.1} parent=1 // pred_check
      _
    $region47: #{tpu_custom_call.1} parent=1 // pred_check_branch
      %88 = sbr.rel (0) target = $region49
    $region48: #{tpu_custom_call.1} parent=1 // pred_region
      _
    $region49: #{tpu_custom_call.1} parent=1 // pred_fallthru
      _
    // Predicated region
    $region50: #{tpu_custom_call.1} parent=1 // pred_check
      _
    $region51: #{tpu_custom_call.1} parent=1 // pred_check_branch
      %90 = sbr.rel (0) target = $region53
    $region52: #{tpu_custom_call.1} parent=1 // pred_region
      _
    $region53: #{tpu_custom_call.1} parent=1 // pred_fallthru
      _
    // Predicated region
    $region54: #{tpu_custom_call.1} parent=1 // pred_check
      _
    $region55: #{tpu_custom_call.1} parent=1 // pred_check_branch
      %92 = sbr.rel (0) target = $region57
    $region56: #{tpu_custom_call.1} parent=1 // pred_region
      _
    $region57: #{tpu_custom_call.1} parent=1 // pred_fallthru
      _
    // Predicated region
    $region58: #{tpu_custom_call.1} parent=1 // pred_check
      _
    $region59: #{tpu_custom_call.1} parent=1 // pred_check_branch
      %94 = sbr.rel (0) target = $region61
    $region60: #{tpu_custom_call.1} parent=1 // pred_region
      _
    $region61: #{tpu_custom_call.1} parent=1 // pred_fallthru
      _
    // Predicated region
    $region62: #{tpu_custom_call.1} parent=1 // pred_check
      _
    $region63: #{tpu_custom_call.1} parent=1 // pred_check_branch
      %96 = sbr.rel (0) target = $region65
    $region64: #{tpu_custom_call.1} parent=1 // pred_region
      _
    $region65: #{tpu_custom_call.1} parent=1 // pred_fallthru
      _
    // Predicated region
    $region66: #{tpu_custom_call.1} parent=1 // pred_check
      _
    $region67: #{tpu_custom_call.1} parent=1 // pred_check_branch
      %98 = sbr.rel (0) target = $region69
    $region68: #{tpu_custom_call.1} parent=1 // pred_region
      _
    $region69: #{tpu_custom_call.1} parent=1 // pred_fallthru
      _
    // Predicated region
    $region70: #{tpu_custom_call.1} parent=1 // pred_check
      _
    $region71: #{tpu_custom_call.1} parent=1 // pred_check_branch
      %100 = sbr.rel (0) target = $region73
    $region72: #{tpu_custom_call.1} parent=1 // pred_region
      _
    $region73: #{tpu_custom_call.1} parent=1 // pred_fallthru
      _
    // Predicated region
    $region74: #{tpu_custom_call.1} parent=1 // pred_check
      _
    $region75: #{tpu_custom_call.1} parent=1 // pred_check_branch
      %102 = sbr.rel (0) target = $region77
    $region76: #{tpu_custom_call.1} parent=1 // pred_region
      _
    $region77: #{tpu_custom_call.1} parent=1 // pred_fallthru
      _
    // Predicated region
    $region78: #{tpu_custom_call.1} parent=1 // pred_check
      _
    $region79: #{tpu_custom_call.1} parent=1 // pred_check_branch
      %104 = sbr.rel (0) target = $region81
    $region80: #{tpu_custom_call.1} parent=1 // pred_region
      _
    $region81: #{tpu_custom_call.1} parent=1 // pred_fallthru
      _
    // Predicated region
    $region82: #{tpu_custom_call.1} parent=1 // pred_check
      _
    $region83: #{tpu_custom_call.1} parent=1 // pred_check_branch
      %106 = sbr.rel (0) target = $region85
    $region84: #{tpu_custom_call.1} parent=1 // pred_region
      _
    $region85: #{tpu_custom_call.1} parent=1 // pred_fallthru
      _
    // Predicated region
    $region86: #{tpu_custom_call.1} parent=1 // pred_check
      _
    $region87: #{tpu_custom_call.1} parent=1 // pred_check_branch
      %108 = sbr.rel (0) target = $region89
    $region88: #{tpu_custom_call.1} parent=1 // pred_region
      _
    $region89: #{tpu_custom_call.1} parent=1 // pred_fallthru
      _
    // Predicated region
    $region90: #{tpu_custom_call.1} parent=1 // pred_check
      _
    $region91: #{tpu_custom_call.1} parent=1 // pred_check_branch
      %110 = sbr.rel (0) target = $region93
    $region92: #{tpu_custom_call.1} parent=1 // pred_region
      _
    $region93: #{tpu_custom_call.1} parent=1 // pred_fallthru
      _
    // Predicated region
    $region94: #{tpu_custom_call.1} parent=1 // pred_check
      _
    $region95: #{tpu_custom_call.1} parent=1 // pred_check_branch
      %112 = sbr.rel (0) target = $region97
    $region96: #{tpu_custom_call.1} parent=1 // pred_region
      _
    $region97: #{tpu_custom_call.1} parent=1 // pred_fallthru
      _
    // Predicated region
    $region98: #{tpu_custom_call.1} parent=1 // pred_check
      _
    $region99: #{tpu_custom_call.1} parent=1 // pred_check_branch
      %114 = sbr.rel (0) target = $region101
    $region100: #{tpu_custom_call.1} parent=1 // pred_region
      _
    $region101: #{tpu_custom_call.1} parent=1 // pred_fallthru
      _
    // Predicated region
    $region102: #{tpu_custom_call.1} parent=1 // pred_check
      _
    $region103: #{tpu_custom_call.1} parent=1 // pred_check_branch
      %116 = sbr.rel (0) target = $region105
    $region104: #{tpu_custom_call.1} parent=1 // pred_region
      _
    $region105: #{tpu_custom_call.1} parent=1 // pred_fallthru
      _
    // Predicated region
    $region106: #{tpu_custom_call.1} parent=1 // pred_check
      _
    $region107: #{tpu_custom_call.1} parent=1 // pred_check_branch
      %118 = sbr.rel (0) target = $region109
    $region108: #{tpu_custom_call.1} parent=1 // pred_region
      _
    $region109: #{tpu_custom_call.1} parent=1 // pred_fallthru
      _
    // Predicated region
    $region110: #{tpu_custom_call.1} parent=1 // pred_check
      _
    $region111: #{tpu_custom_call.1} parent=1 // pred_check_branch
      %120 = sbr.rel (0) target = $region113
    $region112: #{tpu_custom_call.1} parent=1 // pred_region
      _
    $region113: #{tpu_custom_call.1} parent=1 // pred_fallthru
      _
    // Predicated region
    $region114: #{tpu_custom_call.1} parent=1 // pred_check
      _
    $region115: #{tpu_custom_call.1} parent=1 // pred_check_branch
      %122 = sbr.rel (0) target = $region117
    $region116: #{tpu_custom_call.1} parent=1 // pred_region
      _
    $region117: #{tpu_custom_call.1} parent=1 // pred_fallthru
      _
    %v124 = vld [vmem:[%s1] sm:$0xff]
    %v125 = vld [vmem:[%s1 + $0x8] sm:$0xff]
    %v126 = vlaneseq
    %v127 = vand.u32 %v126, 127
    %128 = vset.pattern.permute.xlu0 0
    %129 = vperm.xlu0 %128, %v124
    %v130 = vpop.permute.xlu0 %129
    %131 = vset.pattern.permute.xlu0 0
    %132 = vperm.xlu0 %131, %v125
    %v133 = vpop.permute.xlu0 %132
    %vm134 = vcmp.eq.s32.totalorder %v127, %v130
    %vm135 = vcmp.eq.s32.totalorder %v127, %v133
    %v136 = vsel %vm134, 1, 0
    %v137 = vsel %vm135, 1, 0
    %v138 = vcvt.s32.f32 %v136
    %v139 = vcvt.s32.f32 %v137
    %v140 = vld [vmem:[%s3] sm:$0xff]
    %v141 = vld [vmem:[%s3 + $0x8] sm:$0xff]
    %v142 = vld [vmem:[%s3 + $0x10] sm:$0xff]
    %v143 = vld [vmem:[%s3 + $0x18] sm:$0xff]
    %v144 = vld [vmem:[%s3 + $0x20] sm:$0xff]
    %v145 = vld [vmem:[%s3 + $0x28] sm:$0xff]
    %v146 = vld [vmem:[%s3 + $0x30] sm:$0x3]
    %v147 = vld [vmem:[%s5] sm:$0xff]
    %v148 = vld [vmem:[%s5 + $0x8] sm:$0xff]
    %vm149 = vcmask 408576
    %v151 = vsel %vm149, %v138, 0
    %v154 = vsel %vm149, %v139, 0
    %vm156 = vcmask 1041408
    %v158 = vsel %vm156, %v146, 0
    %160 = vmatprep.subr.mxu0 0.0
    %161 = vmatpush1.msra.mxu0 %v140
    %162 = vmatprep.subr.mxu0 0.0
    %163 = vmatpush1.msra.mxu0 %v141
    %164 = vmatprep.subr.mxu0 0.0
    %165 = vmatpush1.msra.mxu0 %v142
    %166 = vmatprep.subr.mxu0 0.0
    %167 = vmatpush1.msra.mxu0 %v143
    %168 = vmatprep.subr.mxu0 0.0
    %169 = vmatpush1.msra.mxu0 %v144
    %170 = vmatprep.subr.mxu0 0.0
    %171 = vmatpush1.msra.mxu0 %v145
    %172 = vmatprep.subr.mxu0 0.0
    %173 = vmatpush1.msra.mxu0 %v158
    %174 = vmatprep.subr.mxu0 0.0
    %175 = vmatpush1.msra.mxu0 0.0
    %176 = vmatprep.subr.mxu0 0.0
    %177 = vmatpush1.msra.mxu0 0.0
    %178 = vmatprep.subr.mxu0 0.0
    %179 = vmatpush1.msra.mxu0 0.0
    %180 = vmatprep.subr.mxu0 0.0
    %181 = vmatpush1.msra.mxu0 0.0
    %182 = vmatprep.subr.mxu0 0.0
    %183 = vmatpush1.msra.mxu0 0.0
    %184 = vmatprep.subr.mxu0 0.0
    %185 = vmatpush1.msra.mxu0 0.0
    %186 = vmatprep.subr.mxu0 0.0
    %187 = vmatpush1.msra.mxu0 0.0
    %188 = vmatprep.subr.mxu0 0.0
    %189 = vmatpush1.msra.mxu0 0.0
    %190 = vmatprep.subr.mxu0 0.0
    %191 = vmatpush1.msra.mxu0 0.0
    %192 = vmatprep.subr.mxu0 0.0
    %193 = vmatpush1.msra.mxu0 0.0
    %194 = vmatprep.subr.mxu0 0.0
    %195 = vmatpush1.msra.mxu0 0.0
    %196 = vmatprep.subr.mxu0 0.0
    %197 = vmatpush1.msra.mxu0 0.0
    %198 = vmatprep.subr.mxu0 0.0
    %199 = vmatpush1.msra.mxu0 0.0
    %200 = vmatprep.subr.mxu0 0.0
    %201 = vmatpush1.msra.mxu0 0.0
    %202 = vmatprep.subr.mxu0 0.0
    %203 = vmatpush1.msra.mxu0 0.0
    %204 = vmatprep.subr.mxu0 0.0
    %205 = vmatpush1.msra.mxu0 0.0
    %206 = vmatprep.subr.mxu0 0.0
    %207 = vmatpush1.msra.mxu0 0.0
    %208 = vmatprep.subr.mxu0 0.0
    %209 = vmatpush1.msra.mxu0 0.0
    %210 = vmatprep.subr.mxu0 0.0
    %211 = vmatpush1.msra.mxu0 0.0
    %212 = vmatprep.subr.mxu0 0.0
    %213 = vmatpush1.msra.mxu0 0.0
    %214 = vmatprep.subr.mxu0 0.0
    %215 = vmatpush1.msra.mxu0 0.0
    %216 = vmatprep.subr.mxu0 0.0
    %217 = vmatpush1.msra.mxu0 0.0
    %218 = vmatprep.subr.mxu0 0.0
    %219 = vmatpush1.msra.mxu0 0.0
    %220 = vmatprep.subr.mxu0 0.0
    %221 = vmatpush1.msra.mxu0 0.0
    %222 = vmatprep.subr.mxu0 0.0
    %223 = vmatpush1.msra.mxu0 0.0
    %224 = vmatprep.mubr.f32.mxu0 0.0
    %225 = vmatmul.mubr.f32.gmra.mrb[0].mxu0 %v151
    %v226 = vpop.f32.mrb[0].mxu0
    %v227 = vadd.f32 %v147, %v226
    %v228 = vpop.f32.mrb[0].mxu0
    %229 = vmatprep.mubr.f32.mxu0 0.0
    %230 = vmatmul.mubr.f32.gmra.mrb[0].mxu0 %v154
    %v231 = vpop.f32.mrb[0].mxu0
    %v232 = vadd.f32 %v148, %v231
    %v233 = vpop.f32.mrb[0].mxu0
    %234 = vdwg.mxu0
    %v235 = vlaneseq
    %v236 = vshrl.u32 %v235, 7
    %v237 = vcombine.low %v236, %v236
    %v239 = vunpack.c.l.s4 1983009808
    %v240 = vunpack.c.0.s8 %v239
    %v241 = vlaneseq
    %v242 = vshrl.u32 %v241, 7
    %v243 = vsub.s32 %v240, %v242
    %v244 = vrot.slane %v237, %v243
    %v245 = vcombine.low %v244, %v244
    %v247 = vunpack.c.l.s4 1934713408
    %v248 = vunpack.c.0.s8 %v247
    %v249 = vlaneseq
    %v250 = vshrl.u32 %v249, 7
    %v251 = vsub.s32 %v248, %v250
    %v252 = vrot.slane %v245, %v251
    %v253 = vcombine.low %v252, %v252
    %v254 = vcombine.high %v252, %v252
    %255 = vrot.lane.b32.xlu0 %v254, 8
    %v256 = vpop.permute.xlu0 %255
    %vm257 = vcmask 64512
    %v258 = vsel %vm257, %v253, %v256
    %vm259 = vcmp.eq.s32.totalorder %v258, 0
    %vm260 = vcmp.eq.s32.totalorder %v258, 1
    %v261 = vsel %vm259, 0.0, -1e+30
    %v262 = vsel %vm260, 0.0, -1e+30
    %v263 = vpack.c.bf16 %v232, %v227
    %v264 = vld [vmem:[%s7] sm:$0xff]
    %v265 = vld [vmem:[%s7 + $0x8] sm:$0xff]
    %v266 = vld [vmem:[%s7 + $0x10] sm:$0xff]
    %v267 = vld [vmem:[%s7 + $0x18] sm:$0xff]
    %v268 = vpack.c.bf16 %v265, %v264
    %v269 = vpack.c.bf16 %v267, %v266
    %v270 = vld [vmem:[%s9] sm:$0x1]
    %v272 = vlaneseq
    %v273 = vshrl.u32 %v272, 7
    %v274 = vsub.s32 0, %v273
    %v275 = vrot.slane %v270, %v274
    %vm277 = vcmask 261120
    %v279 = vsel %vm277, %v263, 0
    %281 = vmatprep.subr.bf16.mxu0 0
    %282 = vmatpush1.bf16.msra.mxu0 %v268
    %283 = vmatprep.subr.bf16.mxu0 0
    %284 = vmatpush1.bf16.msra.mxu0 %v269
    %285 = vmatprep.subr.bf16.mxu0 0
    %286 = vmatpush1.bf16.msra.mxu0 0
    %287 = vmatprep.subr.bf16.mxu0 0
    %288 = vmatpush1.bf16.msra.mxu0 0
    %289 = vmatprep.subr.bf16.mxu0 0
    %290 = vmatpush1.bf16.msra.mxu0 0
    %291 = vmatprep.subr.bf16.mxu0 0
    %292 = vmatpush1.bf16.msra.mxu0 0
    %293 = vmatprep.subr.bf16.mxu0 0
    %294 = vmatpush1.bf16.msra.mxu0 0
    %295 = vmatprep.subr.bf16.mxu0 0
    %296 = vmatpush1.bf16.msra.mxu0 0
    %297 = vmatprep.subr.bf16.mxu0 0
    %298 = vmatpush1.bf16.msra.mxu0 0
    %299 = vmatprep.subr.bf16.mxu0 0
    %300 = vmatpush1.bf16.msra.mxu0 0
    %301 = vmatprep.subr.bf16.mxu0 0
    %302 = vmatpush1.bf16.msra.mxu0 0
    %303 = vmatprep.subr.bf16.mxu0 0
    %304 = vmatpush1.bf16.msra.mxu0 0
    %305 = vmatprep.subr.bf16.mxu0 0
    %306 = vmatpush1.bf16.msra.mxu0 0
    %307 = vmatprep.subr.bf16.mxu0 0
    %308 = vmatpush1.bf16.msra.mxu0 0
    %309 = vmatprep.subr.bf16.mxu0 0
    %310 = vmatpush1.bf16.msra.mxu0 0
    %311 = vmatprep.subr.bf16.mxu0 0
    %312 = vmatpush1.bf16.msra.mxu0 0
    %313 = vmatprep.mubr.bf16.mxu0 0
    %314 = vmatmul.mubr.bf16.gmra.mrb[0].mxu0 %v279
    %v315 = vpop.f32.mrb[0].mxu0
    %v316 = vadd.f32 %v275, %v315
    %v317 = vpop.f32.mrb[0].mxu0
    %v318 = vpop.f32.mrb[0].mxu0
    %v319 = vadd.f32 %v275, %v318
    %v320 = vpop.f32.mrb[0].mxu0
    %321 = vdwg.mxu0
    %324 = vrot.lane.b32.xlu0 %v316, 120
    %v325 = vpop.permute.xlu0 %324
    %326 = vrot.lane.b32.xlu0 %v319, 120
    %v327 = vpop.permute.xlu0 %326
    %330 = vrot.lane.b32.xlu0 %v316, 112
    %v331 = vpop.permute.xlu0 %330
    %332 = vrot.lane.b32.xlu0 %v319, 112
    %v333 = vpop.permute.xlu0 %332
    %336 = vrot.lane.b32.xlu0 %v316, 104
    %v337 = vpop.permute.xlu0 %336
    %338 = vrot.lane.b32.xlu0 %v319, 104
    %v339 = vpop.permute.xlu0 %338
    %v342 = vcombine.low %v316, %v331
    %v343 = vcombine.high %v316, %v331
    %v345 = vunpack.c.l.s4 1983009808
    %v346 = vunpack.c.0.s8 %v345
    %v347 = vlaneseq
    %v348 = vshrl.u32 %v347, 7
    %v349 = vsub.s32 %v346, %v348
    %v350 = vrot.slane %v342, %v349
    %v352 = vunpack.c.l.s4 1983009808
    %v353 = vunpack.c.0.s8 %v352
    %v354 = vlaneseq
    %v355 = vshrl.u32 %v354, 7
    %v356 = vsub.s32 %v353, %v355
    %v357 = vrot.slane %v343, %v356
    %v358 = vcombine.low %v325, %v337
    %v359 = vcombine.high %v325, %v337
    %v361 = vunpack.c.l.s4 1983009808
    %v362 = vunpack.c.0.s8 %v361
    %v363 = vlaneseq
    %v364 = vshrl.u32 %v363, 7
    %v365 = vsub.s32 %v362, %v364
    %v366 = vrot.slane %v358, %v365
    %v368 = vunpack.c.l.s4 1983009808
    %v369 = vunpack.c.0.s8 %v368
    %v370 = vlaneseq
    %v371 = vshrl.u32 %v370, 7
    %v372 = vsub.s32 %v369, %v371
    %v373 = vrot.slane %v359, %v372
    %v374 = vcombine.low %v350, %v366
    %v375 = vcombine.high %v350, %v366
    %v377 = vunpack.c.l.s4 1934713408
    %v378 = vunpack.c.0.s8 %v377
    %v379 = vlaneseq
    %v380 = vshrl.u32 %v379, 7
    %v381 = vsub.s32 %v378, %v380
    %v382 = vrot.slane %v374, %v381
    %v384 = vunpack.c.l.s4 1934713408
    %v385 = vunpack.c.0.s8 %v384
    %v386 = vlaneseq
    %v387 = vshrl.u32 %v386, 7
    %v388 = vsub.s32 %v385, %v387
    %v389 = vrot.slane %v375, %v388
    %v390 = vcombine.low %v357, %v373
    %v391 = vcombine.high %v357, %v373
    %v393 = vunpack.c.l.s4 1934713408
    %v394 = vunpack.c.0.s8 %v393
    %v395 = vlaneseq
    %v396 = vshrl.u32 %v395, 7
    %v397 = vsub.s32 %v394, %v396
    %v398 = vrot.slane %v390, %v397
    %v400 = vunpack.c.l.s4 1934713408
    %v401 = vunpack.c.0.s8 %v400
    %v402 = vlaneseq
    %v403 = vshrl.u32 %v402, 7
    %v404 = vsub.s32 %v401, %v403
    %v405 = vrot.slane %v391, %v404
    %v406 = vcombine.high %v382, 0.0
    %v407 = vcombine.high %v389, 0.0
    %v408 = vcombine.high %v398, 0.0
    %v409 = vcombine.high %v405, 0.0
    %v410 = vcombine.low %v319, %v333
    %v411 = vcombine.high %v319, %v333
    %v413 = vunpack.c.l.s4 1983009808
    %v414 = vunpack.c.0.s8 %v413
    %v415 = vlaneseq
    %v416 = vshrl.u32 %v415, 7
    %v417 = vsub.s32 %v414, %v416
    %v418 = vrot.slane %v410, %v417
    %v420 = vunpack.c.l.s4 1983009808
    %v421 = vunpack.c.0.s8 %v420
    %v422 = vlaneseq
    %v423 = vshrl.u32 %v422, 7
    %v424 = vsub.s32 %v421, %v423
    %v425 = vrot.slane %v411, %v424
    %v426 = vcombine.low %v327, %v339
    %v427 = vcombine.high %v327, %v339
    %v429 = vunpack.c.l.s4 1983009808
    %v430 = vunpack.c.0.s8 %v429
    %v431 = vlaneseq
    %v432 = vshrl.u32 %v431, 7
    %v433 = vsub.s32 %v430, %v432
    %v434 = vrot.slane %v426, %v433
    %v436 = vunpack.c.l.s4 1983009808
    %v437 = vunpack.c.0.s8 %v436
    %v438 = vlaneseq
    %v439 = vshrl.u32 %v438, 7
    %v440 = vsub.s32 %v437, %v439
    %v441 = vrot.slane %v427, %v440
    %v442 = vcombine.low %v418, %v434
    %v443 = vcombine.high %v418, %v434
    %v445 = vunpack.c.l.s4 1934713408
    %v446 = vunpack.c.0.s8 %v445
    %v447 = vlaneseq
    %v448 = vshrl.u32 %v447, 7
    %v449 = vsub.s32 %v446, %v448
    %v450 = vrot.slane %v442, %v449
    %v452 = vunpack.c.l.s4 1934713408
    %v453 = vunpack.c.0.s8 %v452
    %v454 = vlaneseq
    %v455 = vshrl.u32 %v454, 7
    %v456 = vsub.s32 %v453, %v455
    %v457 = vrot.slane %v443, %v456
    %v458 = vcombine.low %v425, %v441
    %v459 = vcombine.high %v425, %v441
    %v461 = vunpack.c.l.s4 1934713408
    %v462 = vunpack.c.0.s8 %v461
    %v463 = vlaneseq
    %v464 = vshrl.u32 %v463, 7
    %v465 = vsub.s32 %v462, %v464
    %v466 = vrot.slane %v458, %v465
    %v468 = vunpack.c.l.s4 1934713408
    %v469 = vunpack.c.0.s8 %v468
    %v470 = vlaneseq
    %v471 = vshrl.u32 %v470, 7
    %v472 = vsub.s32 %v469, %v471
    %v473 = vrot.slane %v459, %v472
    %v474 = vcombine.high %v450, 0.0
    %v475 = vcombine.high %v457, 0.0
    %v476 = vcombine.high %v466, 0.0
    %v477 = vcombine.high %v473, 0.0
    %v478 = vcombine.low %v382, %v389
    %v480 = vunpack.c.l.s4 1983009808
    %v481 = vunpack.c.0.s8 %v480
    %v482 = vlaneseq
    %v483 = vshrl.u32 %v482, 7
    %v484 = vsub.s32 %v481, %v483
    %v485 = vrot.slane %v478, %v484
    %v486 = vcombine.low %v406, %v407
    %v488 = vunpack.c.l.s4 1983009808
    %v489 = vunpack.c.0.s8 %v488
    %v490 = vlaneseq
    %v491 = vshrl.u32 %v490, 7
    %v492 = vsub.s32 %v489, %v491
    %v493 = vrot.slane %v486, %v492
    %v494 = vcombine.low %v398, %v405
    %v496 = vunpack.c.l.s4 1983009808
    %v497 = vunpack.c.0.s8 %v496
    %v498 = vlaneseq
    %v499 = vshrl.u32 %v498, 7
    %v500 = vsub.s32 %v497, %v499
    %v501 = vrot.slane %v494, %v500
    %v502 = vcombine.low %v408, %v409
    %v504 = vunpack.c.l.s4 1983009808
    %v505 = vunpack.c.0.s8 %v504
    %v506 = vlaneseq
    %v507 = vshrl.u32 %v506, 7
    %v508 = vsub.s32 %v505, %v507
    %v509 = vrot.slane %v502, %v508
    %v510 = vcombine.low %v485, %v493
    %v511 = vcombine.high %v485, %v493
    %v513 = vunpack.c.l.s4 1934713408
    %v514 = vunpack.c.0.s8 %v513
    %v515 = vlaneseq
    %v516 = vshrl.u32 %v515, 7
    %v517 = vsub.s32 %v514, %v516
    %v518 = vrot.slane %v510, %v517
    %v520 = vunpack.c.l.s4 1934713408
    %v521 = vunpack.c.0.s8 %v520
    %v522 = vlaneseq
    %v523 = vshrl.u32 %v522, 7
    %v524 = vsub.s32 %v521, %v523
    %v525 = vrot.slane %v511, %v524
    %v526 = vcombine.low %v501, %v509
    %v527 = vcombine.high %v501, %v509
    %v529 = vunpack.c.l.s4 1934713408
    %v530 = vunpack.c.0.s8 %v529
    %v531 = vlaneseq
    %v532 = vshrl.u32 %v531, 7
    %v533 = vsub.s32 %v530, %v532
    %v534 = vrot.slane %v526, %v533
    %v536 = vunpack.c.l.s4 1934713408
    %v537 = vunpack.c.0.s8 %v536
    %v538 = vlaneseq
    %v539 = vshrl.u32 %v538, 7
    %v540 = vsub.s32 %v537, %v539
    %v541 = vrot.slane %v527, %v540
    %v542 = vcombine.low %v518, %v534
    %v543 = vcombine.high %v518, %v534
    %v544 = vcombine.low %v525, %v541
    %v545 = vcombine.high %v525, %v541
    %v546 = vcombine.low %v450, %v457
    %v548 = vunpack.c.l.s4 1983009808
    %v549 = vunpack.c.0.s8 %v548
    %v550 = vlaneseq
    %v551 = vshrl.u32 %v550, 7
    %v552 = vsub.s32 %v549, %v551
    %v553 = vrot.slane %v546, %v552
    %v554 = vcombine.low %v474, %v475
    %v556 = vunpack.c.l.s4 1983009808
    %v557 = vunpack.c.0.s8 %v556
    %v558 = vlaneseq
    %v559 = vshrl.u32 %v558, 7
    %v560 = vsub.s32 %v557, %v559
    %v561 = vrot.slane %v554, %v560
    %v562 = vcombine.low %v466, %v473
    %v564 = vunpack.c.l.s4 1983009808
    %v565 = vunpack.c.0.s8 %v564
    %v566 = vlaneseq
    %v567 = vshrl.u32 %v566, 7
    %v568 = vsub.s32 %v565, %v567
    %v569 = vrot.slane %v562, %v568
    %v570 = vcombine.low %v476, %v477
    %v572 = vunpack.c.l.s4 1983009808
    %v573 = vunpack.c.0.s8 %v572
    %v574 = vlaneseq
    %v575 = vshrl.u32 %v574, 7
    %v576 = vsub.s32 %v573, %v575
    %v577 = vrot.slane %v570, %v576
    %v578 = vcombine.low %v553, %v561
    %v579 = vcombine.high %v553, %v561
    %v581 = vunpack.c.l.s4 1934713408
    %v582 = vunpack.c.0.s8 %v581
    %v583 = vlaneseq
    %v584 = vshrl.u32 %v583, 7
    %v585 = vsub.s32 %v582, %v584
    %v586 = vrot.slane %v578, %v585
    %v588 = vunpack.c.l.s4 1934713408
    %v589 = vunpack.c.0.s8 %v588
    %v590 = vlaneseq
    %v591 = vshrl.u32 %v590, 7
    %v592 = vsub.s32 %v589, %v591
    %v593 = vrot.slane %v579, %v592
    %v594 = vcombine.low %v569, %v577
    %v595 = vcombine.high %v569, %v577
    %v597 = vunpack.c.l.s4 1934713408
    %v598 = vunpack.c.0.s8 %v597
    %v599 = vlaneseq
    %v600 = vshrl.u32 %v599, 7
    %v601 = vsub.s32 %v598, %v600
    %v602 = vrot.slane %v594, %v601
    %v604 = vunpack.c.l.s4 1934713408
    %v605 = vunpack.c.0.s8 %v604
    %v606 = vlaneseq
    %v607 = vshrl.u32 %v606, 7
    %v608 = vsub.s32 %v605, %v607
    %v609 = vrot.slane %v595, %v608
    %v610 = vcombine.low %v586, %v602
    %v611 = vcombine.high %v586, %v602
    %v612 = vcombine.low %v593, %v609
    %v613 = vcombine.high %v593, %v609
    %614 = vrot.lane.b32.xlu0 %v316, 96
    %v615 = vpop.permute.xlu0 %614
    %616 = vrot.lane.b32.xlu0 %v319, 96
    %v617 = vpop.permute.xlu0 %616
    %618 = vrot.lane.b32.xlu0 %v325, 96
    %v619 = vpop.permute.xlu0 %618
    %620 = vrot.lane.b32.xlu0 %v327, 96
    %v621 = vpop.permute.xlu0 %620
    %622 = vrot.lane.b32.xlu0 %v331, 96
    %v623 = vpop.permute.xlu0 %622
    %624 = vrot.lane.b32.xlu0 %v333, 96
    %v625 = vpop.permute.xlu0 %624
    %626 = vrot.lane.b32.xlu0 %v337, 96
    %v627 = vpop.permute.xlu0 %626
    %628 = vrot.lane.b32.xlu0 %v339, 96
    %v629 = vpop.permute.xlu0 %628
    %v638 = vcombine.low %v615, %v623
    %v639 = vcombine.high %v615, %v623
    %v641 = vunpack.c.l.s4 1983009808
    %v642 = vunpack.c.0.s8 %v641
    %v643 = vlaneseq
    %v644 = vshrl.u32 %v643, 7
    %v645 = vsub.s32 %v642, %v644
    %v646 = vrot.slane %v638, %v645
    %v648 = vunpack.c.l.s4 1983009808
    %v649 = vunpack.c.0.s8 %v648
    %v650 = vlaneseq
    %v651 = vshrl.u32 %v650, 7
    %v652 = vsub.s32 %v649, %v651
    %v653 = vrot.slane %v639, %v652
    %v654 = vcombine.low %v619, %v627
    %v655 = vcombine.high %v619, %v627
    %v657 = vunpack.c.l.s4 1983009808
    %v658 = vunpack.c.0.s8 %v657
    %v659 = vlaneseq
    %v660 = vshrl.u32 %v659, 7
    %v661 = vsub.s32 %v658, %v660
    %v662 = vrot.slane %v654, %v661
    %v664 = vunpack.c.l.s4 1983009808
    %v665 = vunpack.c.0.s8 %v664
    %v666 = vlaneseq
    %v667 = vshrl.u32 %v666, 7
    %v668 = vsub.s32 %v665, %v667
    %v669 = vrot.slane %v655, %v668
    %v670 = vcombine.low %v646, %v662
    %v671 = vcombine.high %v646, %v662
    %v673 = vunpack.c.l.s4 1934713408
    %v674 = vunpack.c.0.s8 %v673
    %v675 = vlaneseq
    %v676 = vshrl.u32 %v675, 7
    %v677 = vsub.s32 %v674, %v676
    %v678 = vrot.slane %v670, %v677
    %v680 = vunpack.c.l.s4 1934713408
    %v681 = vunpack.c.0.s8 %v680
    %v682 = vlaneseq
    %v683 = vshrl.u32 %v682, 7
    %v684 = vsub.s32 %v681, %v683
    %v685 = vrot.slane %v671, %v684
    %v686 = vcombine.low %v653, %v669
    %v687 = vcombine.high %v653, %v669
    %v689 = vunpack.c.l.s4 1934713408
    %v690 = vunpack.c.0.s8 %v689
    %v691 = vlaneseq
    %v692 = vshrl.u32 %v691, 7
    %v693 = vsub.s32 %v690, %v692
    %v694 = vrot.slane %v686, %v693
    %v696 = vunpack.c.l.s4 1934713408
    %v697 = vunpack.c.0.s8 %v696
    %v698 = vlaneseq
    %v699 = vshrl.u32 %v698, 7
    %v700 = vsub.s32 %v697, %v699
    %v701 = vrot.slane %v687, %v700
    %v702 = vcombine.high %v678, 0.0
    %v703 = vcombine.high %v685, 0.0
    %v704 = vcombine.high %v694, 0.0
    %v705 = vcombine.high %v701, 0.0
    %v706 = vcombine.low %v617, %v625
    %v707 = vcombine.high %v617, %v625
    %v709 = vunpack.c.l.s4 1983009808
    %v710 = vunpack.c.0.s8 %v709
    %v711 = vlaneseq
    %v712 = vshrl.u32 %v711, 7
    %v713 = vsub.s32 %v710, %v712
    %v714 = vrot.slane %v706, %v713
    %v716 = vunpack.c.l.s4 1983009808
    %v717 = vunpack.c.0.s8 %v716
    %v718 = vlaneseq
    %v719 = vshrl.u32 %v718, 7
    %v720 = vsub.s32 %v717, %v719
    %v721 = vrot.slane %v707, %v720
    %v722 = vcombine.low %v621, %v629
    %v723 = vcombine.high %v621, %v629
    %v725 = vunpack.c.l.s4 1983009808
    %v726 = vunpack.c.0.s8 %v725
    %v727 = vlaneseq
    %v728 = vshrl.u32 %v727, 7
    %v729 = vsub.s32 %v726, %v728
    %v730 = vrot.slane %v722, %v729
    %v732 = vunpack.c.l.s4 1983009808
    %v733 = vunpack.c.0.s8 %v732
    %v734 = vlaneseq
    %v735 = vshrl.u32 %v734, 7
    %v736 = vsub.s32 %v733, %v735
    %v737 = vrot.slane %v723, %v736
    %v738 = vcombine.low %v714, %v730
    %v739 = vcombine.high %v714, %v730
    %v741 = vunpack.c.l.s4 1934713408
    %v742 = vunpack.c.0.s8 %v741
    %v743 = vlaneseq
    %v744 = vshrl.u32 %v743, 7
    %v745 = vsub.s32 %v742, %v744
    %v746 = vrot.slane %v738, %v745
    %v748 = vunpack.c.l.s4 1934713408
    %v749 = vunpack.c.0.s8 %v748
    %v750 = vlaneseq
    %v751 = vshrl.u32 %v750, 7
    %v752 = vsub.s32 %v749, %v751
    %v753 = vrot.slane %v739, %v752
    %v754 = vcombine.low %v721, %v737
    %v755 = vcombine.high %v721, %v737
    %v757 = vunpack.c.l.s4 1934713408
    %v758 = vunpack.c.0.s8 %v757
    %v759 = vlaneseq
    %v760 = vshrl.u32 %v759, 7
    %v761 = vsub.s32 %v758, %v760
    %v762 = vrot.slane %v754, %v761
    %v764 = vunpack.c.l.s4 1934713408
    %v765 = vunpack.c.0.s8 %v764
    %v766 = vlaneseq
    %v767 = vshrl.u32 %v766, 7
    %v768 = vsub.s32 %v765, %v767
    %v769 = vrot.slane %v755, %v768
    %v770 = vcombine.high %v746, 0.0
    %v771 = vcombine.high %v753, 0.0
    %v772 = vcombine.high %v762, 0.0
    %v773 = vcombine.high %v769, 0.0
    %v774 = vcombine.low %v678, %v685
    %v776 = vunpack.c.l.s4 1983009808
    %v777 = vunpack.c.0.s8 %v776
    %v778 = vlaneseq
    %v779 = vshrl.u32 %v778, 7
    %v780 = vsub.s32 %v777, %v779
    %v781 = vrot.slane %v774, %v780
    %v782 = vcombine.low %v702, %v703
    %v784 = vunpack.c.l.s4 1983009808
    %v785 = vunpack.c.0.s8 %v784
    %v786 = vlaneseq
    %v787 = vshrl.u32 %v786, 7
    %v788 = vsub.s32 %v785, %v787
    %v789 = vrot.slane %v782, %v788
    %v790 = vcombine.low %v694, %v701
    %v792 = vunpack.c.l.s4 1983009808
    %v793 = vunpack.c.0.s8 %v792
    %v794 = vlaneseq
    %v795 = vshrl.u32 %v794, 7
    %v796 = vsub.s32 %v793, %v795
    %v797 = vrot.slane %v790, %v796
    %v798 = vcombine.low %v704, %v705
    %v800 = vunpack.c.l.s4 1983009808
    %v801 = vunpack.c.0.s8 %v800
    %v802 = vlaneseq
    %v803 = vshrl.u32 %v802, 7
    %v804 = vsub.s32 %v801, %v803
    %v805 = vrot.slane %v798, %v804
    %v806 = vcombine.low %v781, %v789
    %v807 = vcombine.high %v781, %v789
    %v809 = vunpack.c.l.s4 1934713408
    %v810 = vunpack.c.0.s8 %v809
    %v811 = vlaneseq
    %v812 = vshrl.u32 %v811, 7
    %v813 = vsub.s32 %v810, %v812
    %v814 = vrot.slane %v806, %v813
    %v816 = vunpack.c.l.s4 1934713408
    %v817 = vunpack.c.0.s8 %v816
    %v818 = vlaneseq
    %v819 = vshrl.u32 %v818, 7
    %v820 = vsub.s32 %v817, %v819
    %v821 = vrot.slane %v807, %v820
    %v822 = vcombine.low %v797, %v805
    %v823 = vcombine.high %v797, %v805
    %v825 = vunpack.c.l.s4 1934713408
    %v826 = vunpack.c.0.s8 %v825
    %v827 = vlaneseq
    %v828 = vshrl.u32 %v827, 7
    %v829 = vsub.s32 %v826, %v828
    %v830 = vrot.slane %v822, %v829
    %v832 = vunpack.c.l.s4 1934713408
    %v833 = vunpack.c.0.s8 %v832
    %v834 = vlaneseq
    %v835 = vshrl.u32 %v834, 7
    %v836 = vsub.s32 %v833, %v835
    %v837 = vrot.slane %v823, %v836
    %v838 = vcombine.low %v814, %v830
    %v839 = vcombine.high %v814, %v830
    %v840 = vcombine.low %v821, %v837
    %v841 = vcombine.high %v821, %v837
    %v842 = vcombine.low %v746, %v753
    %v844 = vunpack.c.l.s4 1983009808
    %v845 = vunpack.c.0.s8 %v844
    %v846 = vlaneseq
    %v847 = vshrl.u32 %v846, 7
    %v848 = vsub.s32 %v845, %v847
    %v849 = vrot.slane %v842, %v848
    %v850 = vcombine.low %v770, %v771
    %v852 = vunpack.c.l.s4 1983009808
    %v853 = vunpack.c.0.s8 %v852
    %v854 = vlaneseq
    %v855 = vshrl.u32 %v854, 7
    %v856 = vsub.s32 %v853, %v855
    %v857 = vrot.slane %v850, %v856
    %v858 = vcombine.low %v762, %v769
    %v860 = vunpack.c.l.s4 1983009808
    %v861 = vunpack.c.0.s8 %v860
    %v862 = vlaneseq
    %v863 = vshrl.u32 %v862, 7
    %v864 = vsub.s32 %v861, %v863
    %v865 = vrot.slane %v858, %v864
    %v866 = vcombine.low %v772, %v773
    %v868 = vunpack.c.l.s4 1983009808
    %v869 = vunpack.c.0.s8 %v868
    %v870 = vlaneseq
    %v871 = vshrl.u32 %v870, 7
    %v872 = vsub.s32 %v869, %v871
    %v873 = vrot.slane %v866, %v872
    %v874 = vcombine.low %v849, %v857
    %v875 = vcombine.high %v849, %v857
    %v877 = vunpack.c.l.s4 1934713408
    %v878 = vunpack.c.0.s8 %v877
    %v879 = vlaneseq
    %v880 = vshrl.u32 %v879, 7
    %v881 = vsub.s32 %v878, %v880
    %v882 = vrot.slane %v874, %v881
    %v884 = vunpack.c.l.s4 1934713408
    %v885 = vunpack.c.0.s8 %v884
    %v886 = vlaneseq
    %v887 = vshrl.u32 %v886, 7
    %v888 = vsub.s32 %v885, %v887
    %v889 = vrot.slane %v875, %v888
    %v890 = vcombine.low %v865, %v873
    %v891 = vcombine.high %v865, %v873
    %v893 = vunpack.c.l.s4 1934713408
    %v894 = vunpack.c.0.s8 %v893
    %v895 = vlaneseq
    %v896 = vshrl.u32 %v895, 7
    %v897 = vsub.s32 %v894, %v896
    %v898 = vrot.slane %v890, %v897
    %v900 = vunpack.c.l.s4 1934713408
    %v901 = vunpack.c.0.s8 %v900
    %v902 = vlaneseq
    %v903 = vshrl.u32 %v902, 7
    %v904 = vsub.s32 %v901, %v903
    %v905 = vrot.slane %v891, %v904
    %v906 = vcombine.low %v882, %v898
    %v907 = vcombine.high %v882, %v898
    %v908 = vcombine.low %v889, %v905
    %v909 = vcombine.high %v889, %v905
    %910 = vrot.lane.b32.xlu0 %v316, 64
    %v911 = vpop.permute.xlu0 %910
    %912 = vrot.lane.b32.xlu0 %v319, 64
    %v913 = vpop.permute.xlu0 %912
    %914 = vrot.lane.b32.xlu0 %v325, 64
    %v915 = vpop.permute.xlu0 %914
    %916 = vrot.lane.b32.xlu0 %v327, 64
    %v917 = vpop.permute.xlu0 %916
    %918 = vrot.lane.b32.xlu0 %v331, 64
    %v919 = vpop.permute.xlu0 %918
    %920 = vrot.lane.b32.xlu0 %v333, 64
    %v921 = vpop.permute.xlu0 %920
    %922 = vrot.lane.b32.xlu0 %v337, 64
    %v923 = vpop.permute.xlu0 %922
    %924 = vrot.lane.b32.xlu0 %v339, 64
    %v925 = vpop.permute.xlu0 %924
    %v934 = vcombine.low %v911, %v919
    %v935 = vcombine.high %v911, %v919
    %v937 = vunpack.c.l.s4 1983009808
    %v938 = vunpack.c.0.s8 %v937
    %v939 = vlaneseq
    %v940 = vshrl.u32 %v939, 7
    %v941 = vsub.s32 %v938, %v940
    %v942 = vrot.slane %v934, %v941
    %v944 = vunpack.c.l.s4 1983009808
    %v945 = vunpack.c.0.s8 %v944
    %v946 = vlaneseq
    %v947 = vshrl.u32 %v946, 7
    %v948 = vsub.s32 %v945, %v947
    %v949 = vrot.slane %v935, %v948
    %v950 = vcombine.low %v915, %v923
    %v951 = vcombine.high %v915, %v923
    %v953 = vunpack.c.l.s4 1983009808
    %v954 = vunpack.c.0.s8 %v953
    %v955 = vlaneseq
    %v956 = vshrl.u32 %v955, 7
    %v957 = vsub.s32 %v954, %v956
    %v958 = vrot.slane %v950, %v957
    %v960 = vunpack.c.l.s4 1983009808
    %v961 = vunpack.c.0.s8 %v960
    %v962 = vlaneseq
    %v963 = vshrl.u32 %v962, 7
    %v964 = vsub.s32 %v961, %v963
    %v965 = vrot.slane %v951, %v964
    %v966 = vcombine.low %v942, %v958
    %v967 = vcombine.high %v942, %v958
    %v969 = vunpack.c.l.s4 1934713408
    %v970 = vunpack.c.0.s8 %v969
    %v971 = vlaneseq
    %v972 = vshrl.u32 %v971, 7
    %v973 = vsub.s32 %v970, %v972
    %v974 = vrot.slane %v966, %v973
    %v976 = vunpack.c.l.s4 1934713408
    %v977 = vunpack.c.0.s8 %v976
    %v978 = vlaneseq
    %v979 = vshrl.u32 %v978, 7
    %v980 = vsub.s32 %v977, %v979
    %v981 = vrot.slane %v967, %v980
    %v982 = vcombine.low %v949, %v965
    %v983 = vcombine.high %v949, %v965
    %v985 = vunpack.c.l.s4 1934713408
    %v986 = vunpack.c.0.s8 %v985
    %v987 = vlaneseq
    %v988 = vshrl.u32 %v987, 7
    %v989 = vsub.s32 %v986, %v988
    %v990 = vrot.slane %v982, %v989
    %v992 = vunpack.c.l.s4 1934713408
    %v993 = vunpack.c.0.s8 %v992
    %v994 = vlaneseq
    %v995 = vshrl.u32 %v994, 7
    %v996 = vsub.s32 %v993, %v995
    %v997 = vrot.slane %v983, %v996
    %v998 = vcombine.high %v974, 0.0
    %v999 = vcombine.high %v981, 0.0
    %v1000 = vcombine.high %v990, 0.0
    %v1001 = vcombine.high %v997, 0.0
    %v1002 = vcombine.low %v913, %v921
    %v1003 = vcombine.high %v913, %v921
    %v1005 = vunpack.c.l.s4 1983009808
    %v1006 = vunpack.c.0.s8 %v1005
    %v1007 = vlaneseq
    %v1008 = vshrl.u32 %v1007, 7
    %v1009 = vsub.s32 %v1006, %v1008
    %v1010 = vrot.slane %v1002, %v1009
    %v1012 = vunpack.c.l.s4 1983009808
    %v1013 = vunpack.c.0.s8 %v1012
    %v1014 = vlaneseq
    %v1015 = vshrl.u32 %v1014, 7
    %v1016 = vsub.s32 %v1013, %v1015
    %v1017 = vrot.slane %v1003, %v1016
    %v1018 = vcombine.low %v917, %v925
    %v1019 = vcombine.high %v917, %v925
    %v1021 = vunpack.c.l.s4 1983009808
    %v1022 = vunpack.c.0.s8 %v1021
    %v1023 = vlaneseq
    %v1024 = vshrl.u32 %v1023, 7
    %v1025 = vsub.s32 %v1022, %v1024
    %v1026 = vrot.slane %v1018, %v1025
    %v1028 = vunpack.c.l.s4 1983009808
    %v1029 = vunpack.c.0.s8 %v1028
    %v1030 = vlaneseq
    %v1031 = vshrl.u32 %v1030, 7
    %v1032 = vsub.s32 %v1029, %v1031
    %v1033 = vrot.slane %v1019, %v1032
    %v1034 = vcombine.low %v1010, %v1026
    %v1035 = vcombine.high %v1010, %v1026
    %v1037 = vunpack.c.l.s4 1934713408
    %v1038 = vunpack.c.0.s8 %v1037
    %v1039 = vlaneseq
    %v1040 = vshrl.u32 %v1039, 7
    %v1041 = vsub.s32 %v1038, %v1040
    %v1042 = vrot.slane %v1034, %v1041
    %v1044 = vunpack.c.l.s4 1934713408
    %v1045 = vunpack.c.0.s8 %v1044
    %v1046 = vlaneseq
    %v1047 = vshrl.u32 %v1046, 7
    %v1048 = vsub.s32 %v1045, %v1047
    %v1049 = vrot.slane %v1035, %v1048
    %v1050 = vcombine.low %v1017, %v1033
    %v1051 = vcombine.high %v1017, %v1033
    %v1053 = vunpack.c.l.s4 1934713408
    %v1054 = vunpack.c.0.s8 %v1053
    %v1055 = vlaneseq
    %v1056 = vshrl.u32 %v1055, 7
    %v1057 = vsub.s32 %v1054, %v1056
    %v1058 = vrot.slane %v1050, %v1057
    %v1060 = vunpack.c.l.s4 1934713408
    %v1061 = vunpack.c.0.s8 %v1060
    %v1062 = vlaneseq
    %v1063 = vshrl.u32 %v1062, 7
    %v1064 = vsub.s32 %v1061, %v1063
    %v1065 = vrot.slane %v1051, %v1064
    %v1066 = vcombine.high %v1042, 0.0
    %v1067 = vcombine.high %v1049, 0.0
    %v1068 = vcombine.high %v1058, 0.0
    %v1069 = vcombine.high %v1065, 0.0
    %v1070 = vcombine.low %v974, %v981
    %v1072 = vunpack.c.l.s4 1983009808
    %v1073 = vunpack.c.0.s8 %v1072
    %v1074 = vlaneseq
    %v1075 = vshrl.u32 %v1074, 7
    %v1076 = vsub.s32 %v1073, %v1075
    %v1077 = vrot.slane %v1070, %v1076
    %v1078 = vcombine.low %v998, %v999
    %v1080 = vunpack.c.l.s4 1983009808
    %v1081 = vunpack.c.0.s8 %v1080
    %v1082 = vlaneseq
    %v1083 = vshrl.u32 %v1082, 7
    %v1084 = vsub.s32 %v1081, %v1083
    %v1085 = vrot.slane %v1078, %v1084
    %v1086 = vcombine.low %v990, %v997
    %v1088 = vunpack.c.l.s4 1983009808
    %v1089 = vunpack.c.0.s8 %v1088
    %v1090 = vlaneseq
    %v1091 = vshrl.u32 %v1090, 7
    %v1092 = vsub.s32 %v1089, %v1091
    %v1093 = vrot.slane %v1086, %v1092
    %v1094 = vcombine.low %v1000, %v1001
    %v1096 = vunpack.c.l.s4 1983009808
    %v1097 = vunpack.c.0.s8 %v1096
    %v1098 = vlaneseq
    %v1099 = vshrl.u32 %v1098, 7
    %v1100 = vsub.s32 %v1097, %v1099
    %v1101 = vrot.slane %v1094, %v1100
    %v1102 = vcombine.low %v1077, %v1085
    %v1103 = vcombine.high %v1077, %v1085
    %v1105 = vunpack.c.l.s4 1934713408
    %v1106 = vunpack.c.0.s8 %v1105
    %v1107 = vlaneseq
    %v1108 = vshrl.u32 %v1107, 7
    %v1109 = vsub.s32 %v1106, %v1108
    %v1110 = vrot.slane %v1102, %v1109
    %v1112 = vunpack.c.l.s4 1934713408
    %v1113 = vunpack.c.0.s8 %v1112
    %v1114 = vlaneseq
    %v1115 = vshrl.u32 %v1114, 7
    %v1116 = vsub.s32 %v1113, %v1115
    %v1117 = vrot.slane %v1103, %v1116
    %v1118 = vcombine.low %v1093, %v1101
    %v1119 = vcombine.high %v1093, %v1101
    %v1121 = vunpack.c.l.s4 1934713408
    %v1122 = vunpack.c.0.s8 %v1121
    %v1123 = vlaneseq
    %v1124 = vshrl.u32 %v1123, 7
    %v1125 = vsub.s32 %v1122, %v1124
    %v1126 = vrot.slane %v1118, %v1125
    %v1128 = vunpack.c.l.s4 1934713408
    %v1129 = vunpack.c.0.s8 %v1128
    %v1130 = vlaneseq
    %v1131 = vshrl.u32 %v1130, 7
    %v1132 = vsub.s32 %v1129, %v1131
    %v1133 = vrot.slane %v1119, %v1132
    %v1134 = vcombine.low %v1110, %v1126
    %v1135 = vcombine.high %v1110, %v1126
    %v1136 = vcombine.low %v1117, %v1133
    %v1137 = vcombine.high %v1117, %v1133
    %v1138 = vcombine.low %v1042, %v1049
    %v1140 = vunpack.c.l.s4 1983009808
    %v1141 = vunpack.c.0.s8 %v1140
    %v1142 = vlaneseq
    %v1143 = vshrl.u32 %v1142, 7
    %v1144 = vsub.s32 %v1141, %v1143
    %v1145 = vrot.slane %v1138, %v1144
    %v1146 = vcombine.low %v1066, %v1067
    %v1148 = vunpack.c.l.s4 1983009808
    %v1149 = vunpack.c.0.s8 %v1148
    %v1150 = vlaneseq
    %v1151 = vshrl.u32 %v1150, 7
    %v1152 = vsub.s32 %v1149, %v1151
    %v1153 = vrot.slane %v1146, %v1152
    %v1154 = vcombine.low %v1058, %v1065
    %v1156 = vunpack.c.l.s4 1983009808
    %v1157 = vunpack.c.0.s8 %v1156
    %v1158 = vlaneseq
    %v1159 = vshrl.u32 %v1158, 7
    %v1160 = vsub.s32 %v1157, %v1159
    %v1161 = vrot.slane %v1154, %v1160
    %v1162 = vcombine.low %v1068, %v1069
    %v1164 = vunpack.c.l.s4 1983009808
    %v1165 = vunpack.c.0.s8 %v1164
    %v1166 = vlaneseq
    %v1167 = vshrl.u32 %v1166, 7
    %v1168 = vsub.s32 %v1165, %v1167
    %v1169 = vrot.slane %v1162, %v1168
    %v1170 = vcombine.low %v1145, %v1153
    %v1171 = vcombine.high %v1145, %v1153
    %v1173 = vunpack.c.l.s4 1934713408
    %v1174 = vunpack.c.0.s8 %v1173
    %v1175 = vlaneseq
    %v1176 = vshrl.u32 %v1175, 7
    %v1177 = vsub.s32 %v1174, %v1176
    %v1178 = vrot.slane %v1170, %v1177
    %v1180 = vunpack.c.l.s4 1934713408
    %v1181 = vunpack.c.0.s8 %v1180
    %v1182 = vlaneseq
    %v1183 = vshrl.u32 %v1182, 7
    %v1184 = vsub.s32 %v1181, %v1183
    %v1185 = vrot.slane %v1171, %v1184
    %v1186 = vcombine.low %v1161, %v1169
    %v1187 = vcombine.high %v1161, %v1169
    %v1189 = vunpack.c.l.s4 1934713408
    %v1190 = vunpack.c.0.s8 %v1189
    %v1191 = vlaneseq
    %v1192 = vshrl.u32 %v1191, 7
    %v1193 = vsub.s32 %v1190, %v1192
    %v1194 = vrot.slane %v1186, %v1193
    %v1196 = vunpack.c.l.s4 1934713408
    %v1197 = vunpack.c.0.s8 %v1196
    %v1198 = vlaneseq
    %v1199 = vshrl.u32 %v1198, 7
    %v1200 = vsub.s32 %v1197, %v1199
    %v1201 = vrot.slane %v1187, %v1200
    %v1202 = vcombine.low %v1178, %v1194
    %v1203 = vcombine.high %v1178, %v1194
    %v1204 = vcombine.low %v1185, %v1201
    %v1205 = vcombine.high %v1185, %v1201
    %v1206 = vpack.c.bf16 %v610, %v542
    %v1207 = vpack.c.bf16 %v611, %v543
    %v1208 = vpack.c.bf16 %v612, %v544
    %v1209 = vpack.c.bf16 %v613, %v545
    %v1210 = vpack.c.bf16 %v906, %v838
    %v1211 = vpack.c.bf16 %v907, %v839
    %v1212 = vpack.c.bf16 %v908, %v840
    %v1213 = vpack.c.bf16 %v909, %v841
    %v1215 = vsel %vm257, %v1206, 0
    %v1218 = vsel %vm257, %v1210, 0
    %1220 = vmatprep.subr.bf16.mxu0 0
    %1221 = vmatpush1.bf16.xpose.msra.mxu0 %v1218
    %1222 = vmatprep.subr.bf16.mxu0 0
    %1223 = vmatpush1.bf16.xpose.msra.mxu0 0
    %1224 = vmatprep.subr.bf16.mxu0 0
    %1225 = vmatpush1.bf16.xpose.msra.mxu0 0
    %1226 = vmatprep.subr.bf16.mxu0 0
    %1227 = vmatpush1.bf16.xpose.msra.mxu0 0
    %1228 = vmatprep.subr.bf16.mxu0 0
    %1229 = vmatpush1.bf16.xpose.msra.mxu0 0
    %1230 = vmatprep.subr.bf16.mxu0 0
    %1231 = vmatpush1.bf16.xpose.msra.mxu0 0
    %1232 = vmatprep.subr.bf16.mxu0 0
    %1233 = vmatpush1.bf16.xpose.msra.mxu0 0
    %1234 = vmatprep.subr.bf16.mxu0 0
    %1235 = vmatpush1.bf16.xpose.msra.mxu0 0
    %1236 = vmatprep.subr.bf16.mxu0 0
    %1237 = vmatpush1.bf16.xpose.msra.mxu0 0
    %1238 = vmatprep.subr.bf16.mxu0 0
    %1239 = vmatpush1.bf16.xpose.msra.mxu0 0
    %1240 = vmatprep.subr.bf16.mxu0 0
    %1241 = vmatpush1.bf16.xpose.msra.mxu0 0
    %1242 = vmatprep.subr.bf16.mxu0 0
    %1243 = vmatpush1.bf16.xpose.msra.mxu0 0
    %1244 = vmatprep.subr.bf16.mxu0 0
    %1245 = vmatpush1.bf16.xpose.msra.mxu0 0
    %1246 = vmatprep.subr.bf16.mxu0 0
    %1247 = vmatpush1.bf16.xpose.msra.mxu0 0
    %1248 = vmatprep.subr.bf16.mxu0 0
    %1249 = vmatpush1.bf16.xpose.msra.mxu0 0
    %1250 = vmatprep.subr.bf16.mxu0 0
    %1251 = vmatpush1.bf16.xpose.msra.mxu0 0
    %1252 = vmatprep.mubr.bf16.mxu0 0
    %1253 = vmatmul.mubr.bf16.gmra.mrb[0].mxu0 %v1215
    %v1254 = vpop.f32.mrb[0].mxu0
    %v1255 = vadd.f32 %v261, %v1254
    %v1256 = vpop.f32.mrb[0].mxu0
    %v1257 = vpop.f32.mrb[0].mxu0
    %v1258 = vadd.f32 %v262, %v1257
    %v1259 = vpop.f32.mrb[0].mxu0
    %1260 = vdwg.mxu0
    %v1262 = vsel %vm257, %v1207, 0
    %v1265 = vsel %vm257, %v1211, 0
    %1267 = vmatprep.subr.bf16.mxu0 0
    %1268 = vmatpush1.bf16.xpose.msra.mxu0 %v1265
    %1269 = vmatprep.subr.bf16.mxu0 0
    %1270 = vmatpush1.bf16.xpose.msra.mxu0 0
    %1271 = vmatprep.subr.bf16.mxu0 0
    %1272 = vmatpush1.bf16.xpose.msra.mxu0 0
    %1273 = vmatprep.subr.bf16.mxu0 0
    %1274 = vmatpush1.bf16.xpose.msra.mxu0 0
    %1275 = vmatprep.subr.bf16.mxu0 0
    %1276 = vmatpush1.bf16.xpose.msra.mxu0 0
    %1277 = vmatprep.subr.bf16.mxu0 0
    %1278 = vmatpush1.bf16.xpose.msra.mxu0 0
    %1279 = vmatprep.subr.bf16.mxu0 0
    %1280 = vmatpush1.bf16.xpose.msra.mxu0 0
    %1281 = vmatprep.subr.bf16.mxu0 0
    %1282 = vmatpush1.bf16.xpose.msra.mxu0 0
    %1283 = vmatprep.subr.bf16.mxu0 0
    %1284 = vmatpush1.bf16.xpose.msra.mxu0 0
    %1285 = vmatprep.subr.bf16.mxu0 0
    %1286 = vmatpush1.bf16.xpose.msra.mxu0 0
    %1287 = vmatprep.subr.bf16.mxu0 0
    %1288 = vmatpush1.bf16.xpose.msra.mxu0 0
    %1289 = vmatprep.subr.bf16.mxu0 0
    %1290 = vmatpush1.bf16.xpose.msra.mxu0 0
    %1291 = vmatprep.subr.bf16.mxu0 0
    %1292 = vmatpush1.bf16.xpose.msra.mxu0 0
    %1293 = vmatprep.subr.bf16.mxu0 0
    %1294 = vmatpush1.bf16.xpose.msra.mxu0 0
    %1295 = vmatprep.subr.bf16.mxu0 0
    %1296 = vmatpush1.bf16.xpose.msra.mxu0 0
    %1297 = vmatprep.subr.bf16.mxu0 0
    %1298 = vmatpush1.bf16.xpose.msra.mxu0 0
    %1299 = vmatprep.mubr.bf16.mxu0 0
    %1300 = vmatmul.mubr.bf16.gmra.mrb[0].mxu0 %v1262
    %v1301 = vpop.f32.mrb[0].mxu0
    %v1302 = vadd.f32 %v261, %v1301
    %v1303 = vpop.f32.mrb[0].mxu0
    %v1304 = vpop.f32.mrb[0].mxu0
    %v1305 = vadd.f32 %v262, %v1304
    %v1306 = vpop.f32.mrb[0].mxu0
    %1307 = vdwg.mxu0
    %v1309 = vsel %vm257, %v1208, 0
    %v1312 = vsel %vm257, %v1212, 0
    %1314 = vmatprep.subr.bf16.mxu0 0
    %1315 = vmatpush1.bf16.xpose.msra.mxu0 %v1312
    %1316 = vmatprep.subr.bf16.mxu0 0
    %1317 = vmatpush1.bf16.xpose.msra.mxu0 0
    %1318 = vmatprep.subr.bf16.mxu0 0
    %1319 = vmatpush1.bf16.xpose.msra.mxu0 0
    %1320 = vmatprep.subr.bf16.mxu0 0
    %1321 = vmatpush1.bf16.xpose.msra.mxu0 0
    %1322 = vmatprep.subr.bf16.mxu0 0
    %1323 = vmatpush1.bf16.xpose.msra.mxu0 0
    %1324 = vmatprep.subr.bf16.mxu0 0
    %1325 = vmatpush1.bf16.xpose.msra.mxu0 0
    %1326 = vmatprep.subr.bf16.mxu0 0
    %1327 = vmatpush1.bf16.xpose.msra.mxu0 0
    %1328 = vmatprep.subr.bf16.mxu0 0
    %1329 = vmatpush1.bf16.xpose.msra.mxu0 0
    %1330 = vmatprep.subr.bf16.mxu0 0
    %1331 = vmatpush1.bf16.xpose.msra.mxu0 0
    %1332 = vmatprep.subr.bf16.mxu0 0
    %1333 = vmatpush1.bf16.xpose.msra.mxu0 0
    %1334 = vmatprep.subr.bf16.mxu0 0
    %1335 = vmatpush1.bf16.xpose.msra.mxu0 0
    %1336 = vmatprep.subr.bf16.mxu0 0
    %1337 = vmatpush1.bf16.xpose.msra.mxu0 0
    %1338 = vmatprep.subr.bf16.mxu0 0
    %1339 = vmatpush1.bf16.xpose.msra.mxu0 0
    %1340 = vmatprep.subr.bf16.mxu0 0
    %1341 = vmatpush1.bf16.xpose.msra.mxu0 0
    %1342 = vmatprep.subr.bf16.mxu0 0
    %1343 = vmatpush1.bf16.xpose.msra.mxu0 0
    %1344 = vmatprep.subr.bf16.mxu0 0
    %1345 = vmatpush1.bf16.xpose.msra.mxu0 0
    %1346 = vmatprep.mubr.bf16.mxu0 0
    %1347 = vmatmul.mubr.bf16.gmra.mrb[0].mxu0 %v1309
    %v1348 = vpop.f32.mrb[0].mxu0
    %v1349 = vadd.f32 %v261, %v1348
    %v1350 = vpop.f32.mrb[0].mxu0
    %v1351 = vpop.f32.mrb[0].mxu0
    %v1352 = vadd.f32 %v262, %v1351
    %v1353 = vpop.f32.mrb[0].mxu0
    %1354 = vdwg.mxu0
    %v1356 = vsel %vm257, %v1209, 0
    %v1359 = vsel %vm257, %v1213, 0
    %1361 = vmatprep.subr.bf16.mxu0 0
    %1362 = vmatpush1.bf16.xpose.msra.mxu0 %v1359
    %1363 = vmatprep.subr.bf16.mxu0 0
    %1364 = vmatpush1.bf16.xpose.msra.mxu0 0
    %1365 = vmatprep.subr.bf16.mxu0 0
    %1366 = vmatpush1.bf16.xpose.msra.mxu0 0
    %1367 = vmatprep.subr.bf16.mxu0 0
    %1368 = vmatpush1.bf16.xpose.msra.mxu0 0
    %1369 = vmatprep.subr.bf16.mxu0 0
    %1370 = vmatpush1.bf16.xpose.msra.mxu0 0
    %1371 = vmatprep.subr.bf16.mxu0 0
    %1372 = vmatpush1.bf16.xpose.msra.mxu0 0
    %1373 = vmatprep.subr.bf16.mxu0 0
    %1374 = vmatpush1.bf16.xpose.msra.mxu0 0
    %1375 = vmatprep.subr.bf16.mxu0 0
    %1376 = vmatpush1.bf16.xpose.msra.mxu0 0
    %1377 = vmatprep.subr.bf16.mxu0 0
    %1378 = vmatpush1.bf16.xpose.msra.mxu0 0
    %1379 = vmatprep.subr.bf16.mxu0 0
    %1380 = vmatpush1.bf16.xpose.msra.mxu0 0
    %1381 = vmatprep.subr.bf16.mxu0 0
    %1382 = vmatpush1.bf16.xpose.msra.mxu0 0
    %1383 = vmatprep.subr.bf16.mxu0 0
    %1384 = vmatpush1.bf16.xpose.msra.mxu0 0
    %1385 = vmatprep.subr.bf16.mxu0 0
    %1386 = vmatpush1.bf16.xpose.msra.mxu0 0
    %1387 = vmatprep.subr.bf16.mxu0 0
    %1388 = vmatpush1.bf16.xpose.msra.mxu0 0
    %1389 = vmatprep.subr.bf16.mxu0 0
    %1390 = vmatpush1.bf16.xpose.msra.mxu0 0
    %1391 = vmatprep.subr.bf16.mxu0 0
    %1392 = vmatpush1.bf16.xpose.msra.mxu0 0
    %1393 = vmatprep.mubr.bf16.mxu0 0
    %1394 = vmatmul.mubr.bf16.gmra.mrb[0].mxu0 %v1356
    %v1395 = vpop.f32.mrb[0].mxu0
    %v1396 = vadd.f32 %v261, %v1395
    %v1397 = vpop.f32.mrb[0].mxu0
    %v1398 = vpop.f32.mrb[0].mxu0
    %v1399 = vadd.f32 %v262, %v1398
    %v1400 = vpop.f32.mrb[0].mxu0
    %1401 = vdwg.mxu0
    %vm1402 = vcmask 130048
    %v1403 = vsel %vm1402, %v1255, -inf
    %1404 = vmax.xlane.f32.xlu0 %v1403
    %v1405 = vpop.xlane.xlu0 %1404
    %v1406 = vsel %vm1402, %v1258, -inf
    %1407 = vmax.xlane.f32.xlu0 %v1406
    %v1408 = vpop.xlane.xlu0 %1407
    %v1409 = vsel %vm1402, %v1302, -inf
    %1410 = vmax.xlane.f32.xlu0 %v1409
    %v1411 = vpop.xlane.xlu0 %1410
    %v1412 = vsel %vm1402, %v1305, -inf
    %1413 = vmax.xlane.f32.xlu0 %v1412
    %v1414 = vpop.xlane.xlu0 %1413
    %v1415 = vsel %vm1402, %v1349, -inf
    %1416 = vmax.xlane.f32.xlu0 %v1415
    %v1417 = vpop.xlane.xlu0 %1416
    %v1418 = vsel %vm1402, %v1352, -inf
    %1419 = vmax.xlane.f32.xlu0 %v1418
    %v1420 = vpop.xlane.xlu0 %1419
    %v1421 = vsel %vm1402, %v1396, -inf
    %1422 = vmax.xlane.f32.xlu0 %v1421
    %v1423 = vpop.xlane.xlu0 %1422
    %v1424 = vsel %vm1402, %v1399, -inf
    %1425 = vmax.xlane.f32.xlu0 %v1424
    %v1426 = vpop.xlane.xlu0 %1425
    %v1427 = vsub.f32 %v1255, %v1405
    %v1428 = vsub.f32 %v1258, %v1408
    %v1429 = vsub.f32 %v1302, %v1411
    %v1430 = vsub.f32 %v1305, %v1414
    %v1431 = vsub.f32 %v1349, %v1417
    %v1432 = vsub.f32 %v1352, %v1420
    %v1433 = vsub.f32 %v1396, %v1423
    %v1434 = vsub.f32 %v1399, %v1426
    %v1435 = vmul.f32 %v1427, 1.442695
    %v1436 = vpow.pop %v1435
    %v1437 = vmul.f32 %v1428, 1.442695
    %v1438 = vpow.pop %v1437
    %v1439 = vmul.f32 %v1429, 1.442695
    %v1440 = vpow.pop %v1439
    %v1441 = vmul.f32 %v1430, 1.442695
    %v1442 = vpow.pop %v1441
    %v1443 = vmul.f32 %v1431, 1.442695
    %v1444 = vpow.pop %v1443
    %v1445 = vmul.f32 %v1432, 1.442695
    %v1446 = vpow.pop %v1445
    %v1447 = vmul.f32 %v1433, 1.442695
    %v1448 = vpow.pop %v1447
    %v1449 = vmul.f32 %v1434, 1.442695
    %v1450 = vpow.pop %v1449
    %v1451 = vsel %vm1402, %v1436, 0.0
    %1452 = vadd.xlane.f32.xlu0 %v1451
    %v1453 = vpop.xlane.xlu0 %1452
    %v1454 = vsel %vm1402, %v1438, 0.0
    %1455 = vadd.xlane.f32.xlu0 %v1454
    %v1456 = vpop.xlane.xlu0 %1455
    %v1457 = vsel %vm1402, %v1440, 0.0
    %1458 = vadd.xlane.f32.xlu0 %v1457
    %v1459 = vpop.xlane.xlu0 %1458
    %v1460 = vsel %vm1402, %v1442, 0.0
    %1461 = vadd.xlane.f32.xlu0 %v1460
    %v1462 = vpop.xlane.xlu0 %1461
    %v1463 = vsel %vm1402, %v1444, 0.0
    %1464 = vadd.xlane.f32.xlu0 %v1463
    %v1465 = vpop.xlane.xlu0 %1464
    %v1466 = vsel %vm1402, %v1446, 0.0
    %1467 = vadd.xlane.f32.xlu0 %v1466
    %v1468 = vpop.xlane.xlu0 %1467
    %v1469 = vsel %vm1402, %v1448, 0.0
    %1470 = vadd.xlane.f32.xlu0 %v1469
    %v1471 = vpop.xlane.xlu0 %1470
    %v1472 = vsel %vm1402, %v1450, 0.0
    %1473 = vadd.xlane.f32.xlu0 %v1472
    %v1474 = vpop.xlane.xlu0 %1473
    %v1475 = vrcp.pop %v1453
    %v1476 = vrcp.pop %v1456
    %v1477 = vrcp.pop %v1459
    %v1478 = vrcp.pop %v1462
    %v1479 = vrcp.pop %v1465
    %v1480 = vrcp.pop %v1468
    %v1481 = vrcp.pop %v1471
    %v1482 = vrcp.pop %v1474
    %v1483 = vmul.f32 %v1436, %v1475
    %v1484 = vmul.f32 %v1438, %v1476
    %v1485 = vmul.f32 %v1440, %v1477
    %v1486 = vmul.f32 %v1442, %v1478
    %v1487 = vmul.f32 %v1444, %v1479
    %v1488 = vmul.f32 %v1446, %v1480
    %v1489 = vmul.f32 %v1448, %v1481
    %v1490 = vmul.f32 %v1450, %v1482
    %v1491 = vpack.c.bf16 %v1484, %v1483
    %v1492 = vpack.c.bf16 %v1486, %v1485
    %v1493 = vpack.c.bf16 %v1488, %v1487
    %v1494 = vpack.c.bf16 %v1490, %v1489
    %v1495 = vpack.c.bf16 %v1202, %v1134
    %v1496 = vpack.c.bf16 %v1203, %v1135
    %v1497 = vpack.c.bf16 %v1204, %v1136
    %v1498 = vpack.c.bf16 %v1205, %v1137
    %v1500 = vsel %vm1402, %v1491, 0
    %1502 = vmatprep.subr.bf16.mxu0 0
    %1503 = vmatpush1.bf16.msra.mxu0 %v1495
    %1504 = vmatprep.subr.bf16.mxu0 0
    %1505 = vmatpush1.bf16.msra.mxu0 0
    %1506 = vmatprep.subr.bf16.mxu0 0
    %1507 = vmatpush1.bf16.msra.mxu0 0
    %1508 = vmatprep.subr.bf16.mxu0 0
    %1509 = vmatpush1.bf16.msra.mxu0 0
    %1510 = vmatprep.subr.bf16.mxu0 0
    %1511 = vmatpush1.bf16.msra.mxu0 0
    %1512 = vmatprep.subr.bf16.mxu0 0
    %1513 = vmatpush1.bf16.msra.mxu0 0
    %1514 = vmatprep.subr.bf16.mxu0 0
    %1515 = vmatpush1.bf16.msra.mxu0 0
    %1516 = vmatprep.subr.bf16.mxu0 0
    %1517 = vmatpush1.bf16.msra.mxu0 0
    %1518 = vmatprep.subr.bf16.mxu0 0
    %1519 = vmatpush1.bf16.msra.mxu0 0
    %1520 = vmatprep.subr.bf16.mxu0 0
    %1521 = vmatpush1.bf16.msra.mxu0 0
    %1522 = vmatprep.subr.bf16.mxu0 0
    %1523 = vmatpush1.bf16.msra.mxu0 0
    %1524 = vmatprep.subr.bf16.mxu0 0
    %1525 = vmatpush1.bf16.msra.mxu0 0
    %1526 = vmatprep.subr.bf16.mxu0 0
    %1527 = vmatpush1.bf16.msra.mxu0 0
    %1528 = vmatprep.subr.bf16.mxu0 0
    %1529 = vmatpush1.bf16.msra.mxu0 0
    %1530 = vmatprep.subr.bf16.mxu0 0
    %1531 = vmatpush1.bf16.msra.mxu0 0
    %1532 = vmatprep.subr.bf16.mxu0 0
    %1533 = vmatpush1.bf16.msra.mxu0 0
    %1534 = vmatprep.mubr.bf16.mxu0 0
    %1535 = vmatmul.mubr.bf16.gmra.mrb[0].mxu0 %v1500
    %v1536 = vpop.f32.mrb[0].mxu0
    %v1537 = vadd.f32 0.0, %v1536
    %v1538 = vpop.f32.mrb[0].mxu0
    %v1539 = vpop.f32.mrb[0].mxu0
    %v1540 = vadd.f32 0.0, %v1539
    %v1541 = vpop.f32.mrb[0].mxu0
    %1542 = vdwg.mxu0
    %v1544 = vsel %vm1402, %v1492, 0
    %1546 = vmatprep.subr.bf16.mxu0 0
    %1547 = vmatpush1.bf16.msra.mxu0 %v1496
    %1548 = vmatprep.subr.bf16.mxu0 0
    %1549 = vmatpush1.bf16.msra.mxu0 0
    %1550 = vmatprep.subr.bf16.mxu0 0
    %1551 = vmatpush1.bf16.msra.mxu0 0
    %1552 = vmatprep.subr.bf16.mxu0 0
    %1553 = vmatpush1.bf16.msra.mxu0 0
    %1554 = vmatprep.subr.bf16.mxu0 0
    %1555 = vmatpush1.bf16.msra.mxu0 0
    %1556 = vmatprep.subr.bf16.mxu0 0
    %1557 = vmatpush1.bf16.msra.mxu0 0
    %1558 = vmatprep.subr.bf16.mxu0 0
    %1559 = vmatpush1.bf16.msra.mxu0 0
    %1560 = vmatprep.subr.bf16.mxu0 0
    %1561 = vmatpush1.bf16.msra.mxu0 0
    %1562 = vmatprep.subr.bf16.mxu0 0
    %1563 = vmatpush1.bf16.msra.mxu0 0
    %1564 = vmatprep.subr.bf16.mxu0 0
    %1565 = vmatpush1.bf16.msra.mxu0 0
    %1566 = vmatprep.subr.bf16.mxu0 0
    %1567 = vmatpush1.bf16.msra.mxu0 0
    %1568 = vmatprep.subr.bf16.mxu0 0
    %1569 = vmatpush1.bf16.msra.mxu0 0
    %1570 = vmatprep.subr.bf16.mxu0 0
    %1571 = vmatpush1.bf16.msra.mxu0 0
    %1572 = vmatprep.subr.bf16.mxu0 0
    %1573 = vmatpush1.bf16.msra.mxu0 0
    %1574 = vmatprep.subr.bf16.mxu0 0
    %1575 = vmatpush1.bf16.msra.mxu0 0
    %1576 = vmatprep.subr.bf16.mxu0 0
    %1577 = vmatpush1.bf16.msra.mxu0 0
    %1578 = vmatprep.mubr.bf16.mxu0 0
    %1579 = vmatmul.mubr.bf16.gmra.mrb[0].mxu0 %v1544
    %v1580 = vpop.f32.mrb[0].mxu0
    %v1581 = vadd.f32 0.0, %v1580
    %v1582 = vpop.f32.mrb[0].mxu0
    %v1583 = vpop.f32.mrb[0].mxu0
    %v1584 = vadd.f32 0.0, %v1583
    %v1585 = vpop.f32.mrb[0].mxu0
    %1586 = vdwg.mxu0
    %v1588 = vsel %vm1402, %v1493, 0
    %1590 = vmatprep.subr.bf16.mxu0 0
    %1591 = vmatpush1.bf16.msra.mxu0 %v1497
    %1592 = vmatprep.subr.bf16.mxu0 0
    %1593 = vmatpush1.bf16.msra.mxu0 0
    %1594 = vmatprep.subr.bf16.mxu0 0
    %1595 = vmatpush1.bf16.msra.mxu0 0
    %1596 = vmatprep.subr.bf16.mxu0 0
    %1597 = vmatpush1.bf16.msra.mxu0 0
    %1598 = vmatprep.subr.bf16.mxu0 0
    %1599 = vmatpush1.bf16.msra.mxu0 0
    %1600 = vmatprep.subr.bf16.mxu0 0
    %1601 = vmatpush1.bf16.msra.mxu0 0
    %1602 = vmatprep.subr.bf16.mxu0 0
    %1603 = vmatpush1.bf16.msra.mxu0 0
    %1604 = vmatprep.subr.bf16.mxu0 0
    %1605 = vmatpush1.bf16.msra.mxu0 0
    %1606 = vmatprep.subr.bf16.mxu0 0
    %1607 = vmatpush1.bf16.msra.mxu0 0
    %1608 = vmatprep.subr.bf16.mxu0 0
    %1609 = vmatpush1.bf16.msra.mxu0 0
    %1610 = vmatprep.subr.bf16.mxu0 0
    %1611 = vmatpush1.bf16.msra.mxu0 0
    %1612 = vmatprep.subr.bf16.mxu0 0
    %1613 = vmatpush1.bf16.msra.mxu0 0
    %1614 = vmatprep.subr.bf16.mxu0 0
    %1615 = vmatpush1.bf16.msra.mxu0 0
    %1616 = vmatprep.subr.bf16.mxu0 0
    %1617 = vmatpush1.bf16.msra.mxu0 0
    %1618 = vmatprep.subr.bf16.mxu0 0
    %1619 = vmatpush1.bf16.msra.mxu0 0
    %1620 = vmatprep.subr.bf16.mxu0 0
    %1621 = vmatpush1.bf16.msra.mxu0 0
    %1622 = vmatprep.mubr.bf16.mxu0 0
    %1623 = vmatmul.mubr.bf16.gmra.mrb[0].mxu0 %v1588
    %v1624 = vpop.f32.mrb[0].mxu0
    %v1625 = vadd.f32 0.0, %v1624
    %v1626 = vpop.f32.mrb[0].mxu0
    %v1627 = vpop.f32.mrb[0].mxu0
    %v1628 = vadd.f32 0.0, %v1627
    %v1629 = vpop.f32.mrb[0].mxu0
    %1630 = vdwg.mxu0
    %v1632 = vsel %vm1402, %v1494, 0
    %1634 = vmatprep.subr.bf16.mxu0 0
    %1635 = vmatpush1.bf16.msra.mxu0 %v1498
    %1636 = vmatprep.subr.bf16.mxu0 0
    %1637 = vmatpush1.bf16.msra.mxu0 0
    %1638 = vmatprep.subr.bf16.mxu0 0
    %1639 = vmatpush1.bf16.msra.mxu0 0
    %1640 = vmatprep.subr.bf16.mxu0 0
    %1641 = vmatpush1.bf16.msra.mxu0 0
    %1642 = vmatprep.subr.bf16.mxu0 0
    %1643 = vmatpush1.bf16.msra.mxu0 0
    %1644 = vmatprep.subr.bf16.mxu0 0
    %1645 = vmatpush1.bf16.msra.mxu0 0
    %1646 = vmatprep.subr.bf16.mxu0 0
    %1647 = vmatpush1.bf16.msra.mxu0 0
    %1648 = vmatprep.subr.bf16.mxu0 0
    %1649 = vmatpush1.bf16.msra.mxu0 0
    %1650 = vmatprep.subr.bf16.mxu0 0
    %1651 = vmatpush1.bf16.msra.mxu0 0
    %1652 = vmatprep.subr.bf16.mxu0 0
    %1653 = vmatpush1.bf16.msra.mxu0 0
    %1654 = vmatprep.subr.bf16.mxu0 0
    %1655 = vmatpush1.bf16.msra.mxu0 0
    %1656 = vmatprep.subr.bf16.mxu0 0
    %1657 = vmatpush1.bf16.msra.mxu0 0
    %1658 = vmatprep.subr.bf16.mxu0 0
    %1659 = vmatpush1.bf16.msra.mxu0 0
    %1660 = vmatprep.subr.bf16.mxu0 0
    %1661 = vmatpush1.bf16.msra.mxu0 0
    %1662 = vmatprep.subr.bf16.mxu0 0
    %1663 = vmatpush1.bf16.msra.mxu0 0
    %1664 = vmatprep.subr.bf16.mxu0 0
    %1665 = vmatpush1.bf16.msra.mxu0 0
    %1666 = vmatprep.mubr.bf16.mxu0 0
    %1667 = vmatmul.mubr.bf16.gmra.mrb[0].mxu0 %v1632
    %v1668 = vpop.f32.mrb[0].mxu0
    %v1669 = vadd.f32 0.0, %v1668
    %v1670 = vpop.f32.mrb[0].mxu0
    %v1671 = vpop.f32.mrb[0].mxu0
    %v1672 = vadd.f32 0.0, %v1671
    %v1673 = vpop.f32.mrb[0].mxu0
    %1674 = vdwg.mxu0
    %v1675 = vcombine.low %v1537, %v1625
    %v1676 = vcombine.high %v1537, %v1625
    %v1678 = vunpack.c.l.s4 1983009808
    %v1679 = vunpack.c.0.s8 %v1678
    %v1680 = vlaneseq
    %v1681 = vshrl.u32 %v1680, 7
    %v1682 = vsub.s32 %v1679, %v1681
    %v1683 = vrot.slane %v1675, %v1682
    %v1685 = vunpack.c.l.s4 1983009808
    %v1686 = vunpack.c.0.s8 %v1685
    %v1687 = vlaneseq
    %v1688 = vshrl.u32 %v1687, 7
    %v1689 = vsub.s32 %v1686, %v1688
    %v1690 = vrot.slane %v1676, %v1689
    %v1691 = vcombine.low %v1581, %v1669
    %v1692 = vcombine.high %v1581, %v1669
    %v1694 = vunpack.c.l.s4 1983009808
    %v1695 = vunpack.c.0.s8 %v1694
    %v1696 = vlaneseq
    %v1697 = vshrl.u32 %v1696, 7
    %v1698 = vsub.s32 %v1695, %v1697
    %v1699 = vrot.slane %v1691, %v1698
    %v1701 = vunpack.c.l.s4 1983009808
    %v1702 = vunpack.c.0.s8 %v1701
    %v1703 = vlaneseq
    %v1704 = vshrl.u32 %v1703, 7
    %v1705 = vsub.s32 %v1702, %v1704
    %v1706 = vrot.slane %v1692, %v1705
    %v1707 = vcombine.low %v1683, %v1699
    %v1708 = vcombine.high %v1683, %v1699
    %v1710 = vunpack.c.l.s4 1934713408
    %v1711 = vunpack.c.0.s8 %v1710
    %v1712 = vlaneseq
    %v1713 = vshrl.u32 %v1712, 7
    %v1714 = vsub.s32 %v1711, %v1713
    %v1715 = vrot.slane %v1707, %v1714
    %v1717 = vunpack.c.l.s4 1934713408
    %v1718 = vunpack.c.0.s8 %v1717
    %v1719 = vlaneseq
    %v1720 = vshrl.u32 %v1719, 7
    %v1721 = vsub.s32 %v1718, %v1720
    %v1722 = vrot.slane %v1708, %v1721
    %v1723 = vcombine.low %v1690, %v1706
    %v1724 = vcombine.high %v1690, %v1706
    %v1726 = vunpack.c.l.s4 1934713408
    %v1727 = vunpack.c.0.s8 %v1726
    %v1728 = vlaneseq
    %v1729 = vshrl.u32 %v1728, 7
    %v1730 = vsub.s32 %v1727, %v1729
    %v1731 = vrot.slane %v1723, %v1730
    %v1733 = vunpack.c.l.s4 1934713408
    %v1734 = vunpack.c.0.s8 %v1733
    %v1735 = vlaneseq
    %v1736 = vshrl.u32 %v1735, 7
    %v1737 = vsub.s32 %v1734, %v1736
    %v1738 = vrot.slane %v1724, %v1737
    %v1739 = vcombine.high %v1715, 0.0
    %v1740 = vcombine.high %v1722, 0.0
    %v1741 = vcombine.high %v1731, 0.0
    %v1742 = vcombine.high %v1738, 0.0
    %v1743 = vcombine.low %v1540, %v1628
    %v1744 = vcombine.high %v1540, %v1628
    %v1746 = vunpack.c.l.s4 1983009808
    %v1747 = vunpack.c.0.s8 %v1746
    %v1748 = vlaneseq
    %v1749 = vshrl.u32 %v1748, 7
    %v1750 = vsub.s32 %v1747, %v1749
    %v1751 = vrot.slane %v1743, %v1750
    %v1753 = vunpack.c.l.s4 1983009808
    %v1754 = vunpack.c.0.s8 %v1753
    %v1755 = vlaneseq
    %v1756 = vshrl.u32 %v1755, 7
    %v1757 = vsub.s32 %v1754, %v1756
    %v1758 = vrot.slane %v1744, %v1757
    %v1759 = vcombine.low %v1584, %v1672
    %v1760 = vcombine.high %v1584, %v1672
    %v1762 = vunpack.c.l.s4 1983009808
    %v1763 = vunpack.c.0.s8 %v1762
    %v1764 = vlaneseq
    %v1765 = vshrl.u32 %v1764, 7
    %v1766 = vsub.s32 %v1763, %v1765
    %v1767 = vrot.slane %v1759, %v1766
    %v1769 = vunpack.c.l.s4 1983009808
    %v1770 = vunpack.c.0.s8 %v1769
    %v1771 = vlaneseq
    %v1772 = vshrl.u32 %v1771, 7
    %v1773 = vsub.s32 %v1770, %v1772
    %v1774 = vrot.slane %v1760, %v1773
    %v1775 = vcombine.low %v1751, %v1767
    %v1776 = vcombine.high %v1751, %v1767
    %v1778 = vunpack.c.l.s4 1934713408
    %v1779 = vunpack.c.0.s8 %v1778
    %v1780 = vlaneseq
    %v1781 = vshrl.u32 %v1780, 7
    %v1782 = vsub.s32 %v1779, %v1781
    %v1783 = vrot.slane %v1775, %v1782
    %v1785 = vunpack.c.l.s4 1934713408
    %v1786 = vunpack.c.0.s8 %v1785
    %v1787 = vlaneseq
    %v1788 = vshrl.u32 %v1787, 7
    %v1789 = vsub.s32 %v1786, %v1788
    %v1790 = vrot.slane %v1776, %v1789
    %v1791 = vcombine.low %v1758, %v1774
    %v1792 = vcombine.high %v1758, %v1774
    %v1794 = vunpack.c.l.s4 1934713408
    %v1795 = vunpack.c.0.s8 %v1794
    %v1796 = vlaneseq
    %v1797 = vshrl.u32 %v1796, 7
    %v1798 = vsub.s32 %v1795, %v1797
    %v1799 = vrot.slane %v1791, %v1798
    %v1801 = vunpack.c.l.s4 1934713408
    %v1802 = vunpack.c.0.s8 %v1801
    %v1803 = vlaneseq
    %v1804 = vshrl.u32 %v1803, 7
    %v1805 = vsub.s32 %v1802, %v1804
    %v1806 = vrot.slane %v1792, %v1805
    %v1807 = vcombine.high %v1783, 0.0
    %v1808 = vcombine.high %v1790, 0.0
    %v1809 = vcombine.high %v1799, 0.0
    %v1810 = vcombine.high %v1806, 0.0
    %v1811 = vcombine.low %v1715, %v1722
    %v1813 = vunpack.c.l.s4 1983009808
    %v1814 = vunpack.c.0.s8 %v1813
    %v1815 = vlaneseq
    %v1816 = vshrl.u32 %v1815, 7
    %v1817 = vsub.s32 %v1814, %v1816
    %v1818 = vrot.slane %v1811, %v1817
    %v1819 = vcombine.low %v1739, %v1740
    %v1821 = vunpack.c.l.s4 1983009808
    %v1822 = vunpack.c.0.s8 %v1821
    %v1823 = vlaneseq
    %v1824 = vshrl.u32 %v1823, 7
    %v1825 = vsub.s32 %v1822, %v1824
    %v1826 = vrot.slane %v1819, %v1825
    %v1827 = vcombine.low %v1731, %v1738
    %v1829 = vunpack.c.l.s4 1983009808
    %v1830 = vunpack.c.0.s8 %v1829
    %v1831 = vlaneseq
    %v1832 = vshrl.u32 %v1831, 7
    %v1833 = vsub.s32 %v1830, %v1832
    %v1834 = vrot.slane %v1827, %v1833
    %v1835 = vcombine.low %v1741, %v1742
    %v1837 = vunpack.c.l.s4 1983009808
    %v1838 = vunpack.c.0.s8 %v1837
    %v1839 = vlaneseq
    %v1840 = vshrl.u32 %v1839, 7
    %v1841 = vsub.s32 %v1838, %v1840
    %v1842 = vrot.slane %v1835, %v1841
    %v1843 = vcombine.low %v1818, %v1826
    %v1844 = vcombine.high %v1818, %v1826
    %v1846 = vunpack.c.l.s4 1934713408
    %v1847 = vunpack.c.0.s8 %v1846
    %v1848 = vlaneseq
    %v1849 = vshrl.u32 %v1848, 7
    %v1850 = vsub.s32 %v1847, %v1849
    %v1851 = vrot.slane %v1843, %v1850
    %v1853 = vunpack.c.l.s4 1934713408
    %v1854 = vunpack.c.0.s8 %v1853
    %v1855 = vlaneseq
    %v1856 = vshrl.u32 %v1855, 7
    %v1857 = vsub.s32 %v1854, %v1856
    %v1858 = vrot.slane %v1844, %v1857
    %v1859 = vcombine.low %v1834, %v1842
    %v1860 = vcombine.high %v1834, %v1842
    %v1862 = vunpack.c.l.s4 1934713408
    %v1863 = vunpack.c.0.s8 %v1862
    %v1864 = vlaneseq
    %v1865 = vshrl.u32 %v1864, 7
    %v1866 = vsub.s32 %v1863, %v1865
    %v1867 = vrot.slane %v1859, %v1866
    %v1869 = vunpack.c.l.s4 1934713408
    %v1870 = vunpack.c.0.s8 %v1869
    %v1871 = vlaneseq
    %v1872 = vshrl.u32 %v1871, 7
    %v1873 = vsub.s32 %v1870, %v1872
    %v1874 = vrot.slane %v1860, %v1873
    %v1875 = vcombine.low %v1851, %v1867
    %v1876 = vcombine.high %v1851, %v1867
    %v1877 = vcombine.low %v1858, %v1874
    %v1878 = vcombine.high %v1858, %v1874
    %v1879 = vcombine.low %v1783, %v1790
    %v1881 = vunpack.c.l.s4 1983009808
    %v1882 = vunpack.c.0.s8 %v1881
    %v1883 = vlaneseq
    %v1884 = vshrl.u32 %v1883, 7
    %v1885 = vsub.s32 %v1882, %v1884
    %v1886 = vrot.slane %v1879, %v1885
    %v1887 = vcombine.low %v1807, %v1808
    %v1889 = vunpack.c.l.s4 1983009808
    %v1890 = vunpack.c.0.s8 %v1889
    %v1891 = vlaneseq
    %v1892 = vshrl.u32 %v1891, 7
    %v1893 = vsub.s32 %v1890, %v1892
    %v1894 = vrot.slane %v1887, %v1893
    %v1895 = vcombine.low %v1799, %v1806
    %v1897 = vunpack.c.l.s4 1983009808
    %v1898 = vunpack.c.0.s8 %v1897
    %v1899 = vlaneseq
    %v1900 = vshrl.u32 %v1899, 7
    %v1901 = vsub.s32 %v1898, %v1900
    %v1902 = vrot.slane %v1895, %v1901
    %v1903 = vcombine.low %v1809, %v1810
    %v1905 = vunpack.c.l.s4 1983009808
    %v1906 = vunpack.c.0.s8 %v1905
    %v1907 = vlaneseq
    %v1908 = vshrl.u32 %v1907, 7
    %v1909 = vsub.s32 %v1906, %v1908
    %v1910 = vrot.slane %v1903, %v1909
    %v1911 = vcombine.low %v1886, %v1894
    %v1912 = vcombine.high %v1886, %v1894
    %v1914 = vunpack.c.l.s4 1934713408
    %v1915 = vunpack.c.0.s8 %v1914
    %v1916 = vlaneseq
    %v1917 = vshrl.u32 %v1916, 7
    %v1918 = vsub.s32 %v1915, %v1917
    %v1919 = vrot.slane %v1911, %v1918
    %v1921 = vunpack.c.l.s4 1934713408
    %v1922 = vunpack.c.0.s8 %v1921
    %v1923 = vlaneseq
    %v1924 = vshrl.u32 %v1923, 7
    %v1925 = vsub.s32 %v1922, %v1924
    %v1926 = vrot.slane %v1912, %v1925
    %v1927 = vcombine.low %v1902, %v1910
    %v1928 = vcombine.high %v1902, %v1910
    %v1930 = vunpack.c.l.s4 1934713408
    %v1931 = vunpack.c.0.s8 %v1930
    %v1932 = vlaneseq
    %v1933 = vshrl.u32 %v1932, 7
    %v1934 = vsub.s32 %v1931, %v1933
    %v1935 = vrot.slane %v1927, %v1934
    %v1937 = vunpack.c.l.s4 1934713408
    %v1938 = vunpack.c.0.s8 %v1937
    %v1939 = vlaneseq
    %v1940 = vshrl.u32 %v1939, 7
    %v1941 = vsub.s32 %v1938, %v1940
    %v1942 = vrot.slane %v1928, %v1941
    %v1943 = vcombine.low %v1919, %v1935
    %v1944 = vcombine.high %v1919, %v1935
    %v1945 = vcombine.low %v1926, %v1942
    %v1946 = vcombine.high %v1926, %v1942
    %1949 = vrot.lane.b32.xlu0 %v1876, 8
    %v1950 = vpop.permute.xlu0 %1949
    %1951 = vrot.lane.b32.xlu0 %v1944, 8
    %v1952 = vpop.permute.xlu0 %1951
    %1957 = vrot.lane.b32.xlu0 %v1877, 16
    %v1958 = vpop.permute.xlu0 %1957
    %1959 = vrot.lane.b32.xlu0 %v1945, 16
    %v1960 = vpop.permute.xlu0 %1959
    %1965 = vrot.lane.b32.xlu0 %v1878, 24
    %v1966 = vpop.permute.xlu0 %1965
    %1967 = vrot.lane.b32.xlu0 %v1946, 24
    %v1968 = vpop.permute.xlu0 %1967
    %v1971 = vsel %vm257, %v1875, %v1950
    %v1972 = vsel %vm257, %v1943, %v1952
    %v1973 = vsel %vm1402, %v1971, %v1958
    %v1974 = vsel %vm1402, %v1972, %v1960
    %vm1975 = vcmask 195584
    %v1976 = vsel %vm1975, %v1973, %v1966
    %v1977 = vsel %vm1975, %v1974, %v1968
    %v1978 = vpack.c.bf16 %v1977, %v1976
    %v1979 = vld [vmem:[%s11] sm:$0xff]
    %v1980 = vld [vmem:[%s11 + $0x8] sm:$0xff]
    %v1981 = vld [vmem:[%s11 + $0x10] sm:$0xff]
    %v1982 = vld [vmem:[%s11 + $0x18] sm:$0xff]
    %v1983 = vpack.c.bf16 %v1980, %v1979
    %v1984 = vpack.c.bf16 %v1982, %v1981
    %v1985 = vld [vmem:[%s13] sm:$0x1]
    %v1987 = vlaneseq
    %v1988 = vshrl.u32 %v1987, 7
    %v1989 = vsub.s32 0, %v1988
    %v1990 = vrot.slane %v1985, %v1989
    %v1993 = vsel %vm277, %v1978, 0
    %1995 = vmatprep.subr.bf16.mxu0 0
    %1996 = vmatpush1.bf16.msra.mxu0 %v1983
    %1997 = vmatprep.subr.bf16.mxu0 0
    %1998 = vmatpush1.bf16.msra.mxu0 %v1984
    %1999 = vmatprep.subr.bf16.mxu0 0
    %2000 = vmatpush1.bf16.msra.mxu0 0
    %2001 = vmatprep.subr.bf16.mxu0 0
    %2002 = vmatpush1.bf16.msra.mxu0 0
    %2003 = vmatprep.subr.bf16.mxu0 0
    %2004 = vmatpush1.bf16.msra.mxu0 0
    %2005 = vmatprep.subr.bf16.mxu0 0
    %2006 = vmatpush1.bf16.msra.mxu0 0
    %2007 = vmatprep.subr.bf16.mxu0 0
    %2008 = vmatpush1.bf16.msra.mxu0 0
    %2009 = vmatprep.subr.bf16.mxu0 0
    %2010 = vmatpush1.bf16.msra.mxu0 0
    %2011 = vmatprep.subr.bf16.mxu0 0
    %2012 = vmatpush1.bf16.msra.mxu0 0
    %2013 = vmatprep.subr.bf16.mxu0 0
    %2014 = vmatpush1.bf16.msra.mxu0 0
    %2015 = vmatprep.subr.bf16.mxu0 0
    %2016 = vmatpush1.bf16.msra.mxu0 0
    %2017 = vmatprep.subr.bf16.mxu0 0
    %2018 = vmatpush1.bf16.msra.mxu0 0
    %2019 = vmatprep.subr.bf16.mxu0 0
    %2020 = vmatpush1.bf16.msra.mxu0 0
    %2021 = vmatprep.subr.bf16.mxu0 0
    %2022 = vmatpush1.bf16.msra.mxu0 0
    %2023 = vmatprep.subr.bf16.mxu0 0
    %2024 = vmatpush1.bf16.msra.mxu0 0
    %2025 = vmatprep.subr.bf16.mxu0 0
    %2026 = vmatpush1.bf16.msra.mxu0 0
    %2027 = vmatprep.mubr.bf16.mxu0 0
    %2028 = vmatmul.mubr.bf16.gmra.mrb[0].mxu0 %v1993
    %v2029 = vpop.f32.mrb[0].mxu0
    %v2030 = vadd.f32 %v1990, %v2029
    %v2031 = vpop.f32.mrb[0].mxu0
    %v2032 = vpop.f32.mrb[0].mxu0
    %v2033 = vadd.f32 %v1990, %v2032
    %v2034 = vpop.f32.mrb[0].mxu0
    %2035 = vdwg.mxu0
    %v2036 = vadd.f32 %v2030, %v227
    %v2037 = vadd.f32 %v2033, %v232
    %v2038 = vsel %vm277, %v2036, 0.0
    %2039 = vadd.xlane.f32.xlu0 %v2038
    %v2040 = vpop.xlane.xlu0 %2039
    %v2041 = vsel %vm277, %v2037, 0.0
    %2042 = vadd.xlane.f32.xlu0 %v2041
    %v2043 = vpop.xlane.xlu0 %2042
    %v2044 = vrcp.pop 32.0
    %v2045 = vmul.f32 %v2040, %v2044
    %v2046 = vmul.f32 %v2043, %v2044
    %v2047 = vmul.f32 %v2036, %v2036
    %v2048 = vmul.f32 %v2037, %v2037
    %v2049 = vsel %vm277, %v2047, 0.0
    %2050 = vadd.xlane.f32.xlu0 %v2049
    %v2051 = vpop.xlane.xlu0 %2050
    %v2052 = vsel %vm277, %v2048, 0.0
    %2053 = vadd.xlane.f32.xlu0 %v2052
    %v2054 = vpop.xlane.xlu0 %2053
    %v2055 = vmul.f32 %v2051, %v2044
    %v2056 = vmul.f32 %v2054, %v2044
    %v2057 = vmul.f32 %v2045, %v2045
    %v2058 = vmul.f32 %v2046, %v2046
    %v2059 = vsub.f32 %v2055, %v2057
    %v2060 = vsub.f32 %v2056, %v2058
    %v2061 = vadd.f32 %v2059, 1e-05
    %v2062 = vadd.f32 %v2060, 1e-05
    %v2063 = vrsqrt.pop %v2061
    %v2064 = vrsqrt.pop %v2062
    %v2065 = vsub.f32 %v2036, %v2045
    %v2066 = vsub.f32 %v2037, %v2046
    %v2067 = vmul.f32 %v2065, %v2063
    %v2068 = vmul.f32 %v2066, %v2064
    %v2069 = vld [vmem:[%s15] sm:$0x1]
    %v2071 = vlaneseq
    %v2072 = vshrl.u32 %v2071, 7
    %v2073 = vsub.s32 0, %v2072
    %v2074 = vrot.slane %v2069, %v2073
    %v2076 = vmul.f32 %v2067, %v2074
    %v2077 = vmul.f32 %v2068, %v2074
    %v2078 = vld [vmem:[%s17] sm:$0x1]
    %v2080 = vlaneseq
    %v2081 = vshrl.u32 %v2080, 7
    %v2082 = vsub.s32 0, %v2081
    %v2083 = vrot.slane %v2078, %v2082
    %v2085 = vadd.f32 %v2076, %v2083
    %v2086 = vadd.f32 %v2077, %v2083
    %v2087 = vpack.c.bf16 %v2086, %v2085
    %v2088 = vld [vmem:[%s19] sm:$0xff]
    %v2089 = vld [vmem:[%s19 + $0x8] sm:$0xff]
    %v2090 = vld [vmem:[%s19 + $0x10] sm:$0xff]
    %v2091 = vld [vmem:[%s19 + $0x18] sm:$0xff]
    %v2092 = vpack.c.bf16 %v2089, %v2088
    %v2093 = vpack.c.bf16 %v2091, %v2090
    %v2094 = vld [vmem:[%s21] sm:$0x1]
    %v2096 = vlaneseq
    %v2097 = vshrl.u32 %v2096, 7
    %v2098 = vsub.s32 0, %v2097
    %v2099 = vrot.slane %v2094, %v2098
    %v2102 = vsel %vm277, %v2087, 0
    %2104 = vmatprep.subr.bf16.mxu0 0
    %2105 = vmatpush1.bf16.msra.mxu0 %v2092
    %2106 = vmatprep.subr.bf16.mxu0 0
    %2107 = vmatpush1.bf16.msra.mxu0 %v2093
    %2108 = vmatprep.subr.bf16.mxu0 0
    %2109 = vmatpush1.bf16.msra.mxu0 0
    %2110 = vmatprep.subr.bf16.mxu0 0
    %2111 = vmatpush1.bf16.msra.mxu0 0
    %2112 = vmatprep.subr.bf16.mxu0 0
    %2113 = vmatpush1.bf16.msra.mxu0 0
    %2114 = vmatprep.subr.bf16.mxu0 0
    %2115 = vmatpush1.bf16.msra.mxu0 0
    %2116 = vmatprep.subr.bf16.mxu0 0
    %2117 = vmatpush1.bf16.msra.mxu0 0
    %2118 = vmatprep.subr.bf16.mxu0 0
    %2119 = vmatpush1.bf16.msra.mxu0 0
    %2120 = vmatprep.subr.bf16.mxu0 0
    %2121 = vmatpush1.bf16.msra.mxu0 0
    %2122 = vmatprep.subr.bf16.mxu0 0
    %2123 = vmatpush1.bf16.msra.mxu0 0
    %2124 = vmatprep.subr.bf16.mxu0 0
    %2125 = vmatpush1.bf16.msra.mxu0 0
    %2126 = vmatprep.subr.bf16.mxu0 0
    %2127 = vmatpush1.bf16.msra.mxu0 0
    %2128 = vmatprep.subr.bf16.mxu0 0
    %2129 = vmatpush1.bf16.msra.mxu0 0
    %2130 = vmatprep.subr.bf16.mxu0 0
    %2131 = vmatpush1.bf16.msra.mxu0 0
    %2132 = vmatprep.subr.bf16.mxu0 0
    %2133 = vmatpush1.bf16.msra.mxu0 0
    %2134 = vmatprep.subr.bf16.mxu0 0
    %2135 = vmatpush1.bf16.msra.mxu0 0
    %2136 = vmatprep.mubr.bf16.mxu0 0
    %2137 = vmatmul.mubr.bf16.gmra.mrb[0].mxu0 %v2102
    %v2138 = vpop.f32.mrb[0].mxu0
    %v2139 = vadd.f32 %v2099, %v2138
    %v2140 = vpop.f32.mrb[0].mxu0
    %v2141 = vpop.f32.mrb[0].mxu0
    %v2142 = vadd.f32 %v2099, %v2141
    %v2143 = vpop.f32.mrb[0].mxu0
    %2144 = vdwg.mxu0
    %v2145 = vmax.f32 %v2139, 0.0
    %v2146 = vmax.f32 %v2142, 0.0
    %v2147 = vpack.c.bf16 %v2146, %v2145
    %v2148 = vld [vmem:[%s23] sm:$0xff]
    %v2149 = vld [vmem:[%s23 + $0x8] sm:$0xff]
    %v2150 = vld [vmem:[%s23 + $0x10] sm:$0xff]
    %v2151 = vld [vmem:[%s23 + $0x18] sm:$0xff]
    %v2152 = vld [vmem:[%s23 + $0x20] sm:$0xff]
    %v2153 = vld [vmem:[%s23 + $0x28] sm:$0xff]
    %v2154 = vld [vmem:[%s23 + $0x30] sm:$0xff]
    %v2155 = vld [vmem:[%s23 + $0x38] sm:$0xff]
    %v2156 = vpack.c.bf16 %v2149, %v2148
    %v2157 = vpack.c.bf16 %v2151, %v2150
    %v2158 = vpack.c.bf16 %v2153, %v2152
    %v2159 = vpack.c.bf16 %v2155, %v2154
    %v2160 = vld [vmem:[%s25] sm:$0x1]
    %v2162 = vlaneseq
    %v2163 = vshrl.u32 %v2162, 7
    %v2164 = vsub.s32 0, %v2163
    %v2165 = vrot.slane %v2160, %v2164
    %vm2167 = vcmask 523264
    %v2169 = vsel %vm2167, %v2147, 0
    %2171 = vmatprep.subr.bf16.mxu0 0
    %2172 = vmatpush1.bf16.msra.mxu0 %v2156
    %2173 = vmatprep.subr.bf16.mxu0 0
    %2174 = vmatpush1.bf16.msra.mxu0 %v2157
    %2175 = vmatprep.subr.bf16.mxu0 0
    %2176 = vmatpush1.bf16.msra.mxu0 %v2158
    %2177 = vmatprep.subr.bf16.mxu0 0
    %2178 = vmatpush1.bf16.msra.mxu0 %v2159
    %2179 = vmatprep.subr.bf16.mxu0 0
    %2180 = vmatpush1.bf16.msra.mxu0 0
    %2181 = vmatprep.subr.bf16.mxu0 0
    %2182 = vmatpush1.bf16.msra.mxu0 0
    %2183 = vmatprep.subr.bf16.mxu0 0
    %2184 = vmatpush1.bf16.msra.mxu0 0
    %2185 = vmatprep.subr.bf16.mxu0 0
    %2186 = vmatpush1.bf16.msra.mxu0 0
    %2187 = vmatprep.subr.bf16.mxu0 0
    %2188 = vmatpush1.bf16.msra.mxu0 0
    %2189 = vmatprep.subr.bf16.mxu0 0
    %2190 = vmatpush1.bf16.msra.mxu0 0
    %2191 = vmatprep.subr.bf16.mxu0 0
    %2192 = vmatpush1.bf16.msra.mxu0 0
    %2193 = vmatprep.subr.bf16.mxu0 0
    %2194 = vmatpush1.bf16.msra.mxu0 0
    %2195 = vmatprep.subr.bf16.mxu0 0
    %2196 = vmatpush1.bf16.msra.mxu0 0
    %2197 = vmatprep.subr.bf16.mxu0 0
    %2198 = vmatpush1.bf16.msra.mxu0 0
    %2199 = vmatprep.subr.bf16.mxu0 0
    %2200 = vmatpush1.bf16.msra.mxu0 0
    %2201 = vmatprep.subr.bf16.mxu0 0
    %2202 = vmatpush1.bf16.msra.mxu0 0
    %2203 = vmatprep.mubr.bf16.mxu0 0
    %2204 = vmatmul.mubr.bf16.gmra.mrb[0].mxu0 %v2169
    %v2205 = vpop.f32.mrb[0].mxu0
    %v2206 = vadd.f32 %v2165, %v2205
    %v2207 = vpop.f32.mrb[0].mxu0
    %v2208 = vpop.f32.mrb[0].mxu0
    %v2209 = vadd.f32 %v2165, %v2208
    %v2210 = vpop.f32.mrb[0].mxu0
    %2211 = vdwg.mxu0
    %v2212 = vadd.f32 %v2206, %v2085
    %v2213 = vadd.f32 %v2209, %v2086
    %v2214 = vsel %vm277, %v2212, 0.0
    %2215 = vadd.xlane.f32.xlu0 %v2214
    %v2216 = vpop.xlane.xlu0 %2215
    %v2217 = vsel %vm277, %v2213, 0.0
    %2218 = vadd.xlane.f32.xlu0 %v2217
    %v2219 = vpop.xlane.xlu0 %2218
    %v2220 = vmul.f32 %v2216, %v2044
    %v2221 = vmul.f32 %v2219, %v2044
    %v2222 = vmul.f32 %v2212, %v2212
    %v2223 = vmul.f32 %v2213, %v2213
    %v2224 = vsel %vm277, %v2222, 0.0
    %2225 = vadd.xlane.f32.xlu0 %v2224
    %v2226 = vpop.xlane.xlu0 %2225
    %v2227 = vsel %vm277, %v2223, 0.0
    %2228 = vadd.xlane.f32.xlu0 %v2227
    %v2229 = vpop.xlane.xlu0 %2228
    %v2230 = vmul.f32 %v2226, %v2044
    %v2231 = vmul.f32 %v2229, %v2044
    %v2232 = vmul.f32 %v2220, %v2220
    %v2233 = vmul.f32 %v2221, %v2221
    %v2234 = vsub.f32 %v2230, %v2232
    %v2235 = vsub.f32 %v2231, %v2233
    %v2236 = vadd.f32 %v2234, 1e-05
    %v2237 = vadd.f32 %v2235, 1e-05
    %v2238 = vrsqrt.pop %v2236
    %v2239 = vrsqrt.pop %v2237
    %v2240 = vsub.f32 %v2212, %v2220
    %v2241 = vsub.f32 %v2213, %v2221
    %v2242 = vmul.f32 %v2240, %v2238
    %v2243 = vmul.f32 %v2241, %v2239
    %v2244 = vld [vmem:[%s27] sm:$0x1]
    %v2246 = vlaneseq
    %v2247 = vshrl.u32 %v2246, 7
    %v2248 = vsub.s32 0, %v2247
    %v2249 = vrot.slane %v2244, %v2248
    %v2251 = vmul.f32 %v2242, %v2249
    %v2252 = vmul.f32 %v2243, %v2249
    %v2253 = vld [vmem:[%s29] sm:$0x1]
    %v2255 = vlaneseq
    %v2256 = vshrl.u32 %v2255, 7
    %v2257 = vsub.s32 0, %v2256
    %v2258 = vrot.slane %v2253, %v2257
    %v2260 = vadd.f32 %v2251, %v2258
    %v2261 = vadd.f32 %v2252, %v2258
    %v2262 = vpack.c.bf16 %v2261, %v2260
    %v2263 = vld [vmem:[%s31] sm:$0xff]
    %v2264 = vld [vmem:[%s31 + $0x8] sm:$0xff]
    %v2265 = vld [vmem:[%s31 + $0x10] sm:$0xff]
    %v2266 = vld [vmem:[%s31 + $0x18] sm:$0xff]
    %v2267 = vpack.c.bf16 %v2264, %v2263
    %v2268 = vpack.c.bf16 %v2266, %v2265
    %v2269 = vld [vmem:[%s33] sm:$0x1]
    %v2271 = vlaneseq
    %v2272 = vshrl.u32 %v2271, 7
    %v2273 = vsub.s32 0, %v2272
    %v2274 = vrot.slane %v2269, %v2273
    %v2277 = vsel %vm277, %v2262, 0
    %2279 = vmatprep.subr.bf16.mxu0 0
    %2280 = vmatpush1.bf16.msra.mxu0 %v2267
    %2281 = vmatprep.subr.bf16.mxu0 0
    %2282 = vmatpush1.bf16.msra.mxu0 %v2268
    %2283 = vmatprep.subr.bf16.mxu0 0
    %2284 = vmatpush1.bf16.msra.mxu0 0
    %2285 = vmatprep.subr.bf16.mxu0 0
    %2286 = vmatpush1.bf16.msra.mxu0 0
    %2287 = vmatprep.subr.bf16.mxu0 0
    %2288 = vmatpush1.bf16.msra.mxu0 0
    %2289 = vmatprep.subr.bf16.mxu0 0
    %2290 = vmatpush1.bf16.msra.mxu0 0
    %2291 = vmatprep.subr.bf16.mxu0 0
    %2292 = vmatpush1.bf16.msra.mxu0 0
    %2293 = vmatprep.subr.bf16.mxu0 0
    %2294 = vmatpush1.bf16.msra.mxu0 0
    %2295 = vmatprep.subr.bf16.mxu0 0
    %2296 = vmatpush1.bf16.msra.mxu0 0
    %2297 = vmatprep.subr.bf16.mxu0 0
    %2298 = vmatpush1.bf16.msra.mxu0 0
    %2299 = vmatprep.subr.bf16.mxu0 0
    %2300 = vmatpush1.bf16.msra.mxu0 0
    %2301 = vmatprep.subr.bf16.mxu0 0
    %2302 = vmatpush1.bf16.msra.mxu0 0
    %2303 = vmatprep.subr.bf16.mxu0 0
    %2304 = vmatpush1.bf16.msra.mxu0 0
    %2305 = vmatprep.subr.bf16.mxu0 0
    %2306 = vmatpush1.bf16.msra.mxu0 0
    %2307 = vmatprep.subr.bf16.mxu0 0
    %2308 = vmatpush1.bf16.msra.mxu0 0
    %2309 = vmatprep.subr.bf16.mxu0 0
    %2310 = vmatpush1.bf16.msra.mxu0 0
    %2311 = vmatprep.mubr.bf16.mxu0 0
    %2312 = vmatmul.mubr.bf16.gmra.mrb[0].mxu0 %v2277
    %v2313 = vpop.f32.mrb[0].mxu0
    %v2314 = vadd.f32 %v2274, %v2313
    %v2315 = vpop.f32.mrb[0].mxu0
    %v2316 = vpop.f32.mrb[0].mxu0
    %v2317 = vadd.f32 %v2274, %v2316
    %v2318 = vpop.f32.mrb[0].mxu0
    %2319 = vdwg.mxu0
    %2322 = vrot.lane.b32.xlu0 %v2314, 120
    %v2323 = vpop.permute.xlu0 %2322
    %2324 = vrot.lane.b32.xlu0 %v2317, 120
    %v2325 = vpop.permute.xlu0 %2324
    %2328 = vrot.lane.b32.xlu0 %v2314, 112
    %v2329 = vpop.permute.xlu0 %2328
    %2330 = vrot.lane.b32.xlu0 %v2317, 112
    %v2331 = vpop.permute.xlu0 %2330
    %2334 = vrot.lane.b32.xlu0 %v2314, 104
    %v2335 = vpop.permute.xlu0 %2334
    %2336 = vrot.lane.b32.xlu0 %v2317, 104
    %v2337 = vpop.permute.xlu0 %2336
    %v2340 = vcombine.low %v2314, %v2329
    %v2341 = vcombine.high %v2314, %v2329
    %v2343 = vunpack.c.l.s4 1983009808
    %v2344 = vunpack.c.0.s8 %v2343
    %v2345 = vlaneseq
    %v2346 = vshrl.u32 %v2345, 7
    %v2347 = vsub.s32 %v2344, %v2346
    %v2348 = vrot.slane %v2340, %v2347
    %v2350 = vunpack.c.l.s4 1983009808
    %v2351 = vunpack.c.0.s8 %v2350
    %v2352 = vlaneseq
    %v2353 = vshrl.u32 %v2352, 7
    %v2354 = vsub.s32 %v2351, %v2353
    %v2355 = vrot.slane %v2341, %v2354
    %v2356 = vcombine.low %v2323, %v2335
    %v2357 = vcombine.high %v2323, %v2335
    %v2359 = vunpack.c.l.s4 1983009808
    %v2360 = vunpack.c.0.s8 %v2359
    %v2361 = vlaneseq
    %v2362 = vshrl.u32 %v2361, 7
    %v2363 = vsub.s32 %v2360, %v2362
    %v2364 = vrot.slane %v2356, %v2363
    %v2366 = vunpack.c.l.s4 1983009808
    %v2367 = vunpack.c.0.s8 %v2366
    %v2368 = vlaneseq
    %v2369 = vshrl.u32 %v2368, 7
    %v2370 = vsub.s32 %v2367, %v2369
    %v2371 = vrot.slane %v2357, %v2370
    %v2372 = vcombine.low %v2348, %v2364
    %v2373 = vcombine.high %v2348, %v2364
    %v2375 = vunpack.c.l.s4 1934713408
    %v2376 = vunpack.c.0.s8 %v2375
    %v2377 = vlaneseq
    %v2378 = vshrl.u32 %v2377, 7
    %v2379 = vsub.s32 %v2376, %v2378
    %v2380 = vrot.slane %v2372, %v2379
    %v2382 = vunpack.c.l.s4 1934713408
    %v2383 = vunpack.c.0.s8 %v2382
    %v2384 = vlaneseq
    %v2385 = vshrl.u32 %v2384, 7
    %v2386 = vsub.s32 %v2383, %v2385
    %v2387 = vrot.slane %v2373, %v2386
    %v2388 = vcombine.low %v2355, %v2371
    %v2389 = vcombine.high %v2355, %v2371
    %v2391 = vunpack.c.l.s4 1934713408
    %v2392 = vunpack.c.0.s8 %v2391
    %v2393 = vlaneseq
    %v2394 = vshrl.u32 %v2393, 7
    %v2395 = vsub.s32 %v2392, %v2394
    %v2396 = vrot.slane %v2388, %v2395
    %v2398 = vunpack.c.l.s4 1934713408
    %v2399 = vunpack.c.0.s8 %v2398
    %v2400 = vlaneseq
    %v2401 = vshrl.u32 %v2400, 7
    %v2402 = vsub.s32 %v2399, %v2401
    %v2403 = vrot.slane %v2389, %v2402
    %v2404 = vcombine.high %v2380, 0.0
    %v2405 = vcombine.high %v2387, 0.0
    %v2406 = vcombine.high %v2396, 0.0
    %v2407 = vcombine.high %v2403, 0.0
    %v2408 = vcombine.low %v2317, %v2331
    %v2409 = vcombine.high %v2317, %v2331
    %v2411 = vunpack.c.l.s4 1983009808
    %v2412 = vunpack.c.0.s8 %v2411
    %v2413 = vlaneseq
    %v2414 = vshrl.u32 %v2413, 7
    %v2415 = vsub.s32 %v2412, %v2414
    %v2416 = vrot.slane %v2408, %v2415
    %v2418 = vunpack.c.l.s4 1983009808
    %v2419 = vunpack.c.0.s8 %v2418
    %v2420 = vlaneseq
    %v2421 = vshrl.u32 %v2420, 7
    %v2422 = vsub.s32 %v2419, %v2421
    %v2423 = vrot.slane %v2409, %v2422
    %v2424 = vcombine.low %v2325, %v2337
    %v2425 = vcombine.high %v2325, %v2337
    %v2427 = vunpack.c.l.s4 1983009808
    %v2428 = vunpack.c.0.s8 %v2427
    %v2429 = vlaneseq
    %v2430 = vshrl.u32 %v2429, 7
    %v2431 = vsub.s32 %v2428, %v2430
    %v2432 = vrot.slane %v2424, %v2431
    %v2434 = vunpack.c.l.s4 1983009808
    %v2435 = vunpack.c.0.s8 %v2434
    %v2436 = vlaneseq
    %v2437 = vshrl.u32 %v2436, 7
    %v2438 = vsub.s32 %v2435, %v2437
    %v2439 = vrot.slane %v2425, %v2438
    %v2440 = vcombine.low %v2416, %v2432
    %v2441 = vcombine.high %v2416, %v2432
    %v2443 = vunpack.c.l.s4 1934713408
    %v2444 = vunpack.c.0.s8 %v2443
    %v2445 = vlaneseq
    %v2446 = vshrl.u32 %v2445, 7
    %v2447 = vsub.s32 %v2444, %v2446
    %v2448 = vrot.slane %v2440, %v2447
    %v2450 = vunpack.c.l.s4 1934713408
    %v2451 = vunpack.c.0.s8 %v2450
    %v2452 = vlaneseq
    %v2453 = vshrl.u32 %v2452, 7
    %v2454 = vsub.s32 %v2451, %v2453
    %v2455 = vrot.slane %v2441, %v2454
    %v2456 = vcombine.low %v2423, %v2439
    %v2457 = vcombine.high %v2423, %v2439
    %v2459 = vunpack.c.l.s4 1934713408
    %v2460 = vunpack.c.0.s8 %v2459
    %v2461 = vlaneseq
    %v2462 = vshrl.u32 %v2461, 7
    %v2463 = vsub.s32 %v2460, %v2462
    %v2464 = vrot.slane %v2456, %v2463
    %v2466 = vunpack.c.l.s4 1934713408
    %v2467 = vunpack.c.0.s8 %v2466
    %v2468 = vlaneseq
    %v2469 = vshrl.u32 %v2468, 7
    %v2470 = vsub.s32 %v2467, %v2469
    %v2471 = vrot.slane %v2457, %v2470
    %v2472 = vcombine.high %v2448, 0.0
    %v2473 = vcombine.high %v2455, 0.0
    %v2474 = vcombine.high %v2464, 0.0
    %v2475 = vcombine.high %v2471, 0.0
    %v2476 = vcombine.low %v2380, %v2387
    %v2478 = vunpack.c.l.s4 1983009808
    %v2479 = vunpack.c.0.s8 %v2478
    %v2480 = vlaneseq
    %v2481 = vshrl.u32 %v2480, 7
    %v2482 = vsub.s32 %v2479, %v2481
    %v2483 = vrot.slane %v2476, %v2482
    %v2484 = vcombine.low %v2404, %v2405
    %v2486 = vunpack.c.l.s4 1983009808
    %v2487 = vunpack.c.0.s8 %v2486
    %v2488 = vlaneseq
    %v2489 = vshrl.u32 %v2488, 7
    %v2490 = vsub.s32 %v2487, %v2489
    %v2491 = vrot.slane %v2484, %v2490
    %v2492 = vcombine.low %v2396, %v2403
    %v2494 = vunpack.c.l.s4 1983009808
    %v2495 = vunpack.c.0.s8 %v2494
    %v2496 = vlaneseq
    %v2497 = vshrl.u32 %v2496, 7
    %v2498 = vsub.s32 %v2495, %v2497
    %v2499 = vrot.slane %v2492, %v2498
    %v2500 = vcombine.low %v2406, %v2407
    %v2502 = vunpack.c.l.s4 1983009808
    %v2503 = vunpack.c.0.s8 %v2502
    %v2504 = vlaneseq
    %v2505 = vshrl.u32 %v2504, 7
    %v2506 = vsub.s32 %v2503, %v2505
    %v2507 = vrot.slane %v2500, %v2506
    %v2508 = vcombine.low %v2483, %v2491
    %v2509 = vcombine.high %v2483, %v2491
    %v2511 = vunpack.c.l.s4 1934713408
    %v2512 = vunpack.c.0.s8 %v2511
    %v2513 = vlaneseq
    %v2514 = vshrl.u32 %v2513, 7
    %v2515 = vsub.s32 %v2512, %v2514
    %v2516 = vrot.slane %v2508, %v2515
    %v2518 = vunpack.c.l.s4 1934713408
    %v2519 = vunpack.c.0.s8 %v2518
    %v2520 = vlaneseq
    %v2521 = vshrl.u32 %v2520, 7
    %v2522 = vsub.s32 %v2519, %v2521
    %v2523 = vrot.slane %v2509, %v2522
    %v2524 = vcombine.low %v2499, %v2507
    %v2525 = vcombine.high %v2499, %v2507
    %v2527 = vunpack.c.l.s4 1934713408
    %v2528 = vunpack.c.0.s8 %v2527
    %v2529 = vlaneseq
    %v2530 = vshrl.u32 %v2529, 7
    %v2531 = vsub.s32 %v2528, %v2530
    %v2532 = vrot.slane %v2524, %v2531
    %v2534 = vunpack.c.l.s4 1934713408
    %v2535 = vunpack.c.0.s8 %v2534
    %v2536 = vlaneseq
    %v2537 = vshrl.u32 %v2536, 7
    %v2538 = vsub.s32 %v2535, %v2537
    %v2539 = vrot.slane %v2525, %v2538
    %v2540 = vcombine.low %v2516, %v2532
    %v2541 = vcombine.high %v2516, %v2532
    %v2542 = vcombine.low %v2523, %v2539
    %v2543 = vcombine.high %v2523, %v2539
    %v2544 = vcombine.low %v2448, %v2455
    %v2546 = vunpack.c.l.s4 1983009808
    %v2547 = vunpack.c.0.s8 %v2546
    %v2548 = vlaneseq
    %v2549 = vshrl.u32 %v2548, 7
    %v2550 = vsub.s32 %v2547, %v2549
    %v2551 = vrot.slane %v2544, %v2550
    %v2552 = vcombine.low %v2472, %v2473
    %v2554 = vunpack.c.l.s4 1983009808
    %v2555 = vunpack.c.0.s8 %v2554
    %v2556 = vlaneseq
    %v2557 = vshrl.u32 %v2556, 7
    %v2558 = vsub.s32 %v2555, %v2557
    %v2559 = vrot.slane %v2552, %v2558
    %v2560 = vcombine.low %v2464, %v2471
    %v2562 = vunpack.c.l.s4 1983009808
    %v2563 = vunpack.c.0.s8 %v2562
    %v2564 = vlaneseq
    %v2565 = vshrl.u32 %v2564, 7
    %v2566 = vsub.s32 %v2563, %v2565
    %v2567 = vrot.slane %v2560, %v2566
    %v2568 = vcombine.low %v2474, %v2475
    %v2570 = vunpack.c.l.s4 1983009808
    %v2571 = vunpack.c.0.s8 %v2570
    %v2572 = vlaneseq
    %v2573 = vshrl.u32 %v2572, 7
    %v2574 = vsub.s32 %v2571, %v2573
    %v2575 = vrot.slane %v2568, %v2574
    %v2576 = vcombine.low %v2551, %v2559
    %v2577 = vcombine.high %v2551, %v2559
    %v2579 = vunpack.c.l.s4 1934713408
    %v2580 = vunpack.c.0.s8 %v2579
    %v2581 = vlaneseq
    %v2582 = vshrl.u32 %v2581, 7
    %v2583 = vsub.s32 %v2580, %v2582
    %v2584 = vrot.slane %v2576, %v2583
    %v2586 = vunpack.c.l.s4 1934713408
    %v2587 = vunpack.c.0.s8 %v2586
    %v2588 = vlaneseq
    %v2589 = vshrl.u32 %v2588, 7
    %v2590 = vsub.s32 %v2587, %v2589
    %v2591 = vrot.slane %v2577, %v2590
    %v2592 = vcombine.low %v2567, %v2575
    %v2593 = vcombine.high %v2567, %v2575
    %v2595 = vunpack.c.l.s4 1934713408
    %v2596 = vunpack.c.0.s8 %v2595
    %v2597 = vlaneseq
    %v2598 = vshrl.u32 %v2597, 7
    %v2599 = vsub.s32 %v2596, %v2598
    %v2600 = vrot.slane %v2592, %v2599
    %v2602 = vunpack.c.l.s4 1934713408
    %v2603 = vunpack.c.0.s8 %v2602
    %v2604 = vlaneseq
    %v2605 = vshrl.u32 %v2604, 7
    %v2606 = vsub.s32 %v2603, %v2605
    %v2607 = vrot.slane %v2593, %v2606
    %v2608 = vcombine.low %v2584, %v2600
    %v2609 = vcombine.high %v2584, %v2600
    %v2610 = vcombine.low %v2591, %v2607
    %v2611 = vcombine.high %v2591, %v2607
    %2612 = vrot.lane.b32.xlu0 %v2314, 96
    %v2613 = vpop.permute.xlu0 %2612
    %2614 = vrot.lane.b32.xlu0 %v2317, 96
    %v2615 = vpop.permute.xlu0 %2614
    %2616 = vrot.lane.b32.xlu0 %v2323, 96
    %v2617 = vpop.permute.xlu0 %2616
    %2618 = vrot.lane.b32.xlu0 %v2325, 96
    %v2619 = vpop.permute.xlu0 %2618
    %2620 = vrot.lane.b32.xlu0 %v2329, 96
    %v2621 = vpop.permute.xlu0 %2620
    %2622 = vrot.lane.b32.xlu0 %v2331, 96
    %v2623 = vpop.permute.xlu0 %2622
    %2624 = vrot.lane.b32.xlu0 %v2335, 96
    %v2625 = vpop.permute.xlu0 %2624
    %2626 = vrot.lane.b32.xlu0 %v2337, 96
    %v2627 = vpop.permute.xlu0 %2626
    %v2636 = vcombine.low %v2613, %v2621
    %v2637 = vcombine.high %v2613, %v2621
    %v2639 = vunpack.c.l.s4 1983009808
    %v2640 = vunpack.c.0.s8 %v2639
    %v2641 = vlaneseq
    %v2642 = vshrl.u32 %v2641, 7
    %v2643 = vsub.s32 %v2640, %v2642
    %v2644 = vrot.slane %v2636, %v2643
    %v2646 = vunpack.c.l.s4 1983009808
    %v2647 = vunpack.c.0.s8 %v2646
    %v2648 = vlaneseq
    %v2649 = vshrl.u32 %v2648, 7
    %v2650 = vsub.s32 %v2647, %v2649
    %v2651 = vrot.slane %v2637, %v2650
    %v2652 = vcombine.low %v2617, %v2625
    %v2653 = vcombine.high %v2617, %v2625
    %v2655 = vunpack.c.l.s4 1983009808
    %v2656 = vunpack.c.0.s8 %v2655
    %v2657 = vlaneseq
    %v2658 = vshrl.u32 %v2657, 7
    %v2659 = vsub.s32 %v2656, %v2658
    %v2660 = vrot.slane %v2652, %v2659
    %v2662 = vunpack.c.l.s4 1983009808
    %v2663 = vunpack.c.0.s8 %v2662
    %v2664 = vlaneseq
    %v2665 = vshrl.u32 %v2664, 7
    %v2666 = vsub.s32 %v2663, %v2665
    %v2667 = vrot.slane %v2653, %v2666
    %v2668 = vcombine.low %v2644, %v2660
    %v2669 = vcombine.high %v2644, %v2660
    %v2671 = vunpack.c.l.s4 1934713408
    %v2672 = vunpack.c.0.s8 %v2671
    %v2673 = vlaneseq
    %v2674 = vshrl.u32 %v2673, 7
    %v2675 = vsub.s32 %v2672, %v2674
    %v2676 = vrot.slane %v2668, %v2675
    %v2678 = vunpack.c.l.s4 1934713408
    %v2679 = vunpack.c.0.s8 %v2678
    %v2680 = vlaneseq
    %v2681 = vshrl.u32 %v2680, 7
    %v2682 = vsub.s32 %v2679, %v2681
    %v2683 = vrot.slane %v2669, %v2682
    %v2684 = vcombine.low %v2651, %v2667
    %v2685 = vcombine.high %v2651, %v2667
    %v2687 = vunpack.c.l.s4 1934713408
    %v2688 = vunpack.c.0.s8 %v2687
    %v2689 = vlaneseq
    %v2690 = vshrl.u32 %v2689, 7
    %v2691 = vsub.s32 %v2688, %v2690
    %v2692 = vrot.slane %v2684, %v2691
    %v2694 = vunpack.c.l.s4 1934713408
    %v2695 = vunpack.c.0.s8 %v2694
    %v2696 = vlaneseq
    %v2697 = vshrl.u32 %v2696, 7
    %v2698 = vsub.s32 %v2695, %v2697
    %v2699 = vrot.slane %v2685, %v2698
    %v2700 = vcombine.high %v2676, 0.0
    %v2701 = vcombine.high %v2683, 0.0
    %v2702 = vcombine.high %v2692, 0.0
    %v2703 = vcombine.high %v2699, 0.0
    %v2704 = vcombine.low %v2615, %v2623
    %v2705 = vcombine.high %v2615, %v2623
    %v2707 = vunpack.c.l.s4 1983009808
    %v2708 = vunpack.c.0.s8 %v2707
    %v2709 = vlaneseq
    %v2710 = vshrl.u32 %v2709, 7
    %v2711 = vsub.s32 %v2708, %v2710
    %v2712 = vrot.slane %v2704, %v2711
    %v2714 = vunpack.c.l.s4 1983009808
    %v2715 = vunpack.c.0.s8 %v2714
    %v2716 = vlaneseq
    %v2717 = vshrl.u32 %v2716, 7
    %v2718 = vsub.s32 %v2715, %v2717
    %v2719 = vrot.slane %v2705, %v2718
    %v2720 = vcombine.low %v2619, %v2627
    %v2721 = vcombine.high %v2619, %v2627
    %v2723 = vunpack.c.l.s4 1983009808
    %v2724 = vunpack.c.0.s8 %v2723
    %v2725 = vlaneseq
    %v2726 = vshrl.u32 %v2725, 7
    %v2727 = vsub.s32 %v2724, %v2726
    %v2728 = vrot.slane %v2720, %v2727
    %v2730 = vunpack.c.l.s4 1983009808
    %v2731 = vunpack.c.0.s8 %v2730
    %v2732 = vlaneseq
    %v2733 = vshrl.u32 %v2732, 7
    %v2734 = vsub.s32 %v2731, %v2733
    %v2735 = vrot.slane %v2721, %v2734
    %v2736 = vcombine.low %v2712, %v2728
    %v2737 = vcombine.high %v2712, %v2728
    %v2739 = vunpack.c.l.s4 1934713408
    %v2740 = vunpack.c.0.s8 %v2739
    %v2741 = vlaneseq
    %v2742 = vshrl.u32 %v2741, 7
    %v2743 = vsub.s32 %v2740, %v2742
    %v2744 = vrot.slane %v2736, %v2743
    %v2746 = vunpack.c.l.s4 1934713408
    %v2747 = vunpack.c.0.s8 %v2746
    %v2748 = vlaneseq
    %v2749 = vshrl.u32 %v2748, 7
    %v2750 = vsub.s32 %v2747, %v2749
    %v2751 = vrot.slane %v2737, %v2750
    %v2752 = vcombine.low %v2719, %v2735
    %v2753 = vcombine.high %v2719, %v2735
    %v2755 = vunpack.c.l.s4 1934713408
    %v2756 = vunpack.c.0.s8 %v2755
    %v2757 = vlaneseq
    %v2758 = vshrl.u32 %v2757, 7
    %v2759 = vsub.s32 %v2756, %v2758
    %v2760 = vrot.slane %v2752, %v2759
    %v2762 = vunpack.c.l.s4 1934713408
    %v2763 = vunpack.c.0.s8 %v2762
    %v2764 = vlaneseq
    %v2765 = vshrl.u32 %v2764, 7
    %v2766 = vsub.s32 %v2763, %v2765
    %v2767 = vrot.slane %v2753, %v2766
    %v2768 = vcombine.high %v2744, 0.0
    %v2769 = vcombine.high %v2751, 0.0
    %v2770 = vcombine.high %v2760, 0.0
    %v2771 = vcombine.high %v2767, 0.0
    %v2772 = vcombine.low %v2676, %v2683
    %v2774 = vunpack.c.l.s4 1983009808
    %v2775 = vunpack.c.0.s8 %v2774
    %v2776 = vlaneseq
    %v2777 = vshrl.u32 %v2776, 7
    %v2778 = vsub.s32 %v2775, %v2777
    %v2779 = vrot.slane %v2772, %v2778
    %v2780 = vcombine.low %v2700, %v2701
    %v2782 = vunpack.c.l.s4 1983009808
    %v2783 = vunpack.c.0.s8 %v2782
    %v2784 = vlaneseq
    %v2785 = vshrl.u32 %v2784, 7
    %v2786 = vsub.s32 %v2783, %v2785
    %v2787 = vrot.slane %v2780, %v2786
    %v2788 = vcombine.low %v2692, %v2699
    %v2790 = vunpack.c.l.s4 1983009808
    %v2791 = vunpack.c.0.s8 %v2790
    %v2792 = vlaneseq
    %v2793 = vshrl.u32 %v2792, 7
    %v2794 = vsub.s32 %v2791, %v2793
    %v2795 = vrot.slane %v2788, %v2794
    %v2796 = vcombine.low %v2702, %v2703
    %v2798 = vunpack.c.l.s4 1983009808
    %v2799 = vunpack.c.0.s8 %v2798
    %v2800 = vlaneseq
    %v2801 = vshrl.u32 %v2800, 7
    %v2802 = vsub.s32 %v2799, %v2801
    %v2803 = vrot.slane %v2796, %v2802
    %v2804 = vcombine.low %v2779, %v2787
    %v2805 = vcombine.high %v2779, %v2787
    %v2807 = vunpack.c.l.s4 1934713408
    %v2808 = vunpack.c.0.s8 %v2807
    %v2809 = vlaneseq
    %v2810 = vshrl.u32 %v2809, 7
    %v2811 = vsub.s32 %v2808, %v2810
    %v2812 = vrot.slane %v2804, %v2811
    %v2814 = vunpack.c.l.s4 1934713408
    %v2815 = vunpack.c.0.s8 %v2814
    %v2816 = vlaneseq
    %v2817 = vshrl.u32 %v2816, 7
    %v2818 = vsub.s32 %v2815, %v2817
    %v2819 = vrot.slane %v2805, %v2818
    %v2820 = vcombine.low %v2795, %v2803
    %v2821 = vcombine.high %v2795, %v2803
    %v2823 = vunpack.c.l.s4 1934713408
    %v2824 = vunpack.c.0.s8 %v2823
    %v2825 = vlaneseq
    %v2826 = vshrl.u32 %v2825, 7
    %v2827 = vsub.s32 %v2824, %v2826
    %v2828 = vrot.slane %v2820, %v2827
    %v2830 = vunpack.c.l.s4 1934713408
    %v2831 = vunpack.c.0.s8 %v2830
    %v2832 = vlaneseq
    %v2833 = vshrl.u32 %v2832, 7
    %v2834 = vsub.s32 %v2831, %v2833
    %v2835 = vrot.slane %v2821, %v2834
    %v2836 = vcombine.low %v2812, %v2828
    %v2837 = vcombine.high %v2812, %v2828
    %v2838 = vcombine.low %v2819, %v2835
    %v2839 = vcombine.high %v2819, %v2835
    %v2840 = vcombine.low %v2744, %v2751
    %v2842 = vunpack.c.l.s4 1983009808
    %v2843 = vunpack.c.0.s8 %v2842
    %v2844 = vlaneseq
    %v2845 = vshrl.u32 %v2844, 7
    %v2846 = vsub.s32 %v2843, %v2845
    %v2847 = vrot.slane %v2840, %v2846
    %v2848 = vcombine.low %v2768, %v2769
    %v2850 = vunpack.c.l.s4 1983009808
    %v2851 = vunpack.c.0.s8 %v2850
    %v2852 = vlaneseq
    %v2853 = vshrl.u32 %v2852, 7
    %v2854 = vsub.s32 %v2851, %v2853
    %v2855 = vrot.slane %v2848, %v2854
    %v2856 = vcombine.low %v2760, %v2767
    %v2858 = vunpack.c.l.s4 1983009808
    %v2859 = vunpack.c.0.s8 %v2858
    %v2860 = vlaneseq
    %v2861 = vshrl.u32 %v2860, 7
    %v2862 = vsub.s32 %v2859, %v2861
    %v2863 = vrot.slane %v2856, %v2862
    %v2864 = vcombine.low %v2770, %v2771
    %v2866 = vunpack.c.l.s4 1983009808
    %v2867 = vunpack.c.0.s8 %v2866
    %v2868 = vlaneseq
    %v2869 = vshrl.u32 %v2868, 7
    %v2870 = vsub.s32 %v2867, %v2869
    %v2871 = vrot.slane %v2864, %v2870
    %v2872 = vcombine.low %v2847, %v2855
    %v2873 = vcombine.high %v2847, %v2855
    %v2875 = vunpack.c.l.s4 1934713408
    %v2876 = vunpack.c.0.s8 %v2875
    %v2877 = vlaneseq
    %v2878 = vshrl.u32 %v2877, 7
    %v2879 = vsub.s32 %v2876, %v2878
    %v2880 = vrot.slane %v2872, %v2879
    %v2882 = vunpack.c.l.s4 1934713408
    %v2883 = vunpack.c.0.s8 %v2882
    %v2884 = vlaneseq
    %v2885 = vshrl.u32 %v2884, 7
    %v2886 = vsub.s32 %v2883, %v2885
    %v2887 = vrot.slane %v2873, %v2886
    %v2888 = vcombine.low %v2863, %v2871
    %v2889 = vcombine.high %v2863, %v2871
    %v2891 = vunpack.c.l.s4 1934713408
    %v2892 = vunpack.c.0.s8 %v2891
    %v2893 = vlaneseq
    %v2894 = vshrl.u32 %v2893, 7
    %v2895 = vsub.s32 %v2892, %v2894
    %v2896 = vrot.slane %v2888, %v2895
    %v2898 = vunpack.c.l.s4 1934713408
    %v2899 = vunpack.c.0.s8 %v2898
    %v2900 = vlaneseq
    %v2901 = vshrl.u32 %v2900, 7
    %v2902 = vsub.s32 %v2899, %v2901
    %v2903 = vrot.slane %v2889, %v2902
    %v2904 = vcombine.low %v2880, %v2896
    %v2905 = vcombine.high %v2880, %v2896
    %v2906 = vcombine.low %v2887, %v2903
    %v2907 = vcombine.high %v2887, %v2903
    %2908 = vrot.lane.b32.xlu0 %v2314, 64
    %v2909 = vpop.permute.xlu0 %2908
    %2910 = vrot.lane.b32.xlu0 %v2317, 64
    %v2911 = vpop.permute.xlu0 %2910
    %2912 = vrot.lane.b32.xlu0 %v2323, 64
    %v2913 = vpop.permute.xlu0 %2912
    %2914 = vrot.lane.b32.xlu0 %v2325, 64
    %v2915 = vpop.permute.xlu0 %2914
    %2916 = vrot.lane.b32.xlu0 %v2329, 64
    %v2917 = vpop.permute.xlu0 %2916
    %2918 = vrot.lane.b32.xlu0 %v2331, 64
    %v2919 = vpop.permute.xlu0 %2918
    %2920 = vrot.lane.b32.xlu0 %v2335, 64
    %v2921 = vpop.permute.xlu0 %2920
    %2922 = vrot.lane.b32.xlu0 %v2337, 64
    %v2923 = vpop.permute.xlu0 %2922
    %v2932 = vcombine.low %v2909, %v2917
    %v2933 = vcombine.high %v2909, %v2917
    %v2935 = vunpack.c.l.s4 1983009808
    %v2936 = vunpack.c.0.s8 %v2935
    %v2937 = vlaneseq
    %v2938 = vshrl.u32 %v2937, 7
    %v2939 = vsub.s32 %v2936, %v2938
    %v2940 = vrot.slane %v2932, %v2939
    %v2942 = vunpack.c.l.s4 1983009808
    %v2943 = vunpack.c.0.s8 %v2942
    %v2944 = vlaneseq
    %v2945 = vshrl.u32 %v2944, 7
    %v2946 = vsub.s32 %v2943, %v2945
    %v2947 = vrot.slane %v2933, %v2946
    %v2948 = vcombine.low %v2913, %v2921
    %v2949 = vcombine.high %v2913, %v2921
    %v2951 = vunpack.c.l.s4 1983009808
    %v2952 = vunpack.c.0.s8 %v2951
    %v2953 = vlaneseq
    %v2954 = vshrl.u32 %v2953, 7
    %v2955 = vsub.s32 %v2952, %v2954
    %v2956 = vrot.slane %v2948, %v2955
    %v2958 = vunpack.c.l.s4 1983009808
    %v2959 = vunpack.c.0.s8 %v2958
    %v2960 = vlaneseq
    %v2961 = vshrl.u32 %v2960, 7
    %v2962 = vsub.s32 %v2959, %v2961
    %v2963 = vrot.slane %v2949, %v2962
    %v2964 = vcombine.low %v2940, %v2956
    %v2965 = vcombine.high %v2940, %v2956
    %v2967 = vunpack.c.l.s4 1934713408
    %v2968 = vunpack.c.0.s8 %v2967
    %v2969 = vlaneseq
    %v2970 = vshrl.u32 %v2969, 7
    %v2971 = vsub.s32 %v2968, %v2970
    %v2972 = vrot.slane %v2964, %v2971
    %v2974 = vunpack.c.l.s4 1934713408
    %v2975 = vunpack.c.0.s8 %v2974
    %v2976 = vlaneseq
    %v2977 = vshrl.u32 %v2976, 7
    %v2978 = vsub.s32 %v2975, %v2977
    %v2979 = vrot.slane %v2965, %v2978
    %v2980 = vcombine.low %v2947, %v2963
    %v2981 = vcombine.high %v2947, %v2963
    %v2983 = vunpack.c.l.s4 1934713408
    %v2984 = vunpack.c.0.s8 %v2983
    %v2985 = vlaneseq
    %v2986 = vshrl.u32 %v2985, 7
    %v2987 = vsub.s32 %v2984, %v2986
    %v2988 = vrot.slane %v2980, %v2987
    %v2990 = vunpack.c.l.s4 1934713408
    %v2991 = vunpack.c.0.s8 %v2990
    %v2992 = vlaneseq
    %v2993 = vshrl.u32 %v2992, 7
    %v2994 = vsub.s32 %v2991, %v2993
    %v2995 = vrot.slane %v2981, %v2994
    %v2996 = vcombine.high %v2972, 0.0
    %v2997 = vcombine.high %v2979, 0.0
    %v2998 = vcombine.high %v2988, 0.0
    %v2999 = vcombine.high %v2995, 0.0
    %v3000 = vcombine.low %v2911, %v2919
    %v3001 = vcombine.high %v2911, %v2919
    %v3003 = vunpack.c.l.s4 1983009808
    %v3004 = vunpack.c.0.s8 %v3003
    %v3005 = vlaneseq
    %v3006 = vshrl.u32 %v3005, 7
    %v3007 = vsub.s32 %v3004, %v3006
    %v3008 = vrot.slane %v3000, %v3007
    %v3010 = vunpack.c.l.s4 1983009808
    %v3011 = vunpack.c.0.s8 %v3010
    %v3012 = vlaneseq
    %v3013 = vshrl.u32 %v3012, 7
    %v3014 = vsub.s32 %v3011, %v3013
    %v3015 = vrot.slane %v3001, %v3014
    %v3016 = vcombine.low %v2915, %v2923
    %v3017 = vcombine.high %v2915, %v2923
    %v3019 = vunpack.c.l.s4 1983009808
    %v3020 = vunpack.c.0.s8 %v3019
    %v3021 = vlaneseq
    %v3022 = vshrl.u32 %v3021, 7
    %v3023 = vsub.s32 %v3020, %v3022
    %v3024 = vrot.slane %v3016, %v3023
    %v3026 = vunpack.c.l.s4 1983009808
    %v3027 = vunpack.c.0.s8 %v3026
    %v3028 = vlaneseq
    %v3029 = vshrl.u32 %v3028, 7
    %v3030 = vsub.s32 %v3027, %v3029
    %v3031 = vrot.slane %v3017, %v3030
    %v3032 = vcombine.low %v3008, %v3024
    %v3033 = vcombine.high %v3008, %v3024
    %v3035 = vunpack.c.l.s4 1934713408
    %v3036 = vunpack.c.0.s8 %v3035
    %v3037 = vlaneseq
    %v3038 = vshrl.u32 %v3037, 7
    %v3039 = vsub.s32 %v3036, %v3038
    %v3040 = vrot.slane %v3032, %v3039
    %v3042 = vunpack.c.l.s4 1934713408
    %v3043 = vunpack.c.0.s8 %v3042
    %v3044 = vlaneseq
    %v3045 = vshrl.u32 %v3044, 7
    %v3046 = vsub.s32 %v3043, %v3045
    %v3047 = vrot.slane %v3033, %v3046
    %v3048 = vcombine.low %v3015, %v3031
    %v3049 = vcombine.high %v3015, %v3031
    %v3051 = vunpack.c.l.s4 1934713408
    %v3052 = vunpack.c.0.s8 %v3051
    %v3053 = vlaneseq
    %v3054 = vshrl.u32 %v3053, 7
    %v3055 = vsub.s32 %v3052, %v3054
    %v3056 = vrot.slane %v3048, %v3055
    %v3058 = vunpack.c.l.s4 1934713408
    %v3059 = vunpack.c.0.s8 %v3058
    %v3060 = vlaneseq
    %v3061 = vshrl.u32 %v3060, 7
    %v3062 = vsub.s32 %v3059, %v3061
    %v3063 = vrot.slane %v3049, %v3062
    %v3064 = vcombine.high %v3040, 0.0
    %v3065 = vcombine.high %v3047, 0.0
    %v3066 = vcombine.high %v3056, 0.0
    %v3067 = vcombine.high %v3063, 0.0
    %v3068 = vcombine.low %v2972, %v2979
    %v3070 = vunpack.c.l.s4 1983009808
    %v3071 = vunpack.c.0.s8 %v3070
    %v3072 = vlaneseq
    %v3073 = vshrl.u32 %v3072, 7
    %v3074 = vsub.s32 %v3071, %v3073
    %v3075 = vrot.slane %v3068, %v3074
    %v3076 = vcombine.low %v2996, %v2997
    %v3078 = vunpack.c.l.s4 1983009808
    %v3079 = vunpack.c.0.s8 %v3078
    %v3080 = vlaneseq
    %v3081 = vshrl.u32 %v3080, 7
    %v3082 = vsub.s32 %v3079, %v3081
    %v3083 = vrot.slane %v3076, %v3082
    %v3084 = vcombine.low %v2988, %v2995
    %v3086 = vunpack.c.l.s4 1983009808
    %v3087 = vunpack.c.0.s8 %v3086
    %v3088 = vlaneseq
    %v3089 = vshrl.u32 %v3088, 7
    %v3090 = vsub.s32 %v3087, %v3089
    %v3091 = vrot.slane %v3084, %v3090
    %v3092 = vcombine.low %v2998, %v2999
    %v3094 = vunpack.c.l.s4 1983009808
    %v3095 = vunpack.c.0.s8 %v3094
    %v3096 = vlaneseq
    %v3097 = vshrl.u32 %v3096, 7
    %v3098 = vsub.s32 %v3095, %v3097
    %v3099 = vrot.slane %v3092, %v3098
    %v3100 = vcombine.low %v3075, %v3083
    %v3101 = vcombine.high %v3075, %v3083
    %v3103 = vunpack.c.l.s4 1934713408
    %v3104 = vunpack.c.0.s8 %v3103
    %v3105 = vlaneseq
    %v3106 = vshrl.u32 %v3105, 7
    %v3107 = vsub.s32 %v3104, %v3106
    %v3108 = vrot.slane %v3100, %v3107
    %v3110 = vunpack.c.l.s4 1934713408
    %v3111 = vunpack.c.0.s8 %v3110
    %v3112 = vlaneseq
    %v3113 = vshrl.u32 %v3112, 7
    %v3114 = vsub.s32 %v3111, %v3113
    %v3115 = vrot.slane %v3101, %v3114
    %v3116 = vcombine.low %v3091, %v3099
    %v3117 = vcombine.high %v3091, %v3099
    %v3119 = vunpack.c.l.s4 1934713408
    %v3120 = vunpack.c.0.s8 %v3119
    %v3121 = vlaneseq
    %v3122 = vshrl.u32 %v3121, 7
    %v3123 = vsub.s32 %v3120, %v3122
    %v3124 = vrot.slane %v3116, %v3123
    %v3126 = vunpack.c.l.s4 1934713408
    %v3127 = vunpack.c.0.s8 %v3126
    %v3128 = vlaneseq
    %v3129 = vshrl.u32 %v3128, 7
    %v3130 = vsub.s32 %v3127, %v3129
    %v3131 = vrot.slane %v3117, %v3130
    %v3132 = vcombine.low %v3108, %v3124
    %v3133 = vcombine.high %v3108, %v3124
    %v3134 = vcombine.low %v3115, %v3131
    %v3135 = vcombine.high %v3115, %v3131
    %v3136 = vcombine.low %v3040, %v3047
    %v3138 = vunpack.c.l.s4 1983009808
    %v3139 = vunpack.c.0.s8 %v3138
    %v3140 = vlaneseq
    %v3141 = vshrl.u32 %v3140, 7
    %v3142 = vsub.s32 %v3139, %v3141
    %v3143 = vrot.slane %v3136, %v3142
    %v3144 = vcombine.low %v3064, %v3065
    %v3146 = vunpack.c.l.s4 1983009808
    %v3147 = vunpack.c.0.s8 %v3146
    %v3148 = vlaneseq
    %v3149 = vshrl.u32 %v3148, 7
    %v3150 = vsub.s32 %v3147, %v3149
    %v3151 = vrot.slane %v3144, %v3150
    %v3152 = vcombine.low %v3056, %v3063
    %v3154 = vunpack.c.l.s4 1983009808
    %v3155 = vunpack.c.0.s8 %v3154
    %v3156 = vlaneseq
    %v3157 = vshrl.u32 %v3156, 7
    %v3158 = vsub.s32 %v3155, %v3157
    %v3159 = vrot.slane %v3152, %v3158
    %v3160 = vcombine.low %v3066, %v3067
    %v3162 = vunpack.c.l.s4 1983009808
    %v3163 = vunpack.c.0.s8 %v3162
    %v3164 = vlaneseq
    %v3165 = vshrl.u32 %v3164, 7
    %v3166 = vsub.s32 %v3163, %v3165
    %v3167 = vrot.slane %v3160, %v3166
    %v3168 = vcombine.low %v3143, %v3151
    %v3169 = vcombine.high %v3143, %v3151
    %v3171 = vunpack.c.l.s4 1934713408
    %v3172 = vunpack.c.0.s8 %v3171
    %v3173 = vlaneseq
    %v3174 = vshrl.u32 %v3173, 7
    %v3175 = vsub.s32 %v3172, %v3174
    %v3176 = vrot.slane %v3168, %v3175
    %v3178 = vunpack.c.l.s4 1934713408
    %v3179 = vunpack.c.0.s8 %v3178
    %v3180 = vlaneseq
    %v3181 = vshrl.u32 %v3180, 7
    %v3182 = vsub.s32 %v3179, %v3181
    %v3183 = vrot.slane %v3169, %v3182
    %v3184 = vcombine.low %v3159, %v3167
    %v3185 = vcombine.high %v3159, %v3167
    %v3187 = vunpack.c.l.s4 1934713408
    %v3188 = vunpack.c.0.s8 %v3187
    %v3189 = vlaneseq
    %v3190 = vshrl.u32 %v3189, 7
    %v3191 = vsub.s32 %v3188, %v3190
    %v3192 = vrot.slane %v3184, %v3191
    %v3194 = vunpack.c.l.s4 1934713408
    %v3195 = vunpack.c.0.s8 %v3194
    %v3196 = vlaneseq
    %v3197 = vshrl.u32 %v3196, 7
    %v3198 = vsub.s32 %v3195, %v3197
    %v3199 = vrot.slane %v3185, %v3198
    %v3200 = vcombine.low %v3176, %v3192
    %v3201 = vcombine.high %v3176, %v3192
    %v3202 = vcombine.low %v3183, %v3199
    %v3203 = vcombine.high %v3183, %v3199
    %v3204 = vpack.c.bf16 %v2608, %v2540
    %v3205 = vpack.c.bf16 %v2609, %v2541
    %v3206 = vpack.c.bf16 %v2610, %v2542
    %v3207 = vpack.c.bf16 %v2611, %v2543
    %v3208 = vpack.c.bf16 %v2904, %v2836
    %v3209 = vpack.c.bf16 %v2905, %v2837
    %v3210 = vpack.c.bf16 %v2906, %v2838
    %v3211 = vpack.c.bf16 %v2907, %v2839
    %v3213 = vsel %vm257, %v3204, 0
    %v3216 = vsel %vm257, %v3208, 0
    %3218 = vmatprep.subr.bf16.mxu0 0
    %3219 = vmatpush1.bf16.xpose.msra.mxu0 %v3216
    %3220 = vmatprep.subr.bf16.mxu0 0
    %3221 = vmatpush1.bf16.xpose.msra.mxu0 0
    %3222 = vmatprep.subr.bf16.mxu0 0
    %3223 = vmatpush1.bf16.xpose.msra.mxu0 0
    %3224 = vmatprep.subr.bf16.mxu0 0
    %3225 = vmatpush1.bf16.xpose.msra.mxu0 0
    %3226 = vmatprep.subr.bf16.mxu0 0
    %3227 = vmatpush1.bf16.xpose.msra.mxu0 0
    %3228 = vmatprep.subr.bf16.mxu0 0
    %3229 = vmatpush1.bf16.xpose.msra.mxu0 0
    %3230 = vmatprep.subr.bf16.mxu0 0
    %3231 = vmatpush1.bf16.xpose.msra.mxu0 0
    %3232 = vmatprep.subr.bf16.mxu0 0
    %3233 = vmatpush1.bf16.xpose.msra.mxu0 0
    %3234 = vmatprep.subr.bf16.mxu0 0
    %3235 = vmatpush1.bf16.xpose.msra.mxu0 0
    %3236 = vmatprep.subr.bf16.mxu0 0
    %3237 = vmatpush1.bf16.xpose.msra.mxu0 0
    %3238 = vmatprep.subr.bf16.mxu0 0
    %3239 = vmatpush1.bf16.xpose.msra.mxu0 0
    %3240 = vmatprep.subr.bf16.mxu0 0
    %3241 = vmatpush1.bf16.xpose.msra.mxu0 0
    %3242 = vmatprep.subr.bf16.mxu0 0
    %3243 = vmatpush1.bf16.xpose.msra.mxu0 0
    %3244 = vmatprep.subr.bf16.mxu0 0
    %3245 = vmatpush1.bf16.xpose.msra.mxu0 0
    %3246 = vmatprep.subr.bf16.mxu0 0
    %3247 = vmatpush1.bf16.xpose.msra.mxu0 0
    %3248 = vmatprep.subr.bf16.mxu0 0
    %3249 = vmatpush1.bf16.xpose.msra.mxu0 0
    %3250 = vmatprep.mubr.bf16.mxu0 0
    %3251 = vmatmul.mubr.bf16.gmra.mrb[0].mxu0 %v3213
    %v3252 = vpop.f32.mrb[0].mxu0
    %v3253 = vadd.f32 %v261, %v3252
    %v3254 = vpop.f32.mrb[0].mxu0
    %v3255 = vpop.f32.mrb[0].mxu0
    %v3256 = vadd.f32 %v262, %v3255
    %v3257 = vpop.f32.mrb[0].mxu0
    %3258 = vdwg.mxu0
    %v3260 = vsel %vm257, %v3205, 0
    %v3263 = vsel %vm257, %v3209, 0
    %3265 = vmatprep.subr.bf16.mxu0 0
    %3266 = vmatpush1.bf16.xpose.msra.mxu0 %v3263
    %3267 = vmatprep.subr.bf16.mxu0 0
    %3268 = vmatpush1.bf16.xpose.msra.mxu0 0
    %3269 = vmatprep.subr.bf16.mxu0 0
    %3270 = vmatpush1.bf16.xpose.msra.mxu0 0
    %3271 = vmatprep.subr.bf16.mxu0 0
    %3272 = vmatpush1.bf16.xpose.msra.mxu0 0
    %3273 = vmatprep.subr.bf16.mxu0 0
    %3274 = vmatpush1.bf16.xpose.msra.mxu0 0
    %3275 = vmatprep.subr.bf16.mxu0 0
    %3276 = vmatpush1.bf16.xpose.msra.mxu0 0
    %3277 = vmatprep.subr.bf16.mxu0 0
    %3278 = vmatpush1.bf16.xpose.msra.mxu0 0
    %3279 = vmatprep.subr.bf16.mxu0 0
    %3280 = vmatpush1.bf16.xpose.msra.mxu0 0
    %3281 = vmatprep.subr.bf16.mxu0 0
    %3282 = vmatpush1.bf16.xpose.msra.mxu0 0
    %3283 = vmatprep.subr.bf16.mxu0 0
    %3284 = vmatpush1.bf16.xpose.msra.mxu0 0
    %3285 = vmatprep.subr.bf16.mxu0 0
    %3286 = vmatpush1.bf16.xpose.msra.mxu0 0
    %3287 = vmatprep.subr.bf16.mxu0 0
    %3288 = vmatpush1.bf16.xpose.msra.mxu0 0
    %3289 = vmatprep.subr.bf16.mxu0 0
    %3290 = vmatpush1.bf16.xpose.msra.mxu0 0
    %3291 = vmatprep.subr.bf16.mxu0 0
    %3292 = vmatpush1.bf16.xpose.msra.mxu0 0
    %3293 = vmatprep.subr.bf16.mxu0 0
    %3294 = vmatpush1.bf16.xpose.msra.mxu0 0
    %3295 = vmatprep.subr.bf16.mxu0 0
    %3296 = vmatpush1.bf16.xpose.msra.mxu0 0
    %3297 = vmatprep.mubr.bf16.mxu0 0
    %3298 = vmatmul.mubr.bf16.gmra.mrb[0].mxu0 %v3260
    %v3299 = vpop.f32.mrb[0].mxu0
    %v3300 = vadd.f32 %v261, %v3299
    %v3301 = vpop.f32.mrb[0].mxu0
    %v3302 = vpop.f32.mrb[0].mxu0
    %v3303 = vadd.f32 %v262, %v3302
    %v3304 = vpop.f32.mrb[0].mxu0
    %3305 = vdwg.mxu0
    %v3307 = vsel %vm257, %v3206, 0
    %v3310 = vsel %vm257, %v3210, 0
    %3312 = vmatprep.subr.bf16.mxu0 0
    %3313 = vmatpush1.bf16.xpose.msra.mxu0 %v3310
    %3314 = vmatprep.subr.bf16.mxu0 0
    %3315 = vmatpush1.bf16.xpose.msra.mxu0 0
    %3316 = vmatprep.subr.bf16.mxu0 0
    %3317 = vmatpush1.bf16.xpose.msra.mxu0 0
    %3318 = vmatprep.subr.bf16.mxu0 0
    %3319 = vmatpush1.bf16.xpose.msra.mxu0 0
    %3320 = vmatprep.subr.bf16.mxu0 0
    %3321 = vmatpush1.bf16.xpose.msra.mxu0 0
    %3322 = vmatprep.subr.bf16.mxu0 0
    %3323 = vmatpush1.bf16.xpose.msra.mxu0 0
    %3324 = vmatprep.subr.bf16.mxu0 0
    %3325 = vmatpush1.bf16.xpose.msra.mxu0 0
    %3326 = vmatprep.subr.bf16.mxu0 0
    %3327 = vmatpush1.bf16.xpose.msra.mxu0 0
    %3328 = vmatprep.subr.bf16.mxu0 0
    %3329 = vmatpush1.bf16.xpose.msra.mxu0 0
    %3330 = vmatprep.subr.bf16.mxu0 0
    %3331 = vmatpush1.bf16.xpose.msra.mxu0 0
    %3332 = vmatprep.subr.bf16.mxu0 0
    %3333 = vmatpush1.bf16.xpose.msra.mxu0 0
    %3334 = vmatprep.subr.bf16.mxu0 0
    %3335 = vmatpush1.bf16.xpose.msra.mxu0 0
    %3336 = vmatprep.subr.bf16.mxu0 0
    %3337 = vmatpush1.bf16.xpose.msra.mxu0 0
    %3338 = vmatprep.subr.bf16.mxu0 0
    %3339 = vmatpush1.bf16.xpose.msra.mxu0 0
    %3340 = vmatprep.subr.bf16.mxu0 0
    %3341 = vmatpush1.bf16.xpose.msra.mxu0 0
    %3342 = vmatprep.subr.bf16.mxu0 0
    %3343 = vmatpush1.bf16.xpose.msra.mxu0 0
    %3344 = vmatprep.mubr.bf16.mxu0 0
    %3345 = vmatmul.mubr.bf16.gmra.mrb[0].mxu0 %v3307
    %v3346 = vpop.f32.mrb[0].mxu0
    %v3347 = vadd.f32 %v261, %v3346
    %v3348 = vpop.f32.mrb[0].mxu0
    %v3349 = vpop.f32.mrb[0].mxu0
    %v3350 = vadd.f32 %v262, %v3349
    %v3351 = vpop.f32.mrb[0].mxu0
    %3352 = vdwg.mxu0
    %v3354 = vsel %vm257, %v3207, 0
    %v3357 = vsel %vm257, %v3211, 0
    %3359 = vmatprep.subr.bf16.mxu0 0
    %3360 = vmatpush1.bf16.xpose.msra.mxu0 %v3357
    %3361 = vmatprep.subr.bf16.mxu0 0
    %3362 = vmatpush1.bf16.xpose.msra.mxu0 0
    %3363 = vmatprep.subr.bf16.mxu0 0
    %3364 = vmatpush1.bf16.xpose.msra.mxu0 0
    %3365 = vmatprep.subr.bf16.mxu0 0
    %3366 = vmatpush1.bf16.xpose.msra.mxu0 0
    %3367 = vmatprep.subr.bf16.mxu0 0
    %3368 = vmatpush1.bf16.xpose.msra.mxu0 0
    %3369 = vmatprep.subr.bf16.mxu0 0
    %3370 = vmatpush1.bf16.xpose.msra.mxu0 0
    %3371 = vmatprep.subr.bf16.mxu0 0
    %3372 = vmatpush1.bf16.xpose.msra.mxu0 0
    %3373 = vmatprep.subr.bf16.mxu0 0
    %3374 = vmatpush1.bf16.xpose.msra.mxu0 0
    %3375 = vmatprep.subr.bf16.mxu0 0
    %3376 = vmatpush1.bf16.xpose.msra.mxu0 0
    %3377 = vmatprep.subr.bf16.mxu0 0
    %3378 = vmatpush1.bf16.xpose.msra.mxu0 0
    %3379 = vmatprep.subr.bf16.mxu0 0
    %3380 = vmatpush1.bf16.xpose.msra.mxu0 0
    %3381 = vmatprep.subr.bf16.mxu0 0
    %3382 = vmatpush1.bf16.xpose.msra.mxu0 0
    %3383 = vmatprep.subr.bf16.mxu0 0
    %3384 = vmatpush1.bf16.xpose.msra.mxu0 0
    %3385 = vmatprep.subr.bf16.mxu0 0
    %3386 = vmatpush1.bf16.xpose.msra.mxu0 0
    %3387 = vmatprep.subr.bf16.mxu0 0
    %3388 = vmatpush1.bf16.xpose.msra.mxu0 0
    %3389 = vmatprep.subr.bf16.mxu0 0
    %3390 = vmatpush1.bf16.xpose.msra.mxu0 0
    %3391 = vmatprep.mubr.bf16.mxu0 0
    %3392 = vmatmul.mubr.bf16.gmra.mrb[0].mxu0 %v3354
    %v3393 = vpop.f32.mrb[0].mxu0
    %v3394 = vadd.f32 %v261, %v3393
    %v3395 = vpop.f32.mrb[0].mxu0
    %v3396 = vpop.f32.mrb[0].mxu0
    %v3397 = vadd.f32 %v262, %v3396
    %v3398 = vpop.f32.mrb[0].mxu0
    %3399 = vdwg.mxu0
    %v3400 = vsel %vm1402, %v3253, -inf
    %3401 = vmax.xlane.f32.xlu0 %v3400
    %v3402 = vpop.xlane.xlu0 %3401
    %v3403 = vsel %vm1402, %v3256, -inf
    %3404 = vmax.xlane.f32.xlu0 %v3403
    %v3405 = vpop.xlane.xlu0 %3404
    %v3406 = vsel %vm1402, %v3300, -inf
    %3407 = vmax.xlane.f32.xlu0 %v3406
    %v3408 = vpop.xlane.xlu0 %3407
    %v3409 = vsel %vm1402, %v3303, -inf
    %3410 = vmax.xlane.f32.xlu0 %v3409
    %v3411 = vpop.xlane.xlu0 %3410
    %v3412 = vsel %vm1402, %v3347, -inf
    %3413 = vmax.xlane.f32.xlu0 %v3412
    %v3414 = vpop.xlane.xlu0 %3413
    %v3415 = vsel %vm1402, %v3350, -inf
    %3416 = vmax.xlane.f32.xlu0 %v3415
    %v3417 = vpop.xlane.xlu0 %3416
    %v3418 = vsel %vm1402, %v3394, -inf
    %3419 = vmax.xlane.f32.xlu0 %v3418
    %v3420 = vpop.xlane.xlu0 %3419
    %v3421 = vsel %vm1402, %v3397, -inf
    %3422 = vmax.xlane.f32.xlu0 %v3421
    %v3423 = vpop.xlane.xlu0 %3422
    %v3424 = vsub.f32 %v3253, %v3402
    %v3425 = vsub.f32 %v3256, %v3405
    %v3426 = vsub.f32 %v3300, %v3408
    %v3427 = vsub.f32 %v3303, %v3411
    %v3428 = vsub.f32 %v3347, %v3414
    %v3429 = vsub.f32 %v3350, %v3417
    %v3430 = vsub.f32 %v3394, %v3420
    %v3431 = vsub.f32 %v3397, %v3423
    %v3432 = vmul.f32 %v3424, 1.442695
    %v3433 = vpow.pop %v3432
    %v3434 = vmul.f32 %v3425, 1.442695
    %v3435 = vpow.pop %v3434
    %v3436 = vmul.f32 %v3426, 1.442695
    %v3437 = vpow.pop %v3436
    %v3438 = vmul.f32 %v3427, 1.442695
    %v3439 = vpow.pop %v3438
    %v3440 = vmul.f32 %v3428, 1.442695
    %v3441 = vpow.pop %v3440
    %v3442 = vmul.f32 %v3429, 1.442695
    %v3443 = vpow.pop %v3442
    %v3444 = vmul.f32 %v3430, 1.442695
    %v3445 = vpow.pop %v3444
    %v3446 = vmul.f32 %v3431, 1.442695
    %v3447 = vpow.pop %v3446
    %v3448 = vsel %vm1402, %v3433, 0.0
    %3449 = vadd.xlane.f32.xlu0 %v3448
    %v3450 = vpop.xlane.xlu0 %3449
    %v3451 = vsel %vm1402, %v3435, 0.0
    %3452 = vadd.xlane.f32.xlu0 %v3451
    %v3453 = vpop.xlane.xlu0 %3452
    %v3454 = vsel %vm1402, %v3437, 0.0
    %3455 = vadd.xlane.f32.xlu0 %v3454
    %v3456 = vpop.xlane.xlu0 %3455
    %v3457 = vsel %vm1402, %v3439, 0.0
    %3458 = vadd.xlane.f32.xlu0 %v3457
    %v3459 = vpop.xlane.xlu0 %3458
    %v3460 = vsel %vm1402, %v3441, 0.0
    %3461 = vadd.xlane.f32.xlu0 %v3460
    %v3462 = vpop.xlane.xlu0 %3461
    %v3463 = vsel %vm1402, %v3443, 0.0
    %3464 = vadd.xlane.f32.xlu0 %v3463
    %v3465 = vpop.xlane.xlu0 %3464
    %v3466 = vsel %vm1402, %v3445, 0.0
    %3467 = vadd.xlane.f32.xlu0 %v3466
    %v3468 = vpop.xlane.xlu0 %3467
    %v3469 = vsel %vm1402, %v3447, 0.0
    %3470 = vadd.xlane.f32.xlu0 %v3469
    %v3471 = vpop.xlane.xlu0 %3470
    %v3472 = vrcp.pop %v3450
    %v3473 = vrcp.pop %v3453
    %v3474 = vrcp.pop %v3456
    %v3475 = vrcp.pop %v3459
    %v3476 = vrcp.pop %v3462
    %v3477 = vrcp.pop %v3465
    %v3478 = vrcp.pop %v3468
    %v3479 = vrcp.pop %v3471
    %v3480 = vmul.f32 %v3433, %v3472
    %v3481 = vmul.f32 %v3435, %v3473
    %v3482 = vmul.f32 %v3437, %v3474
    %v3483 = vmul.f32 %v3439, %v3475
    %v3484 = vmul.f32 %v3441, %v3476
    %v3485 = vmul.f32 %v3443, %v3477
    %v3486 = vmul.f32 %v3445, %v3478
    %v3487 = vmul.f32 %v3447, %v3479
    %v3488 = vpack.c.bf16 %v3481, %v3480
    %v3489 = vpack.c.bf16 %v3483, %v3482
    %v3490 = vpack.c.bf16 %v3485, %v3484
    %v3491 = vpack.c.bf16 %v3487, %v3486
    %v3492 = vpack.c.bf16 %v3200, %v3132
    %v3493 = vpack.c.bf16 %v3201, %v3133
    %v3494 = vpack.c.bf16 %v3202, %v3134
    %v3495 = vpack.c.bf16 %v3203, %v3135
    %v3497 = vsel %vm1402, %v3488, 0
    %3499 = vmatprep.subr.bf16.mxu0 0
    %3500 = vmatpush1.bf16.msra.mxu0 %v3492
    %3501 = vmatprep.subr.bf16.mxu0 0
    %3502 = vmatpush1.bf16.msra.mxu0 0
    %3503 = vmatprep.subr.bf16.mxu0 0
    %3504 = vmatpush1.bf16.msra.mxu0 0
    %3505 = vmatprep.subr.bf16.mxu0 0
    %3506 = vmatpush1.bf16.msra.mxu0 0
    %3507 = vmatprep.subr.bf16.mxu0 0
    %3508 = vmatpush1.bf16.msra.mxu0 0
    %3509 = vmatprep.subr.bf16.mxu0 0
    %3510 = vmatpush1.bf16.msra.mxu0 0
    %3511 = vmatprep.subr.bf16.mxu0 0
    %3512 = vmatpush1.bf16.msra.mxu0 0
    %3513 = vmatprep.subr.bf16.mxu0 0
    %3514 = vmatpush1.bf16.msra.mxu0 0
    %3515 = vmatprep.subr.bf16.mxu0 0
    %3516 = vmatpush1.bf16.msra.mxu0 0
    %3517 = vmatprep.subr.bf16.mxu0 0
    %3518 = vmatpush1.bf16.msra.mxu0 0
    %3519 = vmatprep.subr.bf16.mxu0 0
    %3520 = vmatpush1.bf16.msra.mxu0 0
    %3521 = vmatprep.subr.bf16.mxu0 0
    %3522 = vmatpush1.bf16.msra.mxu0 0
    %3523 = vmatprep.subr.bf16.mxu0 0
    %3524 = vmatpush1.bf16.msra.mxu0 0
    %3525 = vmatprep.subr.bf16.mxu0 0
    %3526 = vmatpush1.bf16.msra.mxu0 0
    %3527 = vmatprep.subr.bf16.mxu0 0
    %3528 = vmatpush1.bf16.msra.mxu0 0
    %3529 = vmatprep.subr.bf16.mxu0 0
    %3530 = vmatpush1.bf16.msra.mxu0 0
    %3531 = vmatprep.mubr.bf16.mxu0 0
    %3532 = vmatmul.mubr.bf16.gmra.mrb[0].mxu0 %v3497
    %v3533 = vpop.f32.mrb[0].mxu0
    %v3534 = vadd.f32 0.0, %v3533
    %v3535 = vpop.f32.mrb[0].mxu0
    %v3536 = vpop.f32.mrb[0].mxu0
    %v3537 = vadd.f32 0.0, %v3536
    %v3538 = vpop.f32.mrb[0].mxu0
    %3539 = vdwg.mxu0
    %v3541 = vsel %vm1402, %v3489, 0
    %3543 = vmatprep.subr.bf16.mxu0 0
    %3544 = vmatpush1.bf16.msra.mxu0 %v3493
    %3545 = vmatprep.subr.bf16.mxu0 0
    %3546 = vmatpush1.bf16.msra.mxu0 0
    %3547 = vmatprep.subr.bf16.mxu0 0
    %3548 = vmatpush1.bf16.msra.mxu0 0
    %3549 = vmatprep.subr.bf16.mxu0 0
    %3550 = vmatpush1.bf16.msra.mxu0 0
    %3551 = vmatprep.subr.bf16.mxu0 0
    %3552 = vmatpush1.bf16.msra.mxu0 0
    %3553 = vmatprep.subr.bf16.mxu0 0
    %3554 = vmatpush1.bf16.msra.mxu0 0
    %3555 = vmatprep.subr.bf16.mxu0 0
    %3556 = vmatpush1.bf16.msra.mxu0 0
    %3557 = vmatprep.subr.bf16.mxu0 0
    %3558 = vmatpush1.bf16.msra.mxu0 0
    %3559 = vmatprep.subr.bf16.mxu0 0
    %3560 = vmatpush1.bf16.msra.mxu0 0
    %3561 = vmatprep.subr.bf16.mxu0 0
    %3562 = vmatpush1.bf16.msra.mxu0 0
    %3563 = vmatprep.subr.bf16.mxu0 0
    %3564 = vmatpush1.bf16.msra.mxu0 0
    %3565 = vmatprep.subr.bf16.mxu0 0
    %3566 = vmatpush1.bf16.msra.mxu0 0
    %3567 = vmatprep.subr.bf16.mxu0 0
    %3568 = vmatpush1.bf16.msra.mxu0 0
    %3569 = vmatprep.subr.bf16.mxu0 0
    %3570 = vmatpush1.bf16.msra.mxu0 0
    %3571 = vmatprep.subr.bf16.mxu0 0
    %3572 = vmatpush1.bf16.msra.mxu0 0
    %3573 = vmatprep.subr.bf16.mxu0 0
    %3574 = vmatpush1.bf16.msra.mxu0 0
    %3575 = vmatprep.mubr.bf16.mxu0 0
    %3576 = vmatmul.mubr.bf16.gmra.mrb[0].mxu0 %v3541
    %v3577 = vpop.f32.mrb[0].mxu0
    %v3578 = vadd.f32 0.0, %v3577
    %v3579 = vpop.f32.mrb[0].mxu0
    %v3580 = vpop.f32.mrb[0].mxu0
    %v3581 = vadd.f32 0.0, %v3580
    %v3582 = vpop.f32.mrb[0].mxu0
    %3583 = vdwg.mxu0
    %v3585 = vsel %vm1402, %v3490, 0
    %3587 = vmatprep.subr.bf16.mxu0 0
    %3588 = vmatpush1.bf16.msra.mxu0 %v3494
    %3589 = vmatprep.subr.bf16.mxu0 0
    %3590 = vmatpush1.bf16.msra.mxu0 0
    %3591 = vmatprep.subr.bf16.mxu0 0
    %3592 = vmatpush1.bf16.msra.mxu0 0
    %3593 = vmatprep.subr.bf16.mxu0 0
    %3594 = vmatpush1.bf16.msra.mxu0 0
    %3595 = vmatprep.subr.bf16.mxu0 0
    %3596 = vmatpush1.bf16.msra.mxu0 0
    %3597 = vmatprep.subr.bf16.mxu0 0
    %3598 = vmatpush1.bf16.msra.mxu0 0
    %3599 = vmatprep.subr.bf16.mxu0 0
    %3600 = vmatpush1.bf16.msra.mxu0 0
    %3601 = vmatprep.subr.bf16.mxu0 0
    %3602 = vmatpush1.bf16.msra.mxu0 0
    %3603 = vmatprep.subr.bf16.mxu0 0
    %3604 = vmatpush1.bf16.msra.mxu0 0
    %3605 = vmatprep.subr.bf16.mxu0 0
    %3606 = vmatpush1.bf16.msra.mxu0 0
    %3607 = vmatprep.subr.bf16.mxu0 0
    %3608 = vmatpush1.bf16.msra.mxu0 0
    %3609 = vmatprep.subr.bf16.mxu0 0
    %3610 = vmatpush1.bf16.msra.mxu0 0
    %3611 = vmatprep.subr.bf16.mxu0 0
    %3612 = vmatpush1.bf16.msra.mxu0 0
    %3613 = vmatprep.subr.bf16.mxu0 0
    %3614 = vmatpush1.bf16.msra.mxu0 0
    %3615 = vmatprep.subr.bf16.mxu0 0
    %3616 = vmatpush1.bf16.msra.mxu0 0
    %3617 = vmatprep.subr.bf16.mxu0 0
    %3618 = vmatpush1.bf16.msra.mxu0 0
    %3619 = vmatprep.mubr.bf16.mxu0 0
    %3620 = vmatmul.mubr.bf16.gmra.mrb[0].mxu0 %v3585
    %v3621 = vpop.f32.mrb[0].mxu0
    %v3622 = vadd.f32 0.0, %v3621
    %v3623 = vpop.f32.mrb[0].mxu0
    %v3624 = vpop.f32.mrb[0].mxu0
    %v3625 = vadd.f32 0.0, %v3624
    %v3626 = vpop.f32.mrb[0].mxu0
    %3627 = vdwg.mxu0
    %v3629 = vsel %vm1402, %v3491, 0
    %3631 = vmatprep.subr.bf16.mxu0 0
    %3632 = vmatpush1.bf16.msra.mxu0 %v3495
    %3633 = vmatprep.subr.bf16.mxu0 0
    %3634 = vmatpush1.bf16.msra.mxu0 0
    %3635 = vmatprep.subr.bf16.mxu0 0
    %3636 = vmatpush1.bf16.msra.mxu0 0
    %3637 = vmatprep.subr.bf16.mxu0 0
    %3638 = vmatpush1.bf16.msra.mxu0 0
    %3639 = vmatprep.subr.bf16.mxu0 0
    %3640 = vmatpush1.bf16.msra.mxu0 0
    %3641 = vmatprep.subr.bf16.mxu0 0
    %3642 = vmatpush1.bf16.msra.mxu0 0
    %3643 = vmatprep.subr.bf16.mxu0 0
    %3644 = vmatpush1.bf16.msra.mxu0 0
    %3645 = vmatprep.subr.bf16.mxu0 0
    %3646 = vmatpush1.bf16.msra.mxu0 0
    %3647 = vmatprep.subr.bf16.mxu0 0
    %3648 = vmatpush1.bf16.msra.mxu0 0
    %3649 = vmatprep.subr.bf16.mxu0 0
    %3650 = vmatpush1.bf16.msra.mxu0 0
    %3651 = vmatprep.subr.bf16.mxu0 0
    %3652 = vmatpush1.bf16.msra.mxu0 0
    %3653 = vmatprep.subr.bf16.mxu0 0
    %3654 = vmatpush1.bf16.msra.mxu0 0
    %3655 = vmatprep.subr.bf16.mxu0 0
    %3656 = vmatpush1.bf16.msra.mxu0 0
    %3657 = vmatprep.subr.bf16.mxu0 0
    %3658 = vmatpush1.bf16.msra.mxu0 0
    %3659 = vmatprep.subr.bf16.mxu0 0
    %3660 = vmatpush1.bf16.msra.mxu0 0
    %3661 = vmatprep.subr.bf16.mxu0 0
    %3662 = vmatpush1.bf16.msra.mxu0 0
    %3663 = vmatprep.mubr.bf16.mxu0 0
    %3664 = vmatmul.mubr.bf16.gmra.mrb[0].mxu0 %v3629
    %v3665 = vpop.f32.mrb[0].mxu0
    %v3666 = vadd.f32 0.0, %v3665
    %v3667 = vpop.f32.mrb[0].mxu0
    %v3668 = vpop.f32.mrb[0].mxu0
    %v3669 = vadd.f32 0.0, %v3668
    %v3670 = vpop.f32.mrb[0].mxu0
    %3671 = vdwg.mxu0
    %v3672 = vcombine.low %v3534, %v3622
    %v3673 = vcombine.high %v3534, %v3622
    %v3675 = vunpack.c.l.s4 1983009808
    %v3676 = vunpack.c.0.s8 %v3675
    %v3677 = vlaneseq
    %v3678 = vshrl.u32 %v3677, 7
    %v3679 = vsub.s32 %v3676, %v3678
    %v3680 = vrot.slane %v3672, %v3679
    %v3682 = vunpack.c.l.s4 1983009808
    %v3683 = vunpack.c.0.s8 %v3682
    %v3684 = vlaneseq
    %v3685 = vshrl.u32 %v3684, 7
    %v3686 = vsub.s32 %v3683, %v3685
    %v3687 = vrot.slane %v3673, %v3686
    %v3688 = vcombine.low %v3578, %v3666
    %v3689 = vcombine.high %v3578, %v3666
    %v3691 = vunpack.c.l.s4 1983009808
    %v3692 = vunpack.c.0.s8 %v3691
    %v3693 = vlaneseq
    %v3694 = vshrl.u32 %v3693, 7
    %v3695 = vsub.s32 %v3692, %v3694
    %v3696 = vrot.slane %v3688, %v3695
    %v3698 = vunpack.c.l.s4 1983009808
    %v3699 = vunpack.c.0.s8 %v3698
    %v3700 = vlaneseq
    %v3701 = vshrl.u32 %v3700, 7
    %v3702 = vsub.s32 %v3699, %v3701
    %v3703 = vrot.slane %v3689, %v3702
    %v3704 = vcombine.low %v3680, %v3696
    %v3705 = vcombine.high %v3680, %v3696
    %v3707 = vunpack.c.l.s4 1934713408
    %v3708 = vunpack.c.0.s8 %v3707
    %v3709 = vlaneseq
    %v3710 = vshrl.u32 %v3709, 7
    %v3711 = vsub.s32 %v3708, %v3710
    %v3712 = vrot.slane %v3704, %v3711
    %v3714 = vunpack.c.l.s4 1934713408
    %v3715 = vunpack.c.0.s8 %v3714
    %v3716 = vlaneseq
    %v3717 = vshrl.u32 %v3716, 7
    %v3718 = vsub.s32 %v3715, %v3717
    %v3719 = vrot.slane %v3705, %v3718
    %v3720 = vcombine.low %v3687, %v3703
    %v3721 = vcombine.high %v3687, %v3703
    %v3723 = vunpack.c.l.s4 1934713408
    %v3724 = vunpack.c.0.s8 %v3723
    %v3725 = vlaneseq
    %v3726 = vshrl.u32 %v3725, 7
    %v3727 = vsub.s32 %v3724, %v3726
    %v3728 = vrot.slane %v3720, %v3727
    %v3730 = vunpack.c.l.s4 1934713408
    %v3731 = vunpack.c.0.s8 %v3730
    %v3732 = vlaneseq
    %v3733 = vshrl.u32 %v3732, 7
    %v3734 = vsub.s32 %v3731, %v3733
    %v3735 = vrot.slane %v3721, %v3734
    %v3736 = vcombine.high %v3712, 0.0
    %v3737 = vcombine.high %v3719, 0.0
    %v3738 = vcombine.high %v3728, 0.0
    %v3739 = vcombine.high %v3735, 0.0
    %v3740 = vcombine.low %v3537, %v3625
    %v3741 = vcombine.high %v3537, %v3625
    %v3743 = vunpack.c.l.s4 1983009808
    %v3744 = vunpack.c.0.s8 %v3743
    %v3745 = vlaneseq
    %v3746 = vshrl.u32 %v3745, 7
    %v3747 = vsub.s32 %v3744, %v3746
    %v3748 = vrot.slane %v3740, %v3747
    %v3750 = vunpack.c.l.s4 1983009808
    %v3751 = vunpack.c.0.s8 %v3750
    %v3752 = vlaneseq
    %v3753 = vshrl.u32 %v3752, 7
    %v3754 = vsub.s32 %v3751, %v3753
    %v3755 = vrot.slane %v3741, %v3754
    %v3756 = vcombine.low %v3581, %v3669
    %v3757 = vcombine.high %v3581, %v3669
    %v3759 = vunpack.c.l.s4 1983009808
    %v3760 = vunpack.c.0.s8 %v3759
    %v3761 = vlaneseq
    %v3762 = vshrl.u32 %v3761, 7
    %v3763 = vsub.s32 %v3760, %v3762
    %v3764 = vrot.slane %v3756, %v3763
    %v3766 = vunpack.c.l.s4 1983009808
    %v3767 = vunpack.c.0.s8 %v3766
    %v3768 = vlaneseq
    %v3769 = vshrl.u32 %v3768, 7
    %v3770 = vsub.s32 %v3767, %v3769
    %v3771 = vrot.slane %v3757, %v3770
    %v3772 = vcombine.low %v3748, %v3764
    %v3773 = vcombine.high %v3748, %v3764
    %v3775 = vunpack.c.l.s4 1934713408
    %v3776 = vunpack.c.0.s8 %v3775
    %v3777 = vlaneseq
    %v3778 = vshrl.u32 %v3777, 7
    %v3779 = vsub.s32 %v3776, %v3778
    %v3780 = vrot.slane %v3772, %v3779
    %v3782 = vunpack.c.l.s4 1934713408
    %v3783 = vunpack.c.0.s8 %v3782
    %v3784 = vlaneseq
    %v3785 = vshrl.u32 %v3784, 7
    %v3786 = vsub.s32 %v3783, %v3785
    %v3787 = vrot.slane %v3773, %v3786
    %v3788 = vcombine.low %v3755, %v3771
    %v3789 = vcombine.high %v3755, %v3771
    %v3791 = vunpack.c.l.s4 1934713408
    %v3792 = vunpack.c.0.s8 %v3791
    %v3793 = vlaneseq
    %v3794 = vshrl.u32 %v3793, 7
    %v3795 = vsub.s32 %v3792, %v3794
    %v3796 = vrot.slane %v3788, %v3795
    %v3798 = vunpack.c.l.s4 1934713408
    %v3799 = vunpack.c.0.s8 %v3798
    %v3800 = vlaneseq
    %v3801 = vshrl.u32 %v3800, 7
    %v3802 = vsub.s32 %v3799, %v3801
    %v3803 = vrot.slane %v3789, %v3802
    %v3804 = vcombine.high %v3780, 0.0
    %v3805 = vcombine.high %v3787, 0.0
    %v3806 = vcombine.high %v3796, 0.0
    %v3807 = vcombine.high %v3803, 0.0
    %v3808 = vcombine.low %v3712, %v3719
    %v3810 = vunpack.c.l.s4 1983009808
    %v3811 = vunpack.c.0.s8 %v3810
    %v3812 = vlaneseq
    %v3813 = vshrl.u32 %v3812, 7
    %v3814 = vsub.s32 %v3811, %v3813
    %v3815 = vrot.slane %v3808, %v3814
    %v3816 = vcombine.low %v3736, %v3737
    %v3818 = vunpack.c.l.s4 1983009808
    %v3819 = vunpack.c.0.s8 %v3818
    %v3820 = vlaneseq
    %v3821 = vshrl.u32 %v3820, 7
    %v3822 = vsub.s32 %v3819, %v3821
    %v3823 = vrot.slane %v3816, %v3822
    %v3824 = vcombine.low %v3728, %v3735
    %v3826 = vunpack.c.l.s4 1983009808
    %v3827 = vunpack.c.0.s8 %v3826
    %v3828 = vlaneseq
    %v3829 = vshrl.u32 %v3828, 7
    %v3830 = vsub.s32 %v3827, %v3829
    %v3831 = vrot.slane %v3824, %v3830
    %v3832 = vcombine.low %v3738, %v3739
    %v3834 = vunpack.c.l.s4 1983009808
    %v3835 = vunpack.c.0.s8 %v3834
    %v3836 = vlaneseq
    %v3837 = vshrl.u32 %v3836, 7
    %v3838 = vsub.s32 %v3835, %v3837
    %v3839 = vrot.slane %v3832, %v3838
    %v3840 = vcombine.low %v3815, %v3823
    %v3841 = vcombine.high %v3815, %v3823
    %v3843 = vunpack.c.l.s4 1934713408
    %v3844 = vunpack.c.0.s8 %v3843
    %v3845 = vlaneseq
    %v3846 = vshrl.u32 %v3845, 7
    %v3847 = vsub.s32 %v3844, %v3846
    %v3848 = vrot.slane %v3840, %v3847
    %v3850 = vunpack.c.l.s4 1934713408
    %v3851 = vunpack.c.0.s8 %v3850
    %v3852 = vlaneseq
    %v3853 = vshrl.u32 %v3852, 7
    %v3854 = vsub.s32 %v3851, %v3853
    %v3855 = vrot.slane %v3841, %v3854
    %v3856 = vcombine.low %v3831, %v3839
    %v3857 = vcombine.high %v3831, %v3839
    %v3859 = vunpack.c.l.s4 1934713408
    %v3860 = vunpack.c.0.s8 %v3859
    %v3861 = vlaneseq
    %v3862 = vshrl.u32 %v3861, 7
    %v3863 = vsub.s32 %v3860, %v3862
    %v3864 = vrot.slane %v3856, %v3863
    %v3866 = vunpack.c.l.s4 1934713408
    %v3867 = vunpack.c.0.s8 %v3866
    %v3868 = vlaneseq
    %v3869 = vshrl.u32 %v3868, 7
    %v3870 = vsub.s32 %v3867, %v3869
    %v3871 = vrot.slane %v3857, %v3870
    %v3872 = vcombine.low %v3848, %v3864
    %v3873 = vcombine.high %v3848, %v3864
    %v3874 = vcombine.low %v3855, %v3871
    %v3875 = vcombine.high %v3855, %v3871
    %v3876 = vcombine.low %v3780, %v3787
    %v3878 = vunpack.c.l.s4 1983009808
    %v3879 = vunpack.c.0.s8 %v3878
    %v3880 = vlaneseq
    %v3881 = vshrl.u32 %v3880, 7
    %v3882 = vsub.s32 %v3879, %v3881
    %v3883 = vrot.slane %v3876, %v3882
    %v3884 = vcombine.low %v3804, %v3805
    %v3886 = vunpack.c.l.s4 1983009808
    %v3887 = vunpack.c.0.s8 %v3886
    %v3888 = vlaneseq
    %v3889 = vshrl.u32 %v3888, 7
    %v3890 = vsub.s32 %v3887, %v3889
    %v3891 = vrot.slane %v3884, %v3890
    %v3892 = vcombine.low %v3796, %v3803
    %v3894 = vunpack.c.l.s4 1983009808
    %v3895 = vunpack.c.0.s8 %v3894
    %v3896 = vlaneseq
    %v3897 = vshrl.u32 %v3896, 7
    %v3898 = vsub.s32 %v3895, %v3897
    %v3899 = vrot.slane %v3892, %v3898
    %v3900 = vcombine.low %v3806, %v3807
    %v3902 = vunpack.c.l.s4 1983009808
    %v3903 = vunpack.c.0.s8 %v3902
    %v3904 = vlaneseq
    %v3905 = vshrl.u32 %v3904, 7
    %v3906 = vsub.s32 %v3903, %v3905
    %v3907 = vrot.slane %v3900, %v3906
    %v3908 = vcombine.low %v3883, %v3891
    %v3909 = vcombine.high %v3883, %v3891
    %v3911 = vunpack.c.l.s4 1934713408
    %v3912 = vunpack.c.0.s8 %v3911
    %v3913 = vlaneseq
    %v3914 = vshrl.u32 %v3913, 7
    %v3915 = vsub.s32 %v3912, %v3914
    %v3916 = vrot.slane %v3908, %v3915
    %v3918 = vunpack.c.l.s4 1934713408
    %v3919 = vunpack.c.0.s8 %v3918
    %v3920 = vlaneseq
    %v3921 = vshrl.u32 %v3920, 7
    %v3922 = vsub.s32 %v3919, %v3921
    %v3923 = vrot.slane %v3909, %v3922
    %v3924 = vcombine.low %v3899, %v3907
    %v3925 = vcombine.high %v3899, %v3907
    %v3927 = vunpack.c.l.s4 1934713408
    %v3928 = vunpack.c.0.s8 %v3927
    %v3929 = vlaneseq
    %v3930 = vshrl.u32 %v3929, 7
    %v3931 = vsub.s32 %v3928, %v3930
    %v3932 = vrot.slane %v3924, %v3931
    %v3934 = vunpack.c.l.s4 1934713408
    %v3935 = vunpack.c.0.s8 %v3934
    %v3936 = vlaneseq
    %v3937 = vshrl.u32 %v3936, 7
    %v3938 = vsub.s32 %v3935, %v3937
    %v3939 = vrot.slane %v3925, %v3938
    %v3940 = vcombine.low %v3916, %v3932
    %v3941 = vcombine.high %v3916, %v3932
    %v3942 = vcombine.low %v3923, %v3939
    %v3943 = vcombine.high %v3923, %v3939
    %3946 = vrot.lane.b32.xlu0 %v3873, 8
    %v3947 = vpop.permute.xlu0 %3946
    %3948 = vrot.lane.b32.xlu0 %v3941, 8
    %v3949 = vpop.permute.xlu0 %3948
    %3954 = vrot.lane.b32.xlu0 %v3874, 16
    %v3955 = vpop.permute.xlu0 %3954
    %3956 = vrot.lane.b32.xlu0 %v3942, 16
    %v3957 = vpop.permute.xlu0 %3956
    %3962 = vrot.lane.b32.xlu0 %v3875, 24
    %v3963 = vpop.permute.xlu0 %3962
    %3964 = vrot.lane.b32.xlu0 %v3943, 24
    %v3965 = vpop.permute.xlu0 %3964
    %v3968 = vsel %vm257, %v3872, %v3947
    %v3969 = vsel %vm257, %v3940, %v3949
    %v3970 = vsel %vm1402, %v3968, %v3955
    %v3971 = vsel %vm1402, %v3969, %v3957
    %v3972 = vsel %vm1975, %v3970, %v3963
    %v3973 = vsel %vm1975, %v3971, %v3965
    %v3974 = vpack.c.bf16 %v3973, %v3972
    %v3975 = vld [vmem:[%s35] sm:$0xff]
    %v3976 = vld [vmem:[%s35 + $0x8] sm:$0xff]
    %v3977 = vld [vmem:[%s35 + $0x10] sm:$0xff]
    %v3978 = vld [vmem:[%s35 + $0x18] sm:$0xff]
    %v3979 = vpack.c.bf16 %v3976, %v3975
    %v3980 = vpack.c.bf16 %v3978, %v3977
    %v3981 = vld [vmem:[%s37] sm:$0x1]
    %v3983 = vlaneseq
    %v3984 = vshrl.u32 %v3983, 7
    %v3985 = vsub.s32 0, %v3984
    %v3986 = vrot.slane %v3981, %v3985
    %v3989 = vsel %vm277, %v3974, 0
    %3991 = vmatprep.subr.bf16.mxu0 0
    %3992 = vmatpush1.bf16.msra.mxu0 %v3979
    %3993 = vmatprep.subr.bf16.mxu0 0
    %3994 = vmatpush1.bf16.msra.mxu0 %v3980
    %3995 = vmatprep.subr.bf16.mxu0 0
    %3996 = vmatpush1.bf16.msra.mxu0 0
    %3997 = vmatprep.subr.bf16.mxu0 0
    %3998 = vmatpush1.bf16.msra.mxu0 0
    %3999 = vmatprep.subr.bf16.mxu0 0
    %4000 = vmatpush1.bf16.msra.mxu0 0
    %4001 = vmatprep.subr.bf16.mxu0 0
    %4002 = vmatpush1.bf16.msra.mxu0 0
    %4003 = vmatprep.subr.bf16.mxu0 0
    %4004 = vmatpush1.bf16.msra.mxu0 0
    %4005 = vmatprep.subr.bf16.mxu0 0
    %4006 = vmatpush1.bf16.msra.mxu0 0
    %4007 = vmatprep.subr.bf16.mxu0 0
    %4008 = vmatpush1.bf16.msra.mxu0 0
    %4009 = vmatprep.subr.bf16.mxu0 0
    %4010 = vmatpush1.bf16.msra.mxu0 0
    %4011 = vmatprep.subr.bf16.mxu0 0
    %4012 = vmatpush1.bf16.msra.mxu0 0
    %4013 = vmatprep.subr.bf16.mxu0 0
    %4014 = vmatpush1.bf16.msra.mxu0 0
    %4015 = vmatprep.subr.bf16.mxu0 0
    %4016 = vmatpush1.bf16.msra.mxu0 0
    %4017 = vmatprep.subr.bf16.mxu0 0
    %4018 = vmatpush1.bf16.msra.mxu0 0
    %4019 = vmatprep.subr.bf16.mxu0 0
    %4020 = vmatpush1.bf16.msra.mxu0 0
    %4021 = vmatprep.subr.bf16.mxu0 0
    %4022 = vmatpush1.bf16.msra.mxu0 0
    %4023 = vmatprep.mubr.bf16.mxu0 0
    %4024 = vmatmul.mubr.bf16.gmra.mrb[0].mxu0 %v3989
    %v4025 = vpop.f32.mrb[0].mxu0
    %v4026 = vadd.f32 %v3986, %v4025
    %v4027 = vpop.f32.mrb[0].mxu0
    %v4028 = vpop.f32.mrb[0].mxu0
    %v4029 = vadd.f32 %v3986, %v4028
    %v4030 = vpop.f32.mrb[0].mxu0
    %4031 = vdwg.mxu0
    %v4032 = vadd.f32 %v4026, %v2260
    %v4033 = vadd.f32 %v4029, %v2261
    %v4034 = vsel %vm277, %v4032, 0.0
    %4035 = vadd.xlane.f32.xlu0 %v4034
    %v4036 = vpop.xlane.xlu0 %4035
    %v4037 = vsel %vm277, %v4033, 0.0
    %4038 = vadd.xlane.f32.xlu0 %v4037
    %v4039 = vpop.xlane.xlu0 %4038
    %v4040 = vmul.f32 %v4036, %v2044
    %v4041 = vmul.f32 %v4039, %v2044
    %v4042 = vmul.f32 %v4032, %v4032
    %v4043 = vmul.f32 %v4033, %v4033
    %v4044 = vsel %vm277, %v4042, 0.0
    %4045 = vadd.xlane.f32.xlu0 %v4044
    %v4046 = vpop.xlane.xlu0 %4045
    %v4047 = vsel %vm277, %v4043, 0.0
    %4048 = vadd.xlane.f32.xlu0 %v4047
    %v4049 = vpop.xlane.xlu0 %4048
    %v4050 = vmul.f32 %v4046, %v2044
    %v4051 = vmul.f32 %v4049, %v2044
    %v4052 = vmul.f32 %v4040, %v4040
    %v4053 = vmul.f32 %v4041, %v4041
    %v4054 = vsub.f32 %v4050, %v4052
    %v4055 = vsub.f32 %v4051, %v4053
    %v4056 = vadd.f32 %v4054, 1e-05
    %v4057 = vadd.f32 %v4055, 1e-05
    %v4058 = vrsqrt.pop %v4056
    %v4059 = vrsqrt.pop %v4057
    %v4060 = vsub.f32 %v4032, %v4040
    %v4061 = vsub.f32 %v4033, %v4041
    %v4062 = vmul.f32 %v4060, %v4058
    %v4063 = vmul.f32 %v4061, %v4059
    %v4064 = vld [vmem:[%s39] sm:$0x1]
    %v4066 = vlaneseq
    %v4067 = vshrl.u32 %v4066, 7
    %v4068 = vsub.s32 0, %v4067
    %v4069 = vrot.slane %v4064, %v4068
    %v4071 = vmul.f32 %v4062, %v4069
    %v4072 = vmul.f32 %v4063, %v4069
    %v4073 = vld [vmem:[%s41] sm:$0x1]
    %v4075 = vlaneseq
    %v4076 = vshrl.u32 %v4075, 7
    %v4077 = vsub.s32 0, %v4076
    %v4078 = vrot.slane %v4073, %v4077
    %v4080 = vadd.f32 %v4071, %v4078
    %v4081 = vadd.f32 %v4072, %v4078
    %v4082 = vpack.c.bf16 %v4081, %v4080
    %v4083 = vld [vmem:[%s43] sm:$0xff]
    %v4084 = vld [vmem:[%s43 + $0x8] sm:$0xff]
    %v4085 = vld [vmem:[%s43 + $0x10] sm:$0xff]
    %v4086 = vld [vmem:[%s43 + $0x18] sm:$0xff]
    %v4087 = vpack.c.bf16 %v4084, %v4083
    %v4088 = vpack.c.bf16 %v4086, %v4085
    %v4089 = vld [vmem:[%s45] sm:$0x1]
    %v4091 = vlaneseq
    %v4092 = vshrl.u32 %v4091, 7
    %v4093 = vsub.s32 0, %v4092
    %v4094 = vrot.slane %v4089, %v4093
    %v4097 = vsel %vm277, %v4082, 0
    %4099 = vmatprep.subr.bf16.mxu0 0
    %4100 = vmatpush1.bf16.msra.mxu0 %v4087
    %4101 = vmatprep.subr.bf16.mxu0 0
    %4102 = vmatpush1.bf16.msra.mxu0 %v4088
    %4103 = vmatprep.subr.bf16.mxu0 0
    %4104 = vmatpush1.bf16.msra.mxu0 0
    %4105 = vmatprep.subr.bf16.mxu0 0
    %4106 = vmatpush1.bf16.msra.mxu0 0
    %4107 = vmatprep.subr.bf16.mxu0 0
    %4108 = vmatpush1.bf16.msra.mxu0 0
    %4109 = vmatprep.subr.bf16.mxu0 0
    %4110 = vmatpush1.bf16.msra.mxu0 0
    %4111 = vmatprep.subr.bf16.mxu0 0
    %4112 = vmatpush1.bf16.msra.mxu0 0
    %4113 = vmatprep.subr.bf16.mxu0 0
    %4114 = vmatpush1.bf16.msra.mxu0 0
    %4115 = vmatprep.subr.bf16.mxu0 0
    %4116 = vmatpush1.bf16.msra.mxu0 0
    %4117 = vmatprep.subr.bf16.mxu0 0
    %4118 = vmatpush1.bf16.msra.mxu0 0
    %4119 = vmatprep.subr.bf16.mxu0 0
    %4120 = vmatpush1.bf16.msra.mxu0 0
    %4121 = vmatprep.subr.bf16.mxu0 0
    %4122 = vmatpush1.bf16.msra.mxu0 0
    %4123 = vmatprep.subr.bf16.mxu0 0
    %4124 = vmatpush1.bf16.msra.mxu0 0
    %4125 = vmatprep.subr.bf16.mxu0 0
    %4126 = vmatpush1.bf16.msra.mxu0 0
    %4127 = vmatprep.subr.bf16.mxu0 0
    %4128 = vmatpush1.bf16.msra.mxu0 0
    %4129 = vmatprep.subr.bf16.mxu0 0
    %4130 = vmatpush1.bf16.msra.mxu0 0
    %4131 = vmatprep.mubr.bf16.mxu0 0
    %4132 = vmatmul.mubr.bf16.gmra.mrb[0].mxu0 %v4097
    %v4133 = vpop.f32.mrb[0].mxu0
    %v4134 = vadd.f32 %v4094, %v4133
    %v4135 = vpop.f32.mrb[0].mxu0
    %v4136 = vpop.f32.mrb[0].mxu0
    %v4137 = vadd.f32 %v4094, %v4136
    %v4138 = vpop.f32.mrb[0].mxu0
    %4139 = vdwg.mxu0
    %v4140 = vmax.f32 %v4134, 0.0
    %v4141 = vmax.f32 %v4137, 0.0
    %v4142 = vpack.c.bf16 %v4141, %v4140
    %v4143 = vld [vmem:[%s47] sm:$0xff]
    %v4144 = vld [vmem:[%s47 + $0x8] sm:$0xff]
    %v4145 = vld [vmem:[%s47 + $0x10] sm:$0xff]
    %v4146 = vld [vmem:[%s47 + $0x18] sm:$0xff]
    %v4147 = vld [vmem:[%s47 + $0x20] sm:$0xff]
    %v4148 = vld [vmem:[%s47 + $0x28] sm:$0xff]
    %v4149 = vld [vmem:[%s47 + $0x30] sm:$0xff]
    %v4150 = vld [vmem:[%s47 + $0x38] sm:$0xff]
    %v4151 = vpack.c.bf16 %v4144, %v4143
    %v4152 = vpack.c.bf16 %v4146, %v4145
    %v4153 = vpack.c.bf16 %v4148, %v4147
    %v4154 = vpack.c.bf16 %v4150, %v4149
    %v4155 = vld [vmem:[%s49] sm:$0x1]
    %v4157 = vlaneseq
    %v4158 = vshrl.u32 %v4157, 7
    %v4159 = vsub.s32 0, %v4158
    %v4160 = vrot.slane %v4155, %v4159
    %v4163 = vsel %vm2167, %v4142, 0
    %4165 = vmatprep.subr.bf16.mxu0 0
    %4166 = vmatpush1.bf16.msra.mxu0 %v4151
    %4167 = vmatprep.subr.bf16.mxu0 0
    %4168 = vmatpush1.bf16.msra.mxu0 %v4152
    %4169 = vmatprep.subr.bf16.mxu0 0
    %4170 = vmatpush1.bf16.msra.mxu0 %v4153
    %4171 = vmatprep.subr.bf16.mxu0 0
    %4172 = vmatpush1.bf16.msra.mxu0 %v4154
    %4173 = vmatprep.subr.bf16.mxu0 0
    %4174 = vmatpush1.bf16.msra.mxu0 0
    %4175 = vmatprep.subr.bf16.mxu0 0
    %4176 = vmatpush1.bf16.msra.mxu0 0
    %4177 = vmatprep.subr.bf16.mxu0 0
    %4178 = vmatpush1.bf16.msra.mxu0 0
    %4179 = vmatprep.subr.bf16.mxu0 0
    %4180 = vmatpush1.bf16.msra.mxu0 0
    %4181 = vmatprep.subr.bf16.mxu0 0
    %4182 = vmatpush1.bf16.msra.mxu0 0
    %4183 = vmatprep.subr.bf16.mxu0 0
    %4184 = vmatpush1.bf16.msra.mxu0 0
    %4185 = vmatprep.subr.bf16.mxu0 0
    %4186 = vmatpush1.bf16.msra.mxu0 0
    %4187 = vmatprep.subr.bf16.mxu0 0
    %4188 = vmatpush1.bf16.msra.mxu0 0
    %4189 = vmatprep.subr.bf16.mxu0 0
    %4190 = vmatpush1.bf16.msra.mxu0 0
    %4191 = vmatprep.subr.bf16.mxu0 0
    %4192 = vmatpush1.bf16.msra.mxu0 0
    %4193 = vmatprep.subr.bf16.mxu0 0
    %4194 = vmatpush1.bf16.msra.mxu0 0
    %4195 = vmatprep.subr.bf16.mxu0 0
    %4196 = vmatpush1.bf16.msra.mxu0 0
    %4197 = vmatprep.mubr.bf16.mxu0 0
    %4198 = vmatmul.mubr.bf16.gmra.mrb[0].mxu0 %v4163
    %v4199 = vpop.f32.mrb[0].mxu0
    %v4200 = vadd.f32 %v4160, %v4199
    %v4201 = vpop.f32.mrb[0].mxu0
    %v4202 = vpop.f32.mrb[0].mxu0
    %v4203 = vadd.f32 %v4160, %v4202
    %v4204 = vpop.f32.mrb[0].mxu0
    %4205 = vdwg.mxu0
    %v4206 = vadd.f32 %v4200, %v4080
    %v4207 = vadd.f32 %v4203, %v4081
    %v4208 = vsel %vm277, %v4206, 0.0
    %4209 = vadd.xlane.f32.xlu0 %v4208
    %v4210 = vpop.xlane.xlu0 %4209
    %v4211 = vsel %vm277, %v4207, 0.0
    %4212 = vadd.xlane.f32.xlu0 %v4211
    %v4213 = vpop.xlane.xlu0 %4212
    %v4214 = vmul.f32 %v4210, %v2044
    %v4215 = vmul.f32 %v4213, %v2044
    %v4216 = vmul.f32 %v4206, %v4206
    %v4217 = vmul.f32 %v4207, %v4207
    %v4218 = vsel %vm277, %v4216, 0.0
    %4219 = vadd.xlane.f32.xlu0 %v4218
    %v4220 = vpop.xlane.xlu0 %4219
    %v4221 = vsel %vm277, %v4217, 0.0
    %4222 = vadd.xlane.f32.xlu0 %v4221
    %v4223 = vpop.xlane.xlu0 %4222
    %v4224 = vmul.f32 %v4220, %v2044
    %v4225 = vmul.f32 %v4223, %v2044
    %v4226 = vmul.f32 %v4214, %v4214
    %v4227 = vmul.f32 %v4215, %v4215
    %v4228 = vsub.f32 %v4224, %v4226
    %v4229 = vsub.f32 %v4225, %v4227
    %v4230 = vadd.f32 %v4228, 1e-05
    %v4231 = vadd.f32 %v4229, 1e-05
    %v4232 = vrsqrt.pop %v4230
    %v4233 = vrsqrt.pop %v4231
    %v4234 = vsub.f32 %v4206, %v4214
    %v4235 = vsub.f32 %v4207, %v4215
    %v4236 = vmul.f32 %v4234, %v4232
    %v4237 = vmul.f32 %v4235, %v4233
    %v4238 = vld [vmem:[%s51] sm:$0x1]
    %v4240 = vlaneseq
    %v4241 = vshrl.u32 %v4240, 7
    %v4242 = vsub.s32 0, %v4241
    %v4243 = vrot.slane %v4238, %v4242
    %v4245 = vmul.f32 %v4236, %v4243
    %v4246 = vmul.f32 %v4237, %v4243
    %v4247 = vld [vmem:[%s53] sm:$0x1]
    %v4249 = vlaneseq
    %v4250 = vshrl.u32 %v4249, 7
    %v4251 = vsub.s32 0, %v4250
    %v4252 = vrot.slane %v4247, %v4251
    %v4254 = vadd.f32 %v4245, %v4252
    %v4255 = vadd.f32 %v4246, %v4252
    %v4256 = vpack.c.bf16 %v4255, %v4254
    %v4257 = vld [vmem:[%s55] sm:$0xff]
    %v4258 = vld [vmem:[%s55 + $0x8] sm:$0xff]
    %v4259 = vld [vmem:[%s55 + $0x10] sm:$0xff]
    %v4260 = vld [vmem:[%s55 + $0x18] sm:$0xff]
    %v4261 = vpack.c.bf16 %v4258, %v4257
    %v4262 = vpack.c.bf16 %v4260, %v4259
    %v4263 = vld [vmem:[%s57] sm:$0x1]
    %v4265 = vlaneseq
    %v4266 = vshrl.u32 %v4265, 7
    %v4267 = vsub.s32 0, %v4266
    %v4268 = vrot.slane %v4263, %v4267
    %v4271 = vsel %vm277, %v4256, 0
    %4273 = vmatprep.subr.bf16.mxu0 0
    %4274 = vmatpush1.bf16.msra.mxu0 %v4261
    %4275 = vmatprep.subr.bf16.mxu0 0
    %4276 = vmatpush1.bf16.msra.mxu0 %v4262
    %4277 = vmatprep.subr.bf16.mxu0 0
    %4278 = vmatpush1.bf16.msra.mxu0 0
    %4279 = vmatprep.subr.bf16.mxu0 0
    %4280 = vmatpush1.bf16.msra.mxu0 0
    %4281 = vmatprep.subr.bf16.mxu0 0
    %4282 = vmatpush1.bf16.msra.mxu0 0
    %4283 = vmatprep.subr.bf16.mxu0 0
    %4284 = vmatpush1.bf16.msra.mxu0 0
    %4285 = vmatprep.subr.bf16.mxu0 0
    %4286 = vmatpush1.bf16.msra.mxu0 0
    %4287 = vmatprep.subr.bf16.mxu0 0
    %4288 = vmatpush1.bf16.msra.mxu0 0
    %4289 = vmatprep.subr.bf16.mxu0 0
    %4290 = vmatpush1.bf16.msra.mxu0 0
    %4291 = vmatprep.subr.bf16.mxu0 0
    %4292 = vmatpush1.bf16.msra.mxu0 0
    %4293 = vmatprep.subr.bf16.mxu0 0
    %4294 = vmatpush1.bf16.msra.mxu0 0
    %4295 = vmatprep.subr.bf16.mxu0 0
    %4296 = vmatpush1.bf16.msra.mxu0 0
    %4297 = vmatprep.subr.bf16.mxu0 0
    %4298 = vmatpush1.bf16.msra.mxu0 0
    %4299 = vmatprep.subr.bf16.mxu0 0
    %4300 = vmatpush1.bf16.msra.mxu0 0
    %4301 = vmatprep.subr.bf16.mxu0 0
    %4302 = vmatpush1.bf16.msra.mxu0 0
    %4303 = vmatprep.subr.bf16.mxu0 0
    %4304 = vmatpush1.bf16.msra.mxu0 0
    %4305 = vmatprep.mubr.bf16.mxu0 0
    %4306 = vmatmul.mubr.bf16.gmra.mrb[0].mxu0 %v4271
    %v4307 = vpop.f32.mrb[0].mxu0
    %v4308 = vadd.f32 %v4268, %v4307
    %v4309 = vpop.f32.mrb[0].mxu0
    %v4310 = vpop.f32.mrb[0].mxu0
    %v4311 = vadd.f32 %v4268, %v4310
    %v4312 = vpop.f32.mrb[0].mxu0
    %4313 = vdwg.mxu0
    %4314 = vst [vmem:[#allocation2] sm:$0xff] %v4308
    %4315 = vst [vmem:[#allocation2 + $0x8] sm:$0xff] %v4311
    // Predicated region
    $region118: #{tpu_custom_call.1} parent=1 // pred_check
      _
    $region119: #{tpu_custom_call.1} parent=1 // pred_check_branch
      %4317 = sbr.rel (0) target = $region121
    $region120: #{tpu_custom_call.1} parent=1 // pred_region
      %s4319 = ssub.s32 256, 256
      %4320 = vsyncadd [#allocation3], %s4319
      %s4321 = sshll.u32 [#allocation2], 4
      %s4322 = int_to_ptr.vmem [resolvable:$true] %s4321
      %4327 = dma.vmem_to_hbm [thread:$0]  %s4322, 256, %s59, [#allocation3], 128, 128, 8
    $region121: #{tpu_custom_call.1} parent=1 // pred_fallthru
      _
    // Predicated region
    $region122: #{tpu_custom_call.1} parent=1 // pred_check
      _
    $region123: #{tpu_custom_call.1} parent=1 // pred_check_branch
      %4329 = sbr.rel (0) target = $region125
    $region124: #{tpu_custom_call.1} parent=1 // pred_region
      %4330 = dma.done [#allocation3], 256
    $region125: #{tpu_custom_call.1} parent=1 // pred_fallthru
      _
    %4331 = vsyncpa [#allocation3], 1

</llo_original>
